<compile_context>
chip_gen: v5e
topology: v5e:2x2
jax: 0.10.0
libtpu: 0.0.40
codegen_flags: <defaults>
</compile_context>

<pallas_src>
import numpy as np
import jax
import jax.numpy as jnp
from jax import lax
from jax.experimental import pallas as pl
from jax.experimental.pallas import tpu as pltpu

# Module constants (fixed by the PyTorch spec: Conv2d(3,16,3,p=1), Conv2d(16,32,3,p=1),
# MaxPool2d(2,2) twice, Linear(960,64), Linear(64,11); 960 = 32*(H/4)*(W/4) -> H=20, W=24).
_C0, _C1, _C2 = 3, 16, 32
_H, _W = 20, 24
_N_CLS = 11
_NCLS_PAD = 128                       # lane-dense (unmasked) classifier output store

_N1 = _W * _C1                        # 384  conv1 output lanes, ordered (w%2, w//2, co)
_HALF1 = _N1 // 2                     # 192  = pooled1 lanes per row (width x channels)
_N2 = (_W // 2) * _C2                 # 384  conv2 output lanes, same ordering
_HALF2 = _N2 // 2                     # 192  = pooled2 lanes per row
_K1 = 3 * _W * _C0                    # 216  conv1 K (3 dy taps x 24 widths x 3 ch)
_K2 = 3 * _HALF1                      # 576  conv2 K (3 dy taps x 12 widths x 16 ch)
_R = _H // 4                          # 5    rows per row-phase bank (= pooled2 height)


def _vmem_spec():
    return pl.BlockSpec(memory_space=pltpu.MemorySpace.VMEM)


# ---------------------------------------------------------------------------
# The single fused Pallas kernel
# ---------------------------------------------------------------------------
def _fused_net_kernel(xb_ref, w1_ref, b1_ref, w2_ref, b2_ref,
                      wfc_ref, bfc_ref, wcls_ref, bcls_ref,
                      o_ref, xs2_ref, fcin_ref):
    Bp = o_ref.shape[0]               # padded batch (multiple of 8)
    RB = _R * Bp                      # rows per row-phase bank, multiple of 8
    S = _HALF1                        # 192

    # ---- conv1 + bias + sigmoid: ONE bf16 dot over all 4 row-phase banks -------
    # xb rows ordered (q, m, b) <-> conv1 output row h = 4m+q, batch b; lanes are
    # the K-stacked 3-row im2col window.  Output cols ordered (w%2, w//2, co).
    a1 = jnp.dot(xb_ref[...], w1_ref[...], preferred_element_type=jnp.float32)
    a1 = jax.nn.sigmoid(a1 + b1_ref[...])                           # (4*RB, 384) f32

    # ---- maxpool1 (2x2, stride 2): elementwise max of banks + lane halves ------
    def wpool(y):                                                   # width pool
        return jnp.maximum(y[:, :S], y[:, S:])
    pe = jnp.maximum(wpool(a1[0 * RB:1 * RB]), wpool(a1[1 * RB:2 * RB]))  # pooled rows 0,2,4,6,8
    po = jnp.maximum(wpool(a1[2 * RB:3 * RB]), wpool(a1[3 * RB:4 * RB]))  # pooled rows 1,3,5,7,9

    # ---- stage conv2 LHS with the 3 dy taps stacked along K (segments at lane 0,
    #      192, 384).  Block 0 (rows [0,RB)) = conv2 rows 0,2,..,8 needs pooled rows
    #      (2m-1, 2m, 2m+1); block 1 = conv2 rows 1,3,..,9 needs (2m, 2m+1, 2m+2).
    #      Only the two height-halo strips are zeroed; everything else is written.
    zero_strip = jnp.zeros((Bp, S), jnp.float32)
    xs2_ref[0:Bp, 0:S] = zero_strip                                 # pooled row -1
    xs2_ref[Bp:RB, 0:S] = po[0:RB - Bp]
    xs2_ref[0:RB, S:2 * S] = pe
    xs2_ref[0:RB, 2 * S:3 * S] = po
    xs2_ref[RB:2 * RB, 0:S] = pe
    xs2_ref[RB:2 * RB, S:2 * S] = po
    xs2_ref[RB:2 * RB - Bp, 2 * S:3 * S] = pe[Bp:RB]
    xs2_ref[2 * RB - Bp:2 * RB, 2 * S:3 * S] = zero_strip           # pooled row 10

    # ---- conv2 + bias + sigmoid: ONE bf16 dot -----------------------------------
    a2 = jnp.dot(xs2_ref[...].astype(jnp.bfloat16), w2_ref[...],
                 preferred_element_type=jnp.float32)
    a2 = jax.nn.sigmoid(a2 + b2_ref[...])                           # (2*RB, 384) f32

    # ---- maxpool2 (2x2, stride 2): parity-bank max + lane halves ----------------
    p2 = wpool(jnp.maximum(a2[0:RB], a2[RB:2 * RB]))                # (RB, 192), rows (h, b)

    # ---- flatten + fc(960 -> 64) + sigmoid: ONE bf16 dot ------------------------
    # fc LHS lane layout is (h, w, c); PyTorch's NCHW flatten ordering is absorbed
    # into wfc's row permutation at init time.
    for h in range(_R):
        fcin_ref[:, h * _HALF2:(h + 1) * _HALF2] = p2[h * Bp:(h + 1) * Bp]
    hfc = jnp.dot(fcin_ref[...].astype(jnp.bfloat16), wfc_ref[...],
                  preferred_element_type=jnp.float32)
    hfc = jax.nn.sigmoid(hfc + bfc_ref[...])                        # (Bp, 64) f32
    # TODO(synk): nn.Dropout(p=0.3) is an inference-time identity (eval mode only).

    # ---- classifier (64 -> 11, zero-padded to 128 lanes, unmasked f32 store) ----
    o_ref[...] = jnp.dot(hfc, wcls_ref[...],
                         preferred_element_type=jnp.float32) + bcls_ref[...]


# ---------------------------------------------------------------------------
# Per-call glue: host-side row-im2col of the padded NHWC input, rows ordered
# (q, m, b) so maxpool1 is an elementwise max of the 4 contiguous bank slices.
# ---------------------------------------------------------------------------
def _im2col_rows(x_nchw, Bp):
    B, C, H, W = x_nchw.shape
    x = jnp.transpose(x_nchw, (0, 2, 3, 1)).reshape(B, H, W * C)     # (B, 20, 72), lanes (w, c)
    x = jnp.pad(x, ((0, Bp - B), (1, 1), (0, 0)))                    # (Bp, 22, 72): batch + height pad
    x = jnp.stack([x[:, d:d + H] for d in range(3)], axis=2)         # (Bp, 20, 3, 72): dy taps
    x = x.reshape(Bp, _R, 4, 3 * W * C)                              # (Bp, m, q, 216)
    x = jnp.transpose(x, (2, 1, 0, 3))                               # (q, m, b, 216)
    return x.reshape(4 * _R * Bp, 3 * W * C).astype(jnp.bfloat16)


def _forward_impl(x_nchw, kp):
    B, C, H, W = x_nchw.shape
    assert (C, H, W) == (_C0, _H, _W), "fc=960 fixes the input to 3x20x24"
    Bp = ((B + 7) // 8) * 8                                          # 8-sublane-aligned batch
    xb = _im2col_rows(x_nchw, Bp)                                    # (4*R*Bp, 216) bf16
    out = pl.pallas_call(
        _fused_net_kernel,
        out_shape=jax.ShapeDtypeStruct((Bp, _NCLS_PAD), jnp.float32),
        in_specs=[_vmem_spec()] * 9,
        out_specs=_vmem_spec(),
        scratch_shapes=[
            pltpu.VMEM((2 * _R * Bp, _K2), jnp.float32),             # conv2 K-stacked LHS
            pltpu.VMEM((Bp, _R * _HALF2), jnp.float32),              # fc LHS (Bp, 960)
        ],
    )(xb, kp['w1'], kp['b1'], kp['w2'], kp['b2'],
      kp['wfc'], kp['bfc'], kp['wcls'], kp['bcls'])
    # TODO(synk): for large batch on v7x, add a parallel batch grid axis
    # (grid=(Bp//Bt,), dimension_semantics=("parallel",)) to use both TensorCores;
    # at B~2 a single gridless call keeps all weights resident with one DMA wave.
    return out[:B, :_N_CLS]


pytorch_net_forward = jax.jit(_forward_impl)


# ---------------------------------------------------------------------------
# Init-time weight-layout preprocessing (all layout work hoisted out of forward)
# ---------------------------------------------------------------------------
def _banded_conv_weight(w_oihw, w_out):
    """K-stacked banded conv matrix.

    Rows: (dy, wi, ci) over the 3 input rows of the 3x3 window; no width padding -
    out-of-range width taps are simply absent (zero).  Cols: (w%2, w//2, co) so the
    2x2 width-pool is max(first half, second half)."""
    cout, cin, kh, kw = w_oihw.shape
    half = (w_out // 2) * cout
    seg = w_out * cin                                    # lanes per dy segment
    band = np.zeros((kh * seg, w_out * cout), np.float32)
    wn = np.asarray(w_oihw, np.float32)
    for dy in range(kh):
        for dx in range(kw):
            blk = wn[:, :, dy, dx].T                     # (cin, cout)
            for w in range(w_out):
                wi = w + dx - 1
                if 0 <= wi < w_out:
                    j, s = divmod(w, 2)
                    col = s * half + j * cout
                    band[dy * seg + wi * cin:dy * seg + (wi + 1) * cin,
                         col:col + cout] = blk
    return band


def _tiled_bias(b, w_out):
    # Column ordering (w%2, w//2, co): bias depends only on co = col % cout.
    return np.tile(np.asarray(b, np.float32), w_out)[None, :]


def prepare_params(p):
    w1 = np.asarray(p['w1']); w2 = np.asarray(p['w2'])
    wfc = np.asarray(p['w_fc']); wcls = np.asarray(p['w_cls'])
    b1 = np.asarray(p['b1']); b2 = np.asarray(p['b2'])
    bfc = np.asarray(p['b_fc']); bcls = np.asarray(p['b_cls'])

    kp = {
        'w1': jnp.asarray(_banded_conv_weight(w1, _W), jnp.bfloat16),        # (216, 384)
        'b1': jnp.asarray(_tiled_bias(b1, _W)),                              # (1, 384) f32
        'w2': jnp.asarray(_banded_conv_weight(w2, _W // 2), jnp.bfloat16),   # (576, 384)
        'b2': jnp.asarray(_tiled_bias(b2, _W // 2)),                         # (1, 384) f32
        'bfc': jnp.asarray(bfc[None, :].astype(np.float32)),                 # (1, 64)  f32
    }

    # fc weight: PyTorch flatten index c*30 + h*6 + w  ->  kernel lane h*192 + w*32 + c
    Hq, Wq = _H // 4, _W // 4
    wfc_p = (wfc.astype(np.float32)
             .reshape(wfc.shape[0], _C2, Hq, Wq)          # (64, c, h, w)
             .transpose(2, 3, 1, 0)                       # (h, w, c, 64)
             .reshape(Hq * Wq * _C2, wfc.shape[0]))       # (960, 64)
    kp['wfc'] = jnp.asarray(wfc_p, jnp.bfloat16)

    # classifier: transpose + zero-pad 11 -> 128 output lanes (kept f32)
    wcls_p = np.zeros((wcls.shape[1], _NCLS_PAD), np.float32)
    wcls_p[:, :_N_CLS] = wcls.T
    bcls_p = np.zeros((1, _NCLS_PAD), np.float32)
    bcls_p[0, :_N_CLS] = bcls
    kp['wcls'] = jnp.asarray(wcls_p)                                          # (64, 128)
    kp['bcls'] = jnp.asarray(bcls_p)                                          # (1, 128)
    return kp


# ---------------------------------------------------------------------------
# Parameter init (matches PyTorch shapes / init.normal_(std=0.1), zero biases)
# ---------------------------------------------------------------------------
def init_params(key):
    k1, k2, k3, k4 = jax.random.split(key, 4)
    std = 0.1
    return dict(
        w1=std * jax.random.normal(k1, (_C1, _C0, 3, 3), jnp.float32),   # Conv2d(3, 16, 3, p=1)
        b1=jnp.zeros((_C1,), jnp.float32),
        w2=std * jax.random.normal(k2, (_C2, _C1, 3, 3), jnp.float32),   # Conv2d(16, 32, 3, p=1)
        b2=jnp.zeros((_C2,), jnp.float32),
        w_fc=std * jax.random.normal(k3, (64, 960), jnp.float32),        # Linear(960, 64)
        b_fc=jnp.zeros((64,), jnp.float32),
        w_cls=std * jax.random.normal(k4, (_N_CLS, 64), jnp.float32),    # Linear(64, 11)
        b_cls=jnp.zeros((_N_CLS,), jnp.float32),
    )


# Pure-JAX reference (sanity check of the fused Pallas pipeline)
def reference_forward(x, p):
    dn1 = lax.conv_dimension_numbers(x.shape, p['w1'].shape, ('NCHW', 'OIHW', 'NCHW'))
    y = lax.conv_general_dilated(x, p['w1'], (1, 1), [(1, 1), (1, 1)], dimension_numbers=dn1)
    y = jax.nn.sigmoid(y + p['b1'][None, :, None, None])
    y = lax.reduce_window(y, -jnp.inf, lax.max, (1, 1, 2, 2), (1, 1, 2, 2), 'VALID')
    dn2 = lax.conv_dimension_numbers(y.shape, p['w2'].shape, ('NCHW', 'OIHW', 'NCHW'))
    y = lax.conv_general_dilated(y, p['w2'], (1, 1), [(1, 1), (1, 1)], dimension_numbers=dn2)
    y = jax.nn.sigmoid(y + p['b2'][None, :, None, None])
    y = lax.reduce_window(y, -jnp.inf, lax.max, (1, 1, 2, 2), (1, 1, 2, 2), 'VALID')
    y = y.reshape(y.shape[0], -1)
    y = jax.nn.sigmoid(y @ p['w_fc'].T + p['b_fc'])
    return y @ p['w_cls'].T + p['b_cls']


if __name__ == "__main__":
    key = jax.random.PRNGKey(0)
    kx, kparam = jax.random.split(key)
    x = jax.random.normal(kx, (2, _C0, _H, _W), jnp.float32)   # fc=960 implies 3x20x24 input
    params = init_params(kparam)
    kp = prepare_params(params)                                # one-time layout work

    out = jax.block_until_ready(pytorch_net_forward(x, kp))
    assert out.shape == (2, _N_CLS) and out.dtype == jnp.float32

    ref = jax.block_until_ready(reference_forward(x, params))
    # Kernel runs the matmuls with bf16-rounded weights/activations (f32 accumulation)
    # while the reference runs f32 at XLA's default TPU matmul precision, so the
    # tolerance is 3e-2 rather than 1e-5.
    np.testing.assert_allclose(np.asarray(out), np.asarray(ref), rtol=3e-2, atol=3e-2)

    print("KERNEL_OK")
</pallas_src>

<mosaic_0001>
module attributes {stable_mosaic.version = 11 : i64} {
  func.func @_fused_net_kernel(%arg0: memref<160x216xbf16, #tpu.memory_space<vmem>>, %arg1: memref<216x384xbf16, #tpu.memory_space<vmem>>, %arg2: memref<1x384xf32, #tpu.memory_space<vmem>>, %arg3: memref<576x384xbf16, #tpu.memory_space<vmem>>, %arg4: memref<1x384xf32, #tpu.memory_space<vmem>>, %arg5: memref<960x64xbf16, #tpu.memory_space<vmem>>, %arg6: memref<1x64xf32, #tpu.memory_space<vmem>>, %arg7: memref<64x128xf32, #tpu.memory_space<vmem>>, %arg8: memref<1x128xf32, #tpu.memory_space<vmem>>, %arg9: memref<8x128xf32, #tpu.memory_space<vmem>>, %arg10: memref<80x576xf32, #tpu.memory_space<vmem>>, %arg11: memref<8x960xf32, #tpu.memory_space<vmem>>) attributes {dimension_semantics = [], scalar_prefetch = 0 : i64, scratch_operands = 2 : i64, tpu.core_type = #tpu.core_type<tc>} {
    %c0 = arith.constant 0 : index
    %c0_0 = arith.constant 0 : index
    %0 = vector.load %arg0[%c0, %c0_0] : memref<160x216xbf16, #tpu.memory_space<vmem>>, vector<160x216xbf16>
    %c0_1 = arith.constant 0 : index
    %c0_2 = arith.constant 0 : index
    %1 = vector.load %arg1[%c0_1, %c0_2] : memref<216x384xbf16, #tpu.memory_space<vmem>>, vector<216x384xbf16>
    %cst = arith.constant dense<0.000000e+00> : vector<160x384xf32>
    %2 = tpu.matmul %0, %1, %cst {dimension_numbers = #tpu.dot_dimension_numbers<[1], [0], [0], [1], [0, 0, 1, 1], [], []>} : vector<160x216xbf16>, vector<216x384xbf16>, vector<160x384xf32> -> vector<160x384xf32>
    %c0_3 = arith.constant 0 : index
    %c0_4 = arith.constant 0 : index
    %3 = vector.load %arg2[%c0_3, %c0_4] : memref<1x384xf32, #tpu.memory_space<vmem>>, vector<1x384xf32>
    %4 = vector.broadcast %3 : vector<1x384xf32> to vector<160x384xf32>
    %5 = arith.addf %2, %4 : vector<160x384xf32>
    %6 = arith.negf %5 : vector<160x384xf32>
    %7 = math.exp %6 : vector<160x384xf32>
    %cst_5 = arith.constant 1.000000e+00 : f32
    %8 = vector.broadcast %cst_5 : f32 to vector<160x384xf32>
    %9 = arith.addf %8, %7 : vector<160x384xf32>
    %10 = arith.divf %8, %9 : vector<160x384xf32>
    %11 = vector.extract_strided_slice %10 {offsets = [0, 0], sizes = [40, 384], strides = [1, 1]} : vector<160x384xf32> to vector<40x384xf32>
    %12 = vector.extract_strided_slice %11 {offsets = [0, 0], sizes = [40, 192], strides = [1, 1]} : vector<40x384xf32> to vector<40x192xf32>
    %13 = vector.extract_strided_slice %11 {offsets = [0, 192], sizes = [40, 192], strides = [1, 1]} : vector<40x384xf32> to vector<40x192xf32>
    %14 = arith.maximumf %12, %13 : vector<40x192xf32>
    %15 = vector.extract_strided_slice %10 {offsets = [40, 0], sizes = [40, 384], strides = [1, 1]} : vector<160x384xf32> to vector<40x384xf32>
    %16 = vector.extract_strided_slice %15 {offsets = [0, 0], sizes = [40, 192], strides = [1, 1]} : vector<40x384xf32> to vector<40x192xf32>
    %17 = vector.extract_strided_slice %15 {offsets = [0, 192], sizes = [40, 192], strides = [1, 1]} : vector<40x384xf32> to vector<40x192xf32>
    %18 = arith.maximumf %16, %17 : vector<40x192xf32>
    %19 = arith.maximumf %14, %18 : vector<40x192xf32>
    %20 = vector.extract_strided_slice %10 {offsets = [80, 0], sizes = [40, 384], strides = [1, 1]} : vector<160x384xf32> to vector<40x384xf32>
    %21 = vector.extract_strided_slice %20 {offsets = [0, 0], sizes = [40, 192], strides = [1, 1]} : vector<40x384xf32> to vector<40x192xf32>
    %22 = vector.extract_strided_slice %20 {offsets = [0, 192], sizes = [40, 192], strides = [1, 1]} : vector<40x384xf32> to vector<40x192xf32>
    %23 = arith.maximumf %21, %22 : vector<40x192xf32>
    %24 = vector.extract_strided_slice %10 {offsets = [120, 0], sizes = [40, 384], strides = [1, 1]} : vector<160x384xf32> to vector<40x384xf32>
    %25 = vector.extract_strided_slice %24 {offsets = [0, 0], sizes = [40, 192], strides = [1, 1]} : vector<40x384xf32> to vector<40x192xf32>
    %26 = vector.extract_strided_slice %24 {offsets = [0, 192], sizes = [40, 192], strides = [1, 1]} : vector<40x384xf32> to vector<40x192xf32>
    %27 = arith.maximumf %25, %26 : vector<40x192xf32>
    %28 = arith.maximumf %23, %27 : vector<40x192xf32>
    %cst_6 = arith.constant 0.000000e+00 : f32
    %29 = vector.broadcast %cst_6 : f32 to vector<8x192xf32>
    %c0_7 = arith.constant 0 : index
    %c0_8 = arith.constant 0 : index
    %30 = vector.load %arg10[%c0_7, %c0_8] : memref<80x576xf32, #tpu.memory_space<vmem>>, vector<8x192xf32>
    tpu.vector_store %arg10[%c0_7, %c0_8], %29 {strides = array<i32>} : memref<80x576xf32, #tpu.memory_space<vmem>>, vector<8x192xf32>,
    %31 = vector.extract_strided_slice %28 {offsets = [0, 0], sizes = [32, 192], strides = [1, 1]} : vector<40x192xf32> to vector<32x192xf32>
    %c8 = arith.constant 8 : index
    %c0_9 = arith.constant 0 : index
    %32 = vector.load %arg10[%c8, %c0_9] : memref<80x576xf32, #tpu.memory_space<vmem>>, vector<32x192xf32>
    tpu.vector_store %arg10[%c8, %c0_9], %31 {strides = array<i32>} : memref<80x576xf32, #tpu.memory_space<vmem>>, vector<32x192xf32>,
    %c0_10 = arith.constant 0 : index
    %c192 = arith.constant 192 : index
    %33 = vector.load %arg10[%c0_10, %c192] : memref<80x576xf32, #tpu.memory_space<vmem>>, vector<40x192xf32>
    tpu.vector_store %arg10[%c0_10, %c192], %19 {strides = array<i32>} : memref<80x576xf32, #tpu.memory_space<vmem>>, vector<40x192xf32>,
    %c0_11 = arith.constant 0 : index
    %c384 = arith.constant 384 : index
    %34 = vector.load %arg10[%c0_11, %c384] : memref<80x576xf32, #tpu.memory_space<vmem>>, vector<40x192xf32>
    tpu.vector_store %arg10[%c0_11, %c384], %28 {strides = array<i32>} : memref<80x576xf32, #tpu.memory_space<vmem>>, vector<40x192xf32>,
    %c40 = arith.constant 40 : index
    %c0_12 = arith.constant 0 : index
    %35 = vector.load %arg10[%c40, %c0_12] : memref<80x576xf32, #tpu.memory_space<vmem>>, vector<40x192xf32>
    tpu.vector_store %arg10[%c40, %c0_12], %19 {strides = array<i32>} : memref<80x576xf32, #tpu.memory_space<vmem>>, vector<40x192xf32>,
    %c40_13 = arith.constant 40 : index
    %c192_14 = arith.constant 192 : index
    %36 = vector.load %arg10[%c40_13, %c192_14] : memref<80x576xf32, #tpu.memory_space<vmem>>, vector<40x192xf32>
    tpu.vector_store %arg10[%c40_13, %c192_14], %28 {strides = array<i32>} : memref<80x576xf32, #tpu.memory_space<vmem>>, vector<40x192xf32>,
    %37 = vector.extract_strided_slice %19 {offsets = [8, 0], sizes = [32, 192], strides = [1, 1]} : vector<40x192xf32> to vector<32x192xf32>
    %c40_15 = arith.constant 40 : index
    %c384_16 = arith.constant 384 : index
    %38 = vector.load %arg10[%c40_15, %c384_16] : memref<80x576xf32, #tpu.memory_space<vmem>>, vector<32x192xf32>
    tpu.vector_store %arg10[%c40_15, %c384_16], %37 {strides = array<i32>} : memref<80x576xf32, #tpu.memory_space<vmem>>, vector<32x192xf32>,
    %c72 = arith.constant 72 : index
    %c384_17 = arith.constant 384 : index
    %39 = vector.load %arg10[%c72, %c384_17] : memref<80x576xf32, #tpu.memory_space<vmem>>, vector<8x192xf32>
    tpu.vector_store %arg10[%c72, %c384_17], %29 {strides = array<i32>} : memref<80x576xf32, #tpu.memory_space<vmem>>, vector<8x192xf32>,
    %c0_18 = arith.constant 0 : index
    %c0_19 = arith.constant 0 : index
    %40 = vector.load %arg10[%c0_18, %c0_19] : memref<80x576xf32, #tpu.memory_space<vmem>>, vector<80x576xf32>
    %41 = arith.truncf %40 : vector<80x576xf32> to vector<80x576xbf16>
    %c0_20 = arith.constant 0 : index
    %c0_21 = arith.constant 0 : index
    %42 = vector.load %arg3[%c0_20, %c0_21] : memref<576x384xbf16, #tpu.memory_space<vmem>>, vector<576x384xbf16>
    %cst_22 = arith.constant dense<0.000000e+00> : vector<80x384xf32>
    %43 = tpu.matmul %41, %42, %cst_22 {dimension_numbers = #tpu.dot_dimension_numbers<[1], [0], [0], [1], [0, 0, 1, 1], [], []>} : vector<80x576xbf16>, vector<576x384xbf16>, vector<80x384xf32> -> vector<80x384xf32>
    %c0_23 = arith.constant 0 : index
    %c0_24 = arith.constant 0 : index
    %44 = vector.load %arg4[%c0_23, %c0_24] : memref<1x384xf32, #tpu.memory_space<vmem>>, vector<1x384xf32>
    %45 = vector.broadcast %44 : vector<1x384xf32> to vector<80x384xf32>
    %46 = arith.addf %43, %45 : vector<80x384xf32>
    %47 = arith.negf %46 : vector<80x384xf32>
    %48 = math.exp %47 : vector<80x384xf32>
    %cst_25 = arith.constant 1.000000e+00 : f32
    %49 = vector.broadcast %cst_25 : f32 to vector<80x384xf32>
    %50 = arith.addf %49, %48 : vector<80x384xf32>
    %51 = arith.divf %49, %50 : vector<80x384xf32>
    %52 = vector.extract_strided_slice %51 {offsets = [0, 0], sizes = [40, 384], strides = [1, 1]} : vector<80x384xf32> to vector<40x384xf32>
    %53 = vector.extract_strided_slice %51 {offsets = [40, 0], sizes = [40, 384], strides = [1, 1]} : vector<80x384xf32> to vector<40x384xf32>
    %54 = arith.maximumf %52, %53 : vector<40x384xf32>
    %55 = vector.extract_strided_slice %54 {offsets = [0, 0], sizes = [40, 192], strides = [1, 1]} : vector<40x384xf32> to vector<40x192xf32>
    %56 = vector.extract_strided_slice %54 {offsets = [0, 192], sizes = [40, 192], strides = [1, 1]} : vector<40x384xf32> to vector<40x192xf32>
    %57 = arith.maximumf %55, %56 : vector<40x192xf32>
    %58 = vector.extract_strided_slice %57 {offsets = [0, 0], sizes = [8, 192], strides = [1, 1]} : vector<40x192xf32> to vector<8x192xf32>
    %c0_26 = arith.constant 0 : index
    %c0_27 = arith.constant 0 : index
    %59 = vector.load %arg11[%c0_26, %c0_27] : memref<8x960xf32, #tpu.memory_space<vmem>>, vector<8x192xf32>
    tpu.vector_store %arg11[%c0_26, %c0_27], %58 {strides = array<i32>} : memref<8x960xf32, #tpu.memory_space<vmem>>, vector<8x192xf32>,
    %60 = vector.extract_strided_slice %57 {offsets = [8, 0], sizes = [8, 192], strides = [1, 1]} : vector<40x192xf32> to vector<8x192xf32>
    %c0_28 = arith.constant 0 : index
    %c192_29 = arith.constant 192 : index
    %61 = vector.load %arg11[%c0_28, %c192_29] : memref<8x960xf32, #tpu.memory_space<vmem>>, vector<8x192xf32>
    tpu.vector_store %arg11[%c0_28, %c192_29], %60 {strides = array<i32>} : memref<8x960xf32, #tpu.memory_space<vmem>>, vector<8x192xf32>,
    %62 = vector.extract_strided_slice %57 {offsets = [16, 0], sizes = [8, 192], strides = [1, 1]} : vector<40x192xf32> to vector<8x192xf32>
    %c0_30 = arith.constant 0 : index
    %c384_31 = arith.constant 384 : index
    %63 = vector.load %arg11[%c0_30, %c384_31] : memref<8x960xf32, #tpu.memory_space<vmem>>, vector<8x192xf32>
    tpu.vector_store %arg11[%c0_30, %c384_31], %62 {strides = array<i32>} : memref<8x960xf32, #tpu.memory_space<vmem>>, vector<8x192xf32>,
    %64 = vector.extract_strided_slice %57 {offsets = [24, 0], sizes = [8, 192], strides = [1, 1]} : vector<40x192xf32> to vector<8x192xf32>
    %c0_32 = arith.constant 0 : index
    %c576 = arith.constant 576 : index
    %65 = vector.load %arg11[%c0_32, %c576] : memref<8x960xf32, #tpu.memory_space<vmem>>, vector<8x192xf32>
    tpu.vector_store %arg11[%c0_32, %c576], %64 {strides = array<i32>} : memref<8x960xf32, #tpu.memory_space<vmem>>, vector<8x192xf32>,
    %66 = vector.extract_strided_slice %57 {offsets = [32, 0], sizes = [8, 192], strides = [1, 1]} : vector<40x192xf32> to vector<8x192xf32>
    %c0_33 = arith.constant 0 : index
    %c768 = arith.constant 768 : index
    %67 = vector.load %arg11[%c0_33, %c768] : memref<8x960xf32, #tpu.memory_space<vmem>>, vector<8x192xf32>
    tpu.vector_store %arg11[%c0_33, %c768], %66 {strides = array<i32>} : memref<8x960xf32, #tpu.memory_space<vmem>>, vector<8x192xf32>,
    %c0_34 = arith.constant 0 : index
    %c0_35 = arith.constant 0 : index
    %68 = vector.load %arg11[%c0_34, %c0_35] : memref<8x960xf32, #tpu.memory_space<vmem>>, vector<8x960xf32>
    %69 = arith.truncf %68 : vector<8x960xf32> to vector<8x960xbf16>
    %c0_36 = arith.constant 0 : index
    %c0_37 = arith.constant 0 : index
    %70 = vector.load %arg5[%c0_36, %c0_37] : memref<960x64xbf16, #tpu.memory_space<vmem>>, vector<960x64xbf16>
    %cst_38 = arith.constant dense<0.000000e+00> : vector<8x64xf32>
    %71 = tpu.matmul %69, %70, %cst_38 {dimension_numbers = #tpu.dot_dimension_numbers<[1], [0], [0], [1], [0, 0, 1, 1], [], []>} : vector<8x960xbf16>, vector<960x64xbf16>, vector<8x64xf32> -> vector<8x64xf32>
    %c0_39 = arith.constant 0 : index
    %c0_40 = arith.constant 0 : index
    %72 = vector.load %arg6[%c0_39, %c0_40] : memref<1x64xf32, #tpu.memory_space<vmem>>, vector<1x64xf32>
    %73 = vector.broadcast %72 : vector<1x64xf32> to vector<8x64xf32>
    %74 = arith.addf %71, %73 : vector<8x64xf32>
    %75 = arith.negf %74 : vector<8x64xf32>
    %76 = math.exp %75 : vector<8x64xf32>
    %cst_41 = arith.constant 1.000000e+00 : f32
    %77 = vector.broadcast %cst_41 : f32 to vector<8x64xf32>
    %78 = arith.addf %77, %76 : vector<8x64xf32>
    %79 = arith.divf %77, %78 : vector<8x64xf32>
    %c0_42 = arith.constant 0 : index
    %c0_43 = arith.constant 0 : index
    %80 = vector.load %arg7[%c0_42, %c0_43] : memref<64x128xf32, #tpu.memory_space<vmem>>, vector<64x128xf32>
    %cst_44 = arith.constant dense<0.000000e+00> : vector<8x128xf32>
    %81 = tpu.matmul %79, %80, %cst_44 {dimension_numbers = #tpu.dot_dimension_numbers<[1], [0], [0], [1], [0, 0, 1, 1], [], []>} : vector<8x64xf32>, vector<64x128xf32>, vector<8x128xf32> -> vector<8x128xf32>
    %c0_45 = arith.constant 0 : index
    %c0_46 = arith.constant 0 : index
    %82 = vector.load %arg8[%c0_45, %c0_46] : memref<1x128xf32, #tpu.memory_space<vmem>>, vector<1x128xf32>
    %83 = vector.broadcast %82 : vector<1x128xf32> to vector<8x128xf32>
    %84 = arith.addf %81, %83 : vector<8x128xf32>
    %c0_47 = arith.constant 0 : index
    %c0_48 = arith.constant 0 : index
    %85 = vector.load %arg9[%c0_47, %c0_48] : memref<8x128xf32, #tpu.memory_space<vmem>>, vector<8x128xf32>
    tpu.vector_store %arg9[%c0_47, %c0_48], %84 {strides = array<i32>} : memref<8x128xf32, #tpu.memory_space<vmem>>, vector<8x128xf32>,
    return
  }
}

</mosaic_0001>

<llo_original>
// kernel: _forward_impl.1
$region0: #{_forward_impl.1}
  #allocation0 [shape = 'u32[]', space=smem, size = 0x4, offset = 0x4, fixed_abs, tag = 'smem constant byte address 0x4 - core index']
  #allocation1 [shape = 'u32[72,128]{1,0:T(1,128)}', space=vmem, size = 0x9000, scoped, tag = 'internal scratch']
  #allocation2 [shape = 'f32[80,576]{1,0:T(8,128)}', space=vmem, size = 0x32000, scoped, tag = 'scratch operand']
  #allocation3 [shape = 'f32[8,960]{1,0:T(8,128)}', space=vmem, size = 0x8000, scoped, tag = 'scratch operand']
  %s0 = inlined_call_operand.vmem [shape: bf16[160,216], index: 0, kind: input, shape index: {}]
  %s1 = inlined_call_operand.vmem [shape: bf16[216,384], index: 1, kind: input, shape index: {}]
  %s2 = inlined_call_operand.vmem [shape: f32[1,384], index: 2, kind: input, shape index: {}]
  %s3 = inlined_call_operand.vmem [shape: bf16[576,384], index: 3, kind: input, shape index: {}]
  %s4 = inlined_call_operand.vmem [shape: f32[1,384], index: 4, kind: input, shape index: {}]
  %s5 = inlined_call_operand.vmem [shape: bf16[960,64], index: 5, kind: input, shape index: {}]
  %s6 = inlined_call_operand.vmem [shape: f32[1,64], index: 6, kind: input, shape index: {}]
  %s7 = inlined_call_operand.vmem [shape: f32[64,128], index: 7, kind: input, shape index: {}]
  %s8 = inlined_call_operand.vmem [shape: f32[1,128], index: 8, kind: input, shape index: {}]
  %s9 = inlined_call_operand.vmem [shape: f32[8,128], index: 9, kind: output, shape index: {}]
  %s10 = sld [smem:[#allocation0]]
  $region46: #{_forward_impl.1} parent=0
    _
  %s12 = ssub.s32 1, %s10
  %s13 = scalar_select 0, %s12, %s10
  // Predicated region
  $region2: #{_forward_impl.1} parent=0 // pred_check
    _
  $region3: #{_forward_impl.1} parent=0 // pred_check_branch
    %15 = sbr.rel (0) target = $region5
  $region4: #{_forward_impl.1} parent=0 // pred_region
    _
  $region5: #{_forward_impl.1} parent=0 // pred_fallthru
    _
  // Predicated region
  $region6: #{_forward_impl.1} parent=0 // pred_check
    _
  $region7: #{_forward_impl.1} parent=0 // pred_check_branch
    %17 = sbr.rel (0) target = $region9
  $region8: #{_forward_impl.1} parent=0 // pred_region
    _
  $region9: #{_forward_impl.1} parent=0 // pred_fallthru
    _
  // Predicated region
  $region10: #{_forward_impl.1} parent=0 // pred_check
    _
  $region11: #{_forward_impl.1} parent=0 // pred_check_branch
    %19 = sbr.rel (0) target = $region13
  $region12: #{_forward_impl.1} parent=0 // pred_region
    _
  $region13: #{_forward_impl.1} parent=0 // pred_fallthru
    _
  // Predicated region
  $region14: #{_forward_impl.1} parent=0 // pred_check
    _
  $region15: #{_forward_impl.1} parent=0 // pred_check_branch
    %21 = sbr.rel (0) target = $region17
  $region16: #{_forward_impl.1} parent=0 // pred_region
    _
  $region17: #{_forward_impl.1} parent=0 // pred_fallthru
    _
  // Predicated region
  $region18: #{_forward_impl.1} parent=0 // pred_check
    _
  $region19: #{_forward_impl.1} parent=0 // pred_check_branch
    %23 = sbr.rel (0) target = $region21
  $region20: #{_forward_impl.1} parent=0 // pred_region
    _
  $region21: #{_forward_impl.1} parent=0 // pred_fallthru
    _
  // Predicated region
  $region22: #{_forward_impl.1} parent=0 // pred_check
    _
  $region23: #{_forward_impl.1} parent=0 // pred_check_branch
    %25 = sbr.rel (0) target = $region25
  $region24: #{_forward_impl.1} parent=0 // pred_region
    _
  $region25: #{_forward_impl.1} parent=0 // pred_fallthru
    _
  // Predicated region
  $region26: #{_forward_impl.1} parent=0 // pred_check
    _
  $region27: #{_forward_impl.1} parent=0 // pred_check_branch
    %27 = sbr.rel (0) target = $region29
  $region28: #{_forward_impl.1} parent=0 // pred_region
    _
  $region29: #{_forward_impl.1} parent=0 // pred_fallthru
    _
  // Predicated region
  $region30: #{_forward_impl.1} parent=0 // pred_check
    _
  $region31: #{_forward_impl.1} parent=0 // pred_check_branch
    %29 = sbr.rel (0) target = $region33
  $region32: #{_forward_impl.1} parent=0 // pred_region
    _
  $region33: #{_forward_impl.1} parent=0 // pred_fallthru
    _
  // Predicated region
  $region34: #{_forward_impl.1} parent=0 // pred_check
    _
  $region35: #{_forward_impl.1} parent=0 // pred_check_branch
    %31 = sbr.rel (0) target = $region37
  $region36: #{_forward_impl.1} parent=0 // pred_region
    _
  $region37: #{_forward_impl.1} parent=0 // pred_fallthru
    _
  %v33 = vld [vmem:[%s0] sm:$0xff]
  %v34 = vld [vmem:[%s0 + $0x8] sm:$0xff]
  %v35 = vld [vmem:[%s0 + $0x10] sm:$0xff]
  %v36 = vld [vmem:[%s0 + $0x18] sm:$0xff]
  %v37 = vld [vmem:[%s0 + $0x20] sm:$0xff]
  %v38 = vld [vmem:[%s0 + $0x28] sm:$0xff]
  %v39 = vld [vmem:[%s0 + $0x30] sm:$0xff]
  %v40 = vld [vmem:[%s0 + $0x38] sm:$0xff]
  %v41 = vld [vmem:[%s0 + $0x40] sm:$0xff]
  %v42 = vld [vmem:[%s0 + $0x48] sm:$0xff]
  %v43 = vld [vmem:[%s0 + $0x50] sm:$0xff]
  %v44 = vld [vmem:[%s0 + $0x58] sm:$0xff]
  %v45 = vld [vmem:[%s0 + $0x60] sm:$0xff]
  %v46 = vld [vmem:[%s0 + $0x68] sm:$0xff]
  %v47 = vld [vmem:[%s0 + $0x70] sm:$0xff]
  %v48 = vld [vmem:[%s0 + $0x78] sm:$0xff]
  %v49 = vld [vmem:[%s0 + $0x80] sm:$0xff]
  %v50 = vld [vmem:[%s0 + $0x88] sm:$0xff]
  %v51 = vld [vmem:[%s0 + $0x90] sm:$0xff]
  %v52 = vld [vmem:[%s0 + $0x98] sm:$0xff]
  %v53 = vld [vmem:[%s1] sm:$0xff]
  %v54 = vld [vmem:[%s1 + $0x8] sm:$0xf]
  %v55 = vld [vmem:[%s1 + $0xc] sm:$0xff]
  %v56 = vld [vmem:[%s1 + $0x14] sm:$0xf]
  %v57 = vld [vmem:[%s1 + $0x18] sm:$0xff]
  %v58 = vld [vmem:[%s1 + $0x20] sm:$0xf]
  %v59 = vld [vmem:[%s1 + $0x24] sm:$0xff]
  %v60 = vld [vmem:[%s1 + $0x2c] sm:$0xf]
  %v61 = vld [vmem:[%s1 + $0x30] sm:$0xff]
  %v62 = vld [vmem:[%s1 + $0x38] sm:$0xf]
  %v63 = vld [vmem:[%s1 + $0x3c] sm:$0xff]
  %v64 = vld [vmem:[%s1 + $0x44] sm:$0xf]
  %v65 = vld [vmem:[%s1 + $0x48] sm:$0xff]
  %v66 = vld [vmem:[%s1 + $0x50] sm:$0xf]
  %v67 = vld [vmem:[%s1 + $0x54] sm:$0xff]
  %v68 = vld [vmem:[%s1 + $0x5c] sm:$0xf]
  %v69 = vld [vmem:[%s1 + $0x60] sm:$0xff]
  %v70 = vld [vmem:[%s1 + $0x68] sm:$0xf]
  %v71 = vld [vmem:[%s1 + $0x6c] sm:$0xff]
  %v72 = vld [vmem:[%s1 + $0x74] sm:$0xf]
  %v73 = vld [vmem:[%s1 + $0x78] sm:$0xff]
  %v74 = vld [vmem:[%s1 + $0x80] sm:$0xf]
  %v75 = vld [vmem:[%s1 + $0x84] sm:$0xff]
  %v76 = vld [vmem:[%s1 + $0x8c] sm:$0xf]
  %v77 = vld [vmem:[%s1 + $0x90] sm:$0xff]
  %v78 = vld [vmem:[%s1 + $0x98] sm:$0xf]
  %v79 = vld [vmem:[%s1 + $0x9c] sm:$0xff]
  %v80 = vld [vmem:[%s1 + $0xa4] sm:$0xf]
  %v81 = vld [vmem:[%s1 + $0xa8] sm:$0xff]
  %v82 = vld [vmem:[%s1 + $0xb0] sm:$0xf]
  %v83 = vld [vmem:[%s1 + $0xb4] sm:$0xff]
  %v84 = vld [vmem:[%s1 + $0xbc] sm:$0xf]
  %v85 = vld [vmem:[%s1 + $0xc0] sm:$0xff]
  %v86 = vld [vmem:[%s1 + $0xc8] sm:$0xf]
  %v87 = vld [vmem:[%s1 + $0xcc] sm:$0xff]
  %v88 = vld [vmem:[%s1 + $0xd4] sm:$0xf]
  %v89 = vld [vmem:[%s1 + $0xd8] sm:$0xff]
  %v90 = vld [vmem:[%s1 + $0xe0] sm:$0xf]
  %v91 = vld [vmem:[%s1 + $0xe4] sm:$0xff]
  %v92 = vld [vmem:[%s1 + $0xec] sm:$0xf]
  %v93 = vld [vmem:[%s1 + $0xf0] sm:$0xff]
  %v94 = vld [vmem:[%s1 + $0xf8] sm:$0xf]
  %v95 = vld [vmem:[%s1 + $0xfc] sm:$0xff]
  %v96 = vld [vmem:[%s1 + $0x104] sm:$0xf]
  %v97 = vld [vmem:[%s1 + $0x108] sm:$0xff]
  %v98 = vld [vmem:[%s1 + $0x110] sm:$0xf]
  %v99 = vld [vmem:[%s1 + $0x114] sm:$0xff]
  %v100 = vld [vmem:[%s1 + $0x11c] sm:$0xf]
  %v101 = vld [vmem:[%s1 + $0x120] sm:$0xff]
  %v102 = vld [vmem:[%s1 + $0x128] sm:$0xf]
  %v103 = vld [vmem:[%s1 + $0x12c] sm:$0xff]
  %v104 = vld [vmem:[%s1 + $0x134] sm:$0xf]
  %v105 = vld [vmem:[%s1 + $0x138] sm:$0xff]
  %v106 = vld [vmem:[%s1 + $0x140] sm:$0xf]
  %v107 = vld [vmem:[%s2] sm:$0x7]
  %v109 = vperm.slane %v107, 0
  %v110 = vperm.slane %v107, 1
  %v111 = vperm.slane %v107, 2
  %v135 = vunpack.c.l.b16 %v33
  %v136 = vunpack.c.h.b16 %v33
  %v137 = vunpack.c.l.b16 %v34
  %v138 = vunpack.c.h.b16 %v34
  %v139 = vunpack.c.l.b16 %v35
  %v140 = vunpack.c.h.b16 %v35
  %v141 = vunpack.c.l.b16 %v36
  %v142 = vunpack.c.h.b16 %v36
  %v143 = vunpack.c.l.b16 %v37
  %v144 = vunpack.c.h.b16 %v37
  %v145 = vunpack.c.l.b16 %v38
  %v146 = vunpack.c.h.b16 %v38
  %v147 = vunpack.c.l.b16 %v39
  %v148 = vunpack.c.h.b16 %v39
  %v149 = vunpack.c.l.b16 %v40
  %v150 = vunpack.c.h.b16 %v40
  %v151 = vunpack.c.l.b16 %v41
  %v152 = vunpack.c.h.b16 %v41
  %v153 = vunpack.c.l.b16 %v42
  %v154 = vunpack.c.h.b16 %v42
  %v155 = vunpack.c.l.b16 %v43
  %v156 = vunpack.c.h.b16 %v43
  %v157 = vunpack.c.l.b16 %v44
  %v158 = vunpack.c.h.b16 %v44
  %v159 = vunpack.c.l.b16 %v45
  %v160 = vunpack.c.h.b16 %v45
  %v161 = vunpack.c.l.b16 %v46
  %v162 = vunpack.c.h.b16 %v46
  %v163 = vunpack.c.l.b16 %v47
  %v164 = vunpack.c.h.b16 %v47
  %v165 = vunpack.c.l.b16 %v48
  %v166 = vunpack.c.h.b16 %v48
  %v167 = vunpack.c.l.b16 %v49
  %v168 = vunpack.c.h.b16 %v49
  %v169 = vunpack.c.l.b16 %v50
  %v170 = vunpack.c.h.b16 %v50
  %v171 = vunpack.c.l.b16 %v51
  %v172 = vunpack.c.h.b16 %v51
  %v173 = vunpack.c.l.b16 %v52
  %v174 = vunpack.c.h.b16 %v52
  %v175 = vpack.c.b16 %v137, %v135
  %v176 = vpack.c.b16 %v138, %v136
  %v177 = vpack.c.b16 %v141, %v139
  %v178 = vpack.c.b16 %v142, %v140
  %v179 = vpack.c.b16 %v145, %v143
  %v180 = vpack.c.b16 %v146, %v144
  %v181 = vpack.c.b16 %v149, %v147
  %v182 = vpack.c.b16 %v150, %v148
  %v183 = vpack.c.b16 %v153, %v151
  %v184 = vpack.c.b16 %v154, %v152
  %v185 = vpack.c.b16 %v157, %v155
  %v186 = vpack.c.b16 %v158, %v156
  %v187 = vpack.c.b16 %v161, %v159
  %v188 = vpack.c.b16 %v162, %v160
  %v189 = vpack.c.b16 %v165, %v163
  %v190 = vpack.c.b16 %v166, %v164
  %v191 = vpack.c.b16 %v169, %v167
  %v192 = vpack.c.b16 %v170, %v168
  %v193 = vpack.c.b16 %v173, %v171
  %v194 = vpack.c.b16 %v174, %v172
  %v259 = vunpack.c.l.b16 %v53
  %v260 = vunpack.c.h.b16 %v53
  %v261 = vunpack.c.l.b16 %v54
  %v262 = vunpack.c.l.b16 %v55
  %v263 = vunpack.c.h.b16 %v55
  %v264 = vunpack.c.l.b16 %v56
  %v265 = vunpack.c.l.b16 %v57
  %v266 = vunpack.c.h.b16 %v57
  %v267 = vunpack.c.l.b16 %v58
  %v268 = vunpack.c.l.b16 %v59
  %v269 = vunpack.c.h.b16 %v59
  %v270 = vunpack.c.l.b16 %v60
  %v271 = vunpack.c.l.b16 %v61
  %v272 = vunpack.c.h.b16 %v61
  %v273 = vunpack.c.l.b16 %v62
  %v274 = vunpack.c.l.b16 %v63
  %v275 = vunpack.c.h.b16 %v63
  %v276 = vunpack.c.l.b16 %v64
  %v277 = vunpack.c.l.b16 %v65
  %v278 = vunpack.c.h.b16 %v65
  %v279 = vunpack.c.l.b16 %v66
  %v280 = vunpack.c.l.b16 %v67
  %v281 = vunpack.c.h.b16 %v67
  %v282 = vunpack.c.l.b16 %v68
  %v283 = vunpack.c.l.b16 %v69
  %v284 = vunpack.c.h.b16 %v69
  %v285 = vunpack.c.l.b16 %v70
  %v286 = vunpack.c.l.b16 %v71
  %v287 = vunpack.c.h.b16 %v71
  %v288 = vunpack.c.l.b16 %v72
  %v289 = vunpack.c.l.b16 %v73
  %v290 = vunpack.c.h.b16 %v73
  %v291 = vunpack.c.l.b16 %v74
  %v292 = vunpack.c.l.b16 %v75
  %v293 = vunpack.c.h.b16 %v75
  %v294 = vunpack.c.l.b16 %v76
  %v295 = vunpack.c.l.b16 %v77
  %v296 = vunpack.c.h.b16 %v77
  %v297 = vunpack.c.l.b16 %v78
  %v298 = vunpack.c.l.b16 %v79
  %v299 = vunpack.c.h.b16 %v79
  %v300 = vunpack.c.l.b16 %v80
  %v301 = vunpack.c.l.b16 %v81
  %v302 = vunpack.c.h.b16 %v81
  %v303 = vunpack.c.l.b16 %v82
  %v304 = vunpack.c.l.b16 %v83
  %v305 = vunpack.c.h.b16 %v83
  %v306 = vunpack.c.l.b16 %v84
  %v307 = vunpack.c.l.b16 %v85
  %v308 = vunpack.c.h.b16 %v85
  %v309 = vunpack.c.l.b16 %v86
  %v310 = vunpack.c.l.b16 %v87
  %v311 = vunpack.c.h.b16 %v87
  %v312 = vunpack.c.l.b16 %v88
  %v313 = vunpack.c.l.b16 %v89
  %v314 = vunpack.c.h.b16 %v89
  %v315 = vunpack.c.l.b16 %v90
  %v316 = vunpack.c.l.b16 %v91
  %v317 = vunpack.c.h.b16 %v91
  %v318 = vunpack.c.l.b16 %v92
  %v319 = vunpack.c.l.b16 %v93
  %v320 = vunpack.c.h.b16 %v93
  %v321 = vunpack.c.l.b16 %v94
  %v322 = vunpack.c.l.b16 %v95
  %v323 = vunpack.c.h.b16 %v95
  %v324 = vunpack.c.l.b16 %v96
  %v325 = vunpack.c.l.b16 %v97
  %v326 = vunpack.c.h.b16 %v97
  %v327 = vunpack.c.l.b16 %v98
  %v328 = vunpack.c.l.b16 %v99
  %v329 = vunpack.c.h.b16 %v99
  %v330 = vunpack.c.l.b16 %v100
  %v331 = vunpack.c.l.b16 %v101
  %v332 = vunpack.c.h.b16 %v101
  %v333 = vunpack.c.l.b16 %v102
  %v334 = vunpack.c.l.b16 %v103
  %v335 = vunpack.c.h.b16 %v103
  %v336 = vunpack.c.l.b16 %v104
  %v337 = vunpack.c.l.b16 %v105
  %v338 = vunpack.c.h.b16 %v105
  %v339 = vunpack.c.l.b16 %v106
  %v340 = vpack.c.b16 %v262, %v259
  %v341 = vpack.c.b16 %v263, %v260
  %v342 = vpack.c.b16 %v264, %v261
  %v343 = vpack.c.b16 %v268, %v265
  %v344 = vpack.c.b16 %v269, %v266
  %v345 = vpack.c.b16 %v270, %v267
  %v346 = vpack.c.b16 %v274, %v271
  %v347 = vpack.c.b16 %v275, %v272
  %v348 = vpack.c.b16 %v276, %v273
  %v349 = vpack.c.b16 %v280, %v277
  %v350 = vpack.c.b16 %v281, %v278
  %v351 = vpack.c.b16 %v282, %v279
  %v352 = vpack.c.b16 %v286, %v283
  %v353 = vpack.c.b16 %v287, %v284
  %v354 = vpack.c.b16 %v288, %v285
  %v355 = vpack.c.b16 %v292, %v289
  %v356 = vpack.c.b16 %v293, %v290
  %v357 = vpack.c.b16 %v294, %v291
  %v358 = vpack.c.b16 %v298, %v295
  %v359 = vpack.c.b16 %v299, %v296
  %v360 = vpack.c.b16 %v300, %v297
  %v361 = vpack.c.b16 %v304, %v301
  %v362 = vpack.c.b16 %v305, %v302
  %v363 = vpack.c.b16 %v306, %v303
  %v364 = vpack.c.b16 %v310, %v307
  %v365 = vpack.c.b16 %v311, %v308
  %v366 = vpack.c.b16 %v312, %v309
  %v367 = vpack.c.b16 %v316, %v313
  %v368 = vpack.c.b16 %v317, %v314
  %v369 = vpack.c.b16 %v318, %v315
  %v370 = vpack.c.b16 %v322, %v319
  %v371 = vpack.c.b16 %v323, %v320
  %v372 = vpack.c.b16 %v324, %v321
  %v373 = vpack.c.b16 %v328, %v325
  %v374 = vpack.c.b16 %v329, %v326
  %v375 = vpack.c.b16 %v330, %v327
  %v376 = vpack.c.b16 %v334, %v331
  %v377 = vpack.c.b16 %v335, %v332
  %v378 = vpack.c.b16 %v336, %v333
  %v379 = vpack.c.b16 %v337, %v337
  %v380 = vpack.c.b16 %v338, %v338
  %v381 = vpack.c.b16 %v339, %v339
  %vm421 = vcmask 719872
  %v423 = vsel %vm421, %v176, 0
  %v426 = vsel %vm421, %v178, 0
  %v429 = vsel %vm421, %v180, 0
  %v432 = vsel %vm421, %v182, 0
  %v435 = vsel %vm421, %v184, 0
  %v438 = vsel %vm421, %v186, 0
  %v441 = vsel %vm421, %v188, 0
  %v444 = vsel %vm421, %v190, 0
  %v447 = vsel %vm421, %v192, 0
  %v450 = vsel %vm421, %v194, 0
  %vm452 = vcmask 1043456
  %v454 = vsel %vm452, %v379, 0
  %v457 = vsel %vm452, %v380, 0
  %v460 = vsel %vm452, %v381, 0
  %462 = vmatpush.bf16.msra.mxu0 %v361
  %463 = vmatpush.bf16.msra.mxu0 %v358
  %464 = vmatpush.bf16.msra.mxu0 %v355
  %465 = vmatpush.bf16.msra.mxu0 %v352
  %466 = vmatpush.bf16.msra.mxu0 %v349
  %467 = vmatpush.bf16.msra.mxu0 %v346
  %468 = vmatpush.bf16.msra.mxu0 %v343
  %469 = vmatpush.bf16.msra.mxu0 %v340
  %470 = vmatmul.bf16.gmra.mxu0 %v175
  %v471 = vpop.f32.mrf.mxu0
  %v472 = vadd.f32 %v109, %v471
  %v473 = vpop.f32.mrf.mxu0
  %v474 = vadd.f32 %v109, %v473
  %475 = vmatmul.bf16.gmra.mxu0 %v177
  %v476 = vpop.f32.mrf.mxu0
  %v477 = vadd.f32 %v109, %v476
  %v478 = vpop.f32.mrf.mxu0
  %v479 = vadd.f32 %v109, %v478
  %480 = vmatmul.bf16.gmra.mxu0 %v179
  %v481 = vpop.f32.mrf.mxu0
  %v482 = vadd.f32 %v109, %v481
  %v483 = vpop.f32.mrf.mxu0
  %v484 = vadd.f32 %v109, %v483
  %485 = vmatmul.bf16.gmra.mxu0 %v181
  %v486 = vpop.f32.mrf.mxu0
  %v487 = vadd.f32 %v109, %v486
  %v488 = vpop.f32.mrf.mxu0
  %v489 = vadd.f32 %v109, %v488
  %490 = vmatmul.bf16.gmra.mxu0 %v183
  %v491 = vpop.f32.mrf.mxu0
  %v492 = vadd.f32 %v109, %v491
  %v493 = vpop.f32.mrf.mxu0
  %v494 = vadd.f32 %v109, %v493
  %495 = vmatmul.bf16.gmra.mxu0 %v185
  %v496 = vpop.f32.mrf.mxu0
  %v497 = vadd.f32 %v109, %v496
  %v498 = vpop.f32.mrf.mxu0
  %v499 = vadd.f32 %v109, %v498
  %500 = vmatmul.bf16.gmra.mxu0 %v187
  %v501 = vpop.f32.mrf.mxu0
  %v502 = vadd.f32 %v109, %v501
  %v503 = vpop.f32.mrf.mxu0
  %v504 = vadd.f32 %v109, %v503
  %505 = vmatmul.bf16.gmra.mxu0 %v189
  %v506 = vpop.f32.mrf.mxu0
  %v507 = vadd.f32 %v109, %v506
  %v508 = vpop.f32.mrf.mxu0
  %v509 = vadd.f32 %v109, %v508
  %510 = vmatmul.bf16.gmra.mxu0 %v191
  %v511 = vpop.f32.mrf.mxu0
  %v512 = vadd.f32 %v109, %v511
  %v513 = vpop.f32.mrf.mxu0
  %v514 = vadd.f32 %v109, %v513
  %515 = vmatmul.bf16.gmra.mxu0 %v193
  %v516 = vpop.f32.mrf.mxu0
  %v517 = vadd.f32 %v109, %v516
  %v518 = vpop.f32.mrf.mxu0
  %v519 = vadd.f32 %v109, %v518
  %520 = vdwg.mxu0
  %521 = vmatpush.bf16.msra.mxu0 0
  %522 = vmatpush.bf16.msra.mxu0 0
  %523 = vmatpush.bf16.msra.mxu0 %v454
  %524 = vmatpush.bf16.msra.mxu0 %v376
  %525 = vmatpush.bf16.msra.mxu0 %v373
  %526 = vmatpush.bf16.msra.mxu0 %v370
  %527 = vmatpush.bf16.msra.mxu0 %v367
  %528 = vmatpush.bf16.msra.mxu0 %v364
  %529 = vmatmul.bf16.gmra.mxu0 %v423
  %v530 = vpop.f32.mrf.mxu0
  %v531 = vadd.f32 %v472, %v530
  %v532 = vpop.f32.mrf.mxu0
  %v533 = vadd.f32 %v474, %v532
  %534 = vmatmul.bf16.gmra.mxu0 %v426
  %v535 = vpop.f32.mrf.mxu0
  %v536 = vadd.f32 %v477, %v535
  %v537 = vpop.f32.mrf.mxu0
  %v538 = vadd.f32 %v479, %v537
  %539 = vmatmul.bf16.gmra.mxu0 %v429
  %v540 = vpop.f32.mrf.mxu0
  %v541 = vadd.f32 %v482, %v540
  %v542 = vpop.f32.mrf.mxu0
  %v543 = vadd.f32 %v484, %v542
  %544 = vmatmul.bf16.gmra.mxu0 %v432
  %v545 = vpop.f32.mrf.mxu0
  %v546 = vadd.f32 %v487, %v545
  %v547 = vpop.f32.mrf.mxu0
  %v548 = vadd.f32 %v489, %v547
  %549 = vmatmul.bf16.gmra.mxu0 %v435
  %v550 = vpop.f32.mrf.mxu0
  %v551 = vadd.f32 %v492, %v550
  %v552 = vpop.f32.mrf.mxu0
  %v553 = vadd.f32 %v494, %v552
  %554 = vmatmul.bf16.gmra.mxu0 %v438
  %v555 = vpop.f32.mrf.mxu0
  %v556 = vadd.f32 %v497, %v555
  %v557 = vpop.f32.mrf.mxu0
  %v558 = vadd.f32 %v499, %v557
  %559 = vmatmul.bf16.gmra.mxu0 %v441
  %v560 = vpop.f32.mrf.mxu0
  %v561 = vadd.f32 %v502, %v560
  %v562 = vpop.f32.mrf.mxu0
  %v563 = vadd.f32 %v504, %v562
  %564 = vmatmul.bf16.gmra.mxu0 %v444
  %v565 = vpop.f32.mrf.mxu0
  %v566 = vadd.f32 %v507, %v565
  %v567 = vpop.f32.mrf.mxu0
  %v568 = vadd.f32 %v509, %v567
  %569 = vmatmul.bf16.gmra.mxu0 %v447
  %v570 = vpop.f32.mrf.mxu0
  %v571 = vadd.f32 %v512, %v570
  %v572 = vpop.f32.mrf.mxu0
  %v573 = vadd.f32 %v514, %v572
  %574 = vmatmul.bf16.gmra.mxu0 %v450
  %v575 = vpop.f32.mrf.mxu0
  %v576 = vadd.f32 %v517, %v575
  %v577 = vpop.f32.mrf.mxu0
  %v578 = vadd.f32 %v519, %v577
  %579 = vdwg.mxu0
  %580 = vmatpush.bf16.msra.mxu0 %v362
  %581 = vmatpush.bf16.msra.mxu0 %v359
  %582 = vmatpush.bf16.msra.mxu0 %v356
  %583 = vmatpush.bf16.msra.mxu0 %v353
  %584 = vmatpush.bf16.msra.mxu0 %v350
  %585 = vmatpush.bf16.msra.mxu0 %v347
  %586 = vmatpush.bf16.msra.mxu0 %v344
  %587 = vmatpush.bf16.msra.mxu0 %v341
  %588 = vmatmul.bf16.gmra.mxu0 %v175
  %v589 = vpop.f32.mrf.mxu0
  %v590 = vadd.f32 %v110, %v589
  %v591 = vpop.f32.mrf.mxu0
  %v592 = vadd.f32 %v110, %v591
  %593 = vmatmul.bf16.gmra.mxu0 %v177
  %v594 = vpop.f32.mrf.mxu0
  %v595 = vadd.f32 %v110, %v594
  %v596 = vpop.f32.mrf.mxu0
  %v597 = vadd.f32 %v110, %v596
  %598 = vmatmul.bf16.gmra.mxu0 %v179
  %v599 = vpop.f32.mrf.mxu0
  %v600 = vadd.f32 %v110, %v599
  %v601 = vpop.f32.mrf.mxu0
  %v602 = vadd.f32 %v110, %v601
  %603 = vmatmul.bf16.gmra.mxu0 %v181
  %v604 = vpop.f32.mrf.mxu0
  %v605 = vadd.f32 %v110, %v604
  %v606 = vpop.f32.mrf.mxu0
  %v607 = vadd.f32 %v110, %v606
  %608 = vmatmul.bf16.gmra.mxu0 %v183
  %v609 = vpop.f32.mrf.mxu0
  %v610 = vadd.f32 %v110, %v609
  %v611 = vpop.f32.mrf.mxu0
  %v612 = vadd.f32 %v110, %v611
  %613 = vmatmul.bf16.gmra.mxu0 %v185
  %v614 = vpop.f32.mrf.mxu0
  %v615 = vadd.f32 %v110, %v614
  %v616 = vpop.f32.mrf.mxu0
  %v617 = vadd.f32 %v110, %v616
  %618 = vmatmul.bf16.gmra.mxu0 %v187
  %v619 = vpop.f32.mrf.mxu0
  %v620 = vadd.f32 %v110, %v619
  %v621 = vpop.f32.mrf.mxu0
  %v622 = vadd.f32 %v110, %v621
  %623 = vmatmul.bf16.gmra.mxu0 %v189
  %v624 = vpop.f32.mrf.mxu0
  %v625 = vadd.f32 %v110, %v624
  %v626 = vpop.f32.mrf.mxu0
  %v627 = vadd.f32 %v110, %v626
  %628 = vmatmul.bf16.gmra.mxu0 %v191
  %v629 = vpop.f32.mrf.mxu0
  %v630 = vadd.f32 %v110, %v629
  %v631 = vpop.f32.mrf.mxu0
  %v632 = vadd.f32 %v110, %v631
  %633 = vmatmul.bf16.gmra.mxu0 %v193
  %v634 = vpop.f32.mrf.mxu0
  %v635 = vadd.f32 %v110, %v634
  %v636 = vpop.f32.mrf.mxu0
  %v637 = vadd.f32 %v110, %v636
  %638 = vdwg.mxu0
  %639 = vmatpush.bf16.msra.mxu0 0
  %640 = vmatpush.bf16.msra.mxu0 0
  %641 = vmatpush.bf16.msra.mxu0 %v457
  %642 = vmatpush.bf16.msra.mxu0 %v377
  %643 = vmatpush.bf16.msra.mxu0 %v374
  %644 = vmatpush.bf16.msra.mxu0 %v371
  %645 = vmatpush.bf16.msra.mxu0 %v368
  %646 = vmatpush.bf16.msra.mxu0 %v365
  %647 = vmatmul.bf16.gmra.mxu0 %v423
  %v648 = vpop.f32.mrf.mxu0
  %v649 = vadd.f32 %v590, %v648
  %v650 = vpop.f32.mrf.mxu0
  %v651 = vadd.f32 %v592, %v650
  %652 = vmatmul.bf16.gmra.mxu0 %v426
  %v653 = vpop.f32.mrf.mxu0
  %v654 = vadd.f32 %v595, %v653
  %v655 = vpop.f32.mrf.mxu0
  %v656 = vadd.f32 %v597, %v655
  %657 = vmatmul.bf16.gmra.mxu0 %v429
  %v658 = vpop.f32.mrf.mxu0
  %v659 = vadd.f32 %v600, %v658
  %v660 = vpop.f32.mrf.mxu0
  %v661 = vadd.f32 %v602, %v660
  %662 = vmatmul.bf16.gmra.mxu0 %v432
  %v663 = vpop.f32.mrf.mxu0
  %v664 = vadd.f32 %v605, %v663
  %v665 = vpop.f32.mrf.mxu0
  %v666 = vadd.f32 %v607, %v665
  %667 = vmatmul.bf16.gmra.mxu0 %v435
  %v668 = vpop.f32.mrf.mxu0
  %v669 = vadd.f32 %v610, %v668
  %v670 = vpop.f32.mrf.mxu0
  %v671 = vadd.f32 %v612, %v670
  %672 = vmatmul.bf16.gmra.mxu0 %v438
  %v673 = vpop.f32.mrf.mxu0
  %v674 = vadd.f32 %v615, %v673
  %v675 = vpop.f32.mrf.mxu0
  %v676 = vadd.f32 %v617, %v675
  %677 = vmatmul.bf16.gmra.mxu0 %v441
  %v678 = vpop.f32.mrf.mxu0
  %v679 = vadd.f32 %v620, %v678
  %v680 = vpop.f32.mrf.mxu0
  %v681 = vadd.f32 %v622, %v680
  %682 = vmatmul.bf16.gmra.mxu0 %v444
  %v683 = vpop.f32.mrf.mxu0
  %v684 = vadd.f32 %v625, %v683
  %v685 = vpop.f32.mrf.mxu0
  %v686 = vadd.f32 %v627, %v685
  %687 = vmatmul.bf16.gmra.mxu0 %v447
  %v688 = vpop.f32.mrf.mxu0
  %v689 = vadd.f32 %v630, %v688
  %v690 = vpop.f32.mrf.mxu0
  %v691 = vadd.f32 %v632, %v690
  %692 = vmatmul.bf16.gmra.mxu0 %v450
  %v693 = vpop.f32.mrf.mxu0
  %v694 = vadd.f32 %v635, %v693
  %v695 = vpop.f32.mrf.mxu0
  %v696 = vadd.f32 %v637, %v695
  %697 = vdwg.mxu0
  %698 = vmatpush.bf16.msra.mxu0 %v363
  %699 = vmatpush.bf16.msra.mxu0 %v360
  %700 = vmatpush.bf16.msra.mxu0 %v357
  %701 = vmatpush.bf16.msra.mxu0 %v354
  %702 = vmatpush.bf16.msra.mxu0 %v351
  %703 = vmatpush.bf16.msra.mxu0 %v348
  %704 = vmatpush.bf16.msra.mxu0 %v345
  %705 = vmatpush.bf16.msra.mxu0 %v342
  %706 = vmatmul.bf16.gmra.mxu0 %v175
  %v707 = vpop.f32.mrf.mxu0
  %v708 = vadd.f32 %v111, %v707
  %v709 = vpop.f32.mrf.mxu0
  %v710 = vadd.f32 %v111, %v709
  %711 = vmatmul.bf16.gmra.mxu0 %v177
  %v712 = vpop.f32.mrf.mxu0
  %v713 = vadd.f32 %v111, %v712
  %v714 = vpop.f32.mrf.mxu0
  %v715 = vadd.f32 %v111, %v714
  %716 = vmatmul.bf16.gmra.mxu0 %v179
  %v717 = vpop.f32.mrf.mxu0
  %v718 = vadd.f32 %v111, %v717
  %v719 = vpop.f32.mrf.mxu0
  %v720 = vadd.f32 %v111, %v719
  %721 = vmatmul.bf16.gmra.mxu0 %v181
  %v722 = vpop.f32.mrf.mxu0
  %v723 = vadd.f32 %v111, %v722
  %v724 = vpop.f32.mrf.mxu0
  %v725 = vadd.f32 %v111, %v724
  %726 = vmatmul.bf16.gmra.mxu0 %v183
  %v727 = vpop.f32.mrf.mxu0
  %v728 = vadd.f32 %v111, %v727
  %v729 = vpop.f32.mrf.mxu0
  %v730 = vadd.f32 %v111, %v729
  %731 = vmatmul.bf16.gmra.mxu0 %v185
  %v732 = vpop.f32.mrf.mxu0
  %v733 = vadd.f32 %v111, %v732
  %v734 = vpop.f32.mrf.mxu0
  %v735 = vadd.f32 %v111, %v734
  %736 = vmatmul.bf16.gmra.mxu0 %v187
  %v737 = vpop.f32.mrf.mxu0
  %v738 = vadd.f32 %v111, %v737
  %v739 = vpop.f32.mrf.mxu0
  %v740 = vadd.f32 %v111, %v739
  %741 = vmatmul.bf16.gmra.mxu0 %v189
  %v742 = vpop.f32.mrf.mxu0
  %v743 = vadd.f32 %v111, %v742
  %v744 = vpop.f32.mrf.mxu0
  %v745 = vadd.f32 %v111, %v744
  %746 = vmatmul.bf16.gmra.mxu0 %v191
  %v747 = vpop.f32.mrf.mxu0
  %v748 = vadd.f32 %v111, %v747
  %v749 = vpop.f32.mrf.mxu0
  %v750 = vadd.f32 %v111, %v749
  %751 = vmatmul.bf16.gmra.mxu0 %v193
  %v752 = vpop.f32.mrf.mxu0
  %v753 = vadd.f32 %v111, %v752
  %v754 = vpop.f32.mrf.mxu0
  %v755 = vadd.f32 %v111, %v754
  %756 = vdwg.mxu0
  %757 = vmatpush.bf16.msra.mxu0 0
  %758 = vmatpush.bf16.msra.mxu0 0
  %759 = vmatpush.bf16.msra.mxu0 %v460
  %760 = vmatpush.bf16.msra.mxu0 %v378
  %761 = vmatpush.bf16.msra.mxu0 %v375
  %762 = vmatpush.bf16.msra.mxu0 %v372
  %763 = vmatpush.bf16.msra.mxu0 %v369
  %764 = vmatpush.bf16.msra.mxu0 %v366
  %765 = vmatmul.bf16.gmra.mxu0 %v423
  %v766 = vpop.f32.mrf.mxu0
  %v767 = vadd.f32 %v708, %v766
  %v768 = vpop.f32.mrf.mxu0
  %v769 = vadd.f32 %v710, %v768
  %770 = vmatmul.bf16.gmra.mxu0 %v426
  %v771 = vpop.f32.mrf.mxu0
  %v772 = vadd.f32 %v713, %v771
  %v773 = vpop.f32.mrf.mxu0
  %v774 = vadd.f32 %v715, %v773
  %775 = vmatmul.bf16.gmra.mxu0 %v429
  %v776 = vpop.f32.mrf.mxu0
  %v777 = vadd.f32 %v718, %v776
  %v778 = vpop.f32.mrf.mxu0
  %v779 = vadd.f32 %v720, %v778
  %780 = vmatmul.bf16.gmra.mxu0 %v432
  %v781 = vpop.f32.mrf.mxu0
  %v782 = vadd.f32 %v723, %v781
  %v783 = vpop.f32.mrf.mxu0
  %v784 = vadd.f32 %v725, %v783
  %785 = vmatmul.bf16.gmra.mxu0 %v435
  %v786 = vpop.f32.mrf.mxu0
  %v787 = vadd.f32 %v728, %v786
  %v788 = vpop.f32.mrf.mxu0
  %v789 = vadd.f32 %v730, %v788
  %790 = vmatmul.bf16.gmra.mxu0 %v438
  %v791 = vpop.f32.mrf.mxu0
  %v792 = vadd.f32 %v733, %v791
  %v793 = vpop.f32.mrf.mxu0
  %v794 = vadd.f32 %v735, %v793
  %795 = vmatmul.bf16.gmra.mxu0 %v441
  %v796 = vpop.f32.mrf.mxu0
  %v797 = vadd.f32 %v738, %v796
  %v798 = vpop.f32.mrf.mxu0
  %v799 = vadd.f32 %v740, %v798
  %800 = vmatmul.bf16.gmra.mxu0 %v444
  %v801 = vpop.f32.mrf.mxu0
  %v802 = vadd.f32 %v743, %v801
  %v803 = vpop.f32.mrf.mxu0
  %v804 = vadd.f32 %v745, %v803
  %805 = vmatmul.bf16.gmra.mxu0 %v447
  %v806 = vpop.f32.mrf.mxu0
  %v807 = vadd.f32 %v748, %v806
  %v808 = vpop.f32.mrf.mxu0
  %v809 = vadd.f32 %v750, %v808
  %810 = vmatmul.bf16.gmra.mxu0 %v450
  %v811 = vpop.f32.mrf.mxu0
  %v812 = vadd.f32 %v753, %v811
  %v813 = vpop.f32.mrf.mxu0
  %v814 = vadd.f32 %v755, %v813
  %815 = vdwg.mxu0
  %v816 = vxor.u32 %v531, 2147483648
  %v817 = vxor.u32 %v649, 2147483648
  %v818 = vxor.u32 %v767, 2147483648
  %v819 = vxor.u32 %v533, 2147483648
  %v820 = vxor.u32 %v651, 2147483648
  %v821 = vxor.u32 %v769, 2147483648
  %v822 = vxor.u32 %v536, 2147483648
  %v823 = vxor.u32 %v654, 2147483648
  %v824 = vxor.u32 %v772, 2147483648
  %v825 = vxor.u32 %v538, 2147483648
  %v826 = vxor.u32 %v656, 2147483648
  %v827 = vxor.u32 %v774, 2147483648
  %v828 = vxor.u32 %v541, 2147483648
  %v829 = vxor.u32 %v659, 2147483648
  %v830 = vxor.u32 %v777, 2147483648
  %v831 = vxor.u32 %v543, 2147483648
  %v832 = vxor.u32 %v661, 2147483648
  %v833 = vxor.u32 %v779, 2147483648
  %v834 = vxor.u32 %v546, 2147483648
  %v835 = vxor.u32 %v664, 2147483648
  %v836 = vxor.u32 %v782, 2147483648
  %v837 = vxor.u32 %v548, 2147483648
  %v838 = vxor.u32 %v666, 2147483648
  %v839 = vxor.u32 %v784, 2147483648
  %v840 = vxor.u32 %v551, 2147483648
  %v841 = vxor.u32 %v669, 2147483648
  %v842 = vxor.u32 %v787, 2147483648
  %v843 = vxor.u32 %v553, 2147483648
  %v844 = vxor.u32 %v671, 2147483648
  %v845 = vxor.u32 %v789, 2147483648
  %v846 = vxor.u32 %v556, 2147483648
  %v847 = vxor.u32 %v674, 2147483648
  %v848 = vxor.u32 %v792, 2147483648
  %v849 = vxor.u32 %v558, 2147483648
  %v850 = vxor.u32 %v676, 2147483648
  %v851 = vxor.u32 %v794, 2147483648
  %v852 = vxor.u32 %v561, 2147483648
  %v853 = vxor.u32 %v679, 2147483648
  %v854 = vxor.u32 %v797, 2147483648
  %v855 = vxor.u32 %v563, 2147483648
  %v856 = vxor.u32 %v681, 2147483648
  %v857 = vxor.u32 %v799, 2147483648
  %v858 = vxor.u32 %v566, 2147483648
  %v859 = vxor.u32 %v684, 2147483648
  %v860 = vxor.u32 %v802, 2147483648
  %v861 = vxor.u32 %v568, 2147483648
  %v862 = vxor.u32 %v686, 2147483648
  %v863 = vxor.u32 %v804, 2147483648
  %v864 = vxor.u32 %v571, 2147483648
  %v865 = vxor.u32 %v689, 2147483648
  %v866 = vxor.u32 %v807, 2147483648
  %v867 = vxor.u32 %v573, 2147483648
  %v868 = vxor.u32 %v691, 2147483648
  %v869 = vxor.u32 %v809, 2147483648
  %v870 = vxor.u32 %v576, 2147483648
  %v871 = vxor.u32 %v694, 2147483648
  %v872 = vxor.u32 %v812, 2147483648
  %v873 = vxor.u32 %v578, 2147483648
  %v874 = vxor.u32 %v696, 2147483648
  %v875 = vxor.u32 %v814, 2147483648
  %v876 = vmul.f32 %v816, 1.442695
  %v877 = vpow.pop %v876
  %v878 = vmul.f32 %v817, 1.442695
  %v879 = vpow.pop %v878
  %v880 = vmul.f32 %v818, 1.442695
  %v881 = vpow.pop %v880
  %v882 = vmul.f32 %v819, 1.442695
  %v883 = vpow.pop %v882
  %v884 = vmul.f32 %v820, 1.442695
  %v885 = vpow.pop %v884
  %v886 = vmul.f32 %v821, 1.442695
  %v887 = vpow.pop %v886
  %v888 = vmul.f32 %v822, 1.442695
  %v889 = vpow.pop %v888
  %v890 = vmul.f32 %v823, 1.442695
  %v891 = vpow.pop %v890
  %v892 = vmul.f32 %v824, 1.442695
  %v893 = vpow.pop %v892
  %v894 = vmul.f32 %v825, 1.442695
  %v895 = vpow.pop %v894
  %v896 = vmul.f32 %v826, 1.442695
  %v897 = vpow.pop %v896
  %v898 = vmul.f32 %v827, 1.442695
  %v899 = vpow.pop %v898
  %v900 = vmul.f32 %v828, 1.442695
  %v901 = vpow.pop %v900
  %v902 = vmul.f32 %v829, 1.442695
  %v903 = vpow.pop %v902
  %v904 = vmul.f32 %v830, 1.442695
  %v905 = vpow.pop %v904
  %v906 = vmul.f32 %v831, 1.442695
  %v907 = vpow.pop %v906
  %v908 = vmul.f32 %v832, 1.442695
  %v909 = vpow.pop %v908
  %v910 = vmul.f32 %v833, 1.442695
  %v911 = vpow.pop %v910
  %v912 = vmul.f32 %v834, 1.442695
  %v913 = vpow.pop %v912
  %v914 = vmul.f32 %v835, 1.442695
  %v915 = vpow.pop %v914
  %v916 = vmul.f32 %v836, 1.442695
  %v917 = vpow.pop %v916
  %v918 = vmul.f32 %v837, 1.442695
  %v919 = vpow.pop %v918
  %v920 = vmul.f32 %v838, 1.442695
  %v921 = vpow.pop %v920
  %v922 = vmul.f32 %v839, 1.442695
  %v923 = vpow.pop %v922
  %v924 = vmul.f32 %v840, 1.442695
  %v925 = vpow.pop %v924
  %v926 = vmul.f32 %v841, 1.442695
  %v927 = vpow.pop %v926
  %v928 = vmul.f32 %v842, 1.442695
  %v929 = vpow.pop %v928
  %v930 = vmul.f32 %v843, 1.442695
  %v931 = vpow.pop %v930
  %v932 = vmul.f32 %v844, 1.442695
  %v933 = vpow.pop %v932
  %v934 = vmul.f32 %v845, 1.442695
  %v935 = vpow.pop %v934
  %v936 = vmul.f32 %v846, 1.442695
  %v937 = vpow.pop %v936
  %v938 = vmul.f32 %v847, 1.442695
  %v939 = vpow.pop %v938
  %v940 = vmul.f32 %v848, 1.442695
  %v941 = vpow.pop %v940
  %v942 = vmul.f32 %v849, 1.442695
  %v943 = vpow.pop %v942
  %v944 = vmul.f32 %v850, 1.442695
  %v945 = vpow.pop %v944
  %v946 = vmul.f32 %v851, 1.442695
  %v947 = vpow.pop %v946
  %v948 = vmul.f32 %v852, 1.442695
  %v949 = vpow.pop %v948
  %v950 = vmul.f32 %v853, 1.442695
  %v951 = vpow.pop %v950
  %v952 = vmul.f32 %v854, 1.442695
  %v953 = vpow.pop %v952
  %v954 = vmul.f32 %v855, 1.442695
  %v955 = vpow.pop %v954
  %v956 = vmul.f32 %v856, 1.442695
  %v957 = vpow.pop %v956
  %v958 = vmul.f32 %v857, 1.442695
  %v959 = vpow.pop %v958
  %v960 = vmul.f32 %v858, 1.442695
  %v961 = vpow.pop %v960
  %v962 = vmul.f32 %v859, 1.442695
  %v963 = vpow.pop %v962
  %v964 = vmul.f32 %v860, 1.442695
  %v965 = vpow.pop %v964
  %v966 = vmul.f32 %v861, 1.442695
  %v967 = vpow.pop %v966
  %v968 = vmul.f32 %v862, 1.442695
  %v969 = vpow.pop %v968
  %v970 = vmul.f32 %v863, 1.442695
  %v971 = vpow.pop %v970
  %v972 = vmul.f32 %v864, 1.442695
  %v973 = vpow.pop %v972
  %v974 = vmul.f32 %v865, 1.442695
  %v975 = vpow.pop %v974
  %v976 = vmul.f32 %v866, 1.442695
  %v977 = vpow.pop %v976
  %v978 = vmul.f32 %v867, 1.442695
  %v979 = vpow.pop %v978
  %v980 = vmul.f32 %v868, 1.442695
  %v981 = vpow.pop %v980
  %v982 = vmul.f32 %v869, 1.442695
  %v983 = vpow.pop %v982
  %v984 = vmul.f32 %v870, 1.442695
  %v985 = vpow.pop %v984
  %v986 = vmul.f32 %v871, 1.442695
  %v987 = vpow.pop %v986
  %v988 = vmul.f32 %v872, 1.442695
  %v989 = vpow.pop %v988
  %v990 = vmul.f32 %v873, 1.442695
  %v991 = vpow.pop %v990
  %v992 = vmul.f32 %v874, 1.442695
  %v993 = vpow.pop %v992
  %v994 = vmul.f32 %v875, 1.442695
  %v995 = vpow.pop %v994
  %v996 = vadd.f32 %v877, 1.0
  %v997 = vadd.f32 %v879, 1.0
  %v998 = vadd.f32 %v881, 1.0
  %v999 = vadd.f32 %v883, 1.0
  %v1000 = vadd.f32 %v885, 1.0
  %v1001 = vadd.f32 %v887, 1.0
  %v1002 = vadd.f32 %v889, 1.0
  %v1003 = vadd.f32 %v891, 1.0
  %v1004 = vadd.f32 %v893, 1.0
  %v1005 = vadd.f32 %v895, 1.0
  %v1006 = vadd.f32 %v897, 1.0
  %v1007 = vadd.f32 %v899, 1.0
  %v1008 = vadd.f32 %v901, 1.0
  %v1009 = vadd.f32 %v903, 1.0
  %v1010 = vadd.f32 %v905, 1.0
  %v1011 = vadd.f32 %v907, 1.0
  %v1012 = vadd.f32 %v909, 1.0
  %v1013 = vadd.f32 %v911, 1.0
  %v1014 = vadd.f32 %v913, 1.0
  %v1015 = vadd.f32 %v915, 1.0
  %v1016 = vadd.f32 %v917, 1.0
  %v1017 = vadd.f32 %v919, 1.0
  %v1018 = vadd.f32 %v921, 1.0
  %v1019 = vadd.f32 %v923, 1.0
  %v1020 = vadd.f32 %v925, 1.0
  %v1021 = vadd.f32 %v927, 1.0
  %v1022 = vadd.f32 %v929, 1.0
  %v1023 = vadd.f32 %v931, 1.0
  %v1024 = vadd.f32 %v933, 1.0
  %v1025 = vadd.f32 %v935, 1.0
  %v1026 = vadd.f32 %v937, 1.0
  %v1027 = vadd.f32 %v939, 1.0
  %v1028 = vadd.f32 %v941, 1.0
  %v1029 = vadd.f32 %v943, 1.0
  %v1030 = vadd.f32 %v945, 1.0
  %v1031 = vadd.f32 %v947, 1.0
  %v1032 = vadd.f32 %v949, 1.0
  %v1033 = vadd.f32 %v951, 1.0
  %v1034 = vadd.f32 %v953, 1.0
  %v1035 = vadd.f32 %v955, 1.0
  %v1036 = vadd.f32 %v957, 1.0
  %v1037 = vadd.f32 %v959, 1.0
  %v1038 = vadd.f32 %v961, 1.0
  %v1039 = vadd.f32 %v963, 1.0
  %v1040 = vadd.f32 %v965, 1.0
  %v1041 = vadd.f32 %v967, 1.0
  %v1042 = vadd.f32 %v969, 1.0
  %v1043 = vadd.f32 %v971, 1.0
  %v1044 = vadd.f32 %v973, 1.0
  %v1045 = vadd.f32 %v975, 1.0
  %v1046 = vadd.f32 %v977, 1.0
  %v1047 = vadd.f32 %v979, 1.0
  %v1048 = vadd.f32 %v981, 1.0
  %v1049 = vadd.f32 %v983, 1.0
  %v1050 = vadd.f32 %v985, 1.0
  %v1051 = vadd.f32 %v987, 1.0
  %v1052 = vadd.f32 %v989, 1.0
  %v1053 = vadd.f32 %v991, 1.0
  %v1054 = vadd.f32 %v993, 1.0
  %v1055 = vadd.f32 %v995, 1.0
  %v1056 = vrcp.pop %v996
  %v1057 = vmul.f32 %v996, %v1056
  %v1058 = vsub.f32 1.0, %v1057
  %v1059 = vmul.f32 %v1056, %v1058
  %v1060 = vadd.f32 %v1056, %v1059
  %vm1061 = vweird.f32 %v996
  %vm1062 = vweird.f32 %v1056
  %vm1063 = vmor %vm1061, %vm1062
  %v1064 = vsel %vm1063, %v1056, %v1060
  %v1065 = vand.u32 2147483647, %v996
  %vm1066 = vcmp.eq.f32.partialorder %v1065, 8.507059e+37
  %v1067 = vand.u32 %v996, 2147483648
  %v1068 = vor.u32 1.1754944e-38, %v1067
  %v1069 = vsel %vm1066, %v1068, %v1064
  %v1070 = vmul.f32 1.0, %v1069
  %v1071 = vrcp.pop %v997
  %v1072 = vmul.f32 %v997, %v1071
  %v1073 = vsub.f32 1.0, %v1072
  %v1074 = vmul.f32 %v1071, %v1073
  %v1075 = vadd.f32 %v1071, %v1074
  %vm1076 = vweird.f32 %v997
  %vm1077 = vweird.f32 %v1071
  %vm1078 = vmor %vm1076, %vm1077
  %v1079 = vsel %vm1078, %v1071, %v1075
  %v1080 = vand.u32 2147483647, %v997
  %vm1081 = vcmp.eq.f32.partialorder %v1080, 8.507059e+37
  %v1082 = vand.u32 %v997, 2147483648
  %v1083 = vor.u32 1.1754944e-38, %v1082
  %v1084 = vsel %vm1081, %v1083, %v1079
  %v1085 = vmul.f32 1.0, %v1084
  %v1086 = vrcp.pop %v998
  %v1087 = vmul.f32 %v998, %v1086
  %v1088 = vsub.f32 1.0, %v1087
  %v1089 = vmul.f32 %v1086, %v1088
  %v1090 = vadd.f32 %v1086, %v1089
  %vm1091 = vweird.f32 %v998
  %vm1092 = vweird.f32 %v1086
  %vm1093 = vmor %vm1091, %vm1092
  %v1094 = vsel %vm1093, %v1086, %v1090
  %v1095 = vand.u32 2147483647, %v998
  %vm1096 = vcmp.eq.f32.partialorder %v1095, 8.507059e+37
  %v1097 = vand.u32 %v998, 2147483648
  %v1098 = vor.u32 1.1754944e-38, %v1097
  %v1099 = vsel %vm1096, %v1098, %v1094
  %v1100 = vmul.f32 1.0, %v1099
  %v1101 = vrcp.pop %v999
  %v1102 = vmul.f32 %v999, %v1101
  %v1103 = vsub.f32 1.0, %v1102
  %v1104 = vmul.f32 %v1101, %v1103
  %v1105 = vadd.f32 %v1101, %v1104
  %vm1106 = vweird.f32 %v999
  %vm1107 = vweird.f32 %v1101
  %vm1108 = vmor %vm1106, %vm1107
  %v1109 = vsel %vm1108, %v1101, %v1105
  %v1110 = vand.u32 2147483647, %v999
  %vm1111 = vcmp.eq.f32.partialorder %v1110, 8.507059e+37
  %v1112 = vand.u32 %v999, 2147483648
  %v1113 = vor.u32 1.1754944e-38, %v1112
  %v1114 = vsel %vm1111, %v1113, %v1109
  %v1115 = vmul.f32 1.0, %v1114
  %v1116 = vrcp.pop %v1000
  %v1117 = vmul.f32 %v1000, %v1116
  %v1118 = vsub.f32 1.0, %v1117
  %v1119 = vmul.f32 %v1116, %v1118
  %v1120 = vadd.f32 %v1116, %v1119
  %vm1121 = vweird.f32 %v1000
  %vm1122 = vweird.f32 %v1116
  %vm1123 = vmor %vm1121, %vm1122
  %v1124 = vsel %vm1123, %v1116, %v1120
  %v1125 = vand.u32 2147483647, %v1000
  %vm1126 = vcmp.eq.f32.partialorder %v1125, 8.507059e+37
  %v1127 = vand.u32 %v1000, 2147483648
  %v1128 = vor.u32 1.1754944e-38, %v1127
  %v1129 = vsel %vm1126, %v1128, %v1124
  %v1130 = vmul.f32 1.0, %v1129
  %v1131 = vrcp.pop %v1001
  %v1132 = vmul.f32 %v1001, %v1131
  %v1133 = vsub.f32 1.0, %v1132
  %v1134 = vmul.f32 %v1131, %v1133
  %v1135 = vadd.f32 %v1131, %v1134
  %vm1136 = vweird.f32 %v1001
  %vm1137 = vweird.f32 %v1131
  %vm1138 = vmor %vm1136, %vm1137
  %v1139 = vsel %vm1138, %v1131, %v1135
  %v1140 = vand.u32 2147483647, %v1001
  %vm1141 = vcmp.eq.f32.partialorder %v1140, 8.507059e+37
  %v1142 = vand.u32 %v1001, 2147483648
  %v1143 = vor.u32 1.1754944e-38, %v1142
  %v1144 = vsel %vm1141, %v1143, %v1139
  %v1145 = vmul.f32 1.0, %v1144
  %v1146 = vrcp.pop %v1002
  %v1147 = vmul.f32 %v1002, %v1146
  %v1148 = vsub.f32 1.0, %v1147
  %v1149 = vmul.f32 %v1146, %v1148
  %v1150 = vadd.f32 %v1146, %v1149
  %vm1151 = vweird.f32 %v1002
  %vm1152 = vweird.f32 %v1146
  %vm1153 = vmor %vm1151, %vm1152
  %v1154 = vsel %vm1153, %v1146, %v1150
  %v1155 = vand.u32 2147483647, %v1002
  %vm1156 = vcmp.eq.f32.partialorder %v1155, 8.507059e+37
  %v1157 = vand.u32 %v1002, 2147483648
  %v1158 = vor.u32 1.1754944e-38, %v1157
  %v1159 = vsel %vm1156, %v1158, %v1154
  %v1160 = vmul.f32 1.0, %v1159
  %v1161 = vrcp.pop %v1003
  %v1162 = vmul.f32 %v1003, %v1161
  %v1163 = vsub.f32 1.0, %v1162
  %v1164 = vmul.f32 %v1161, %v1163
  %v1165 = vadd.f32 %v1161, %v1164
  %vm1166 = vweird.f32 %v1003
  %vm1167 = vweird.f32 %v1161
  %vm1168 = vmor %vm1166, %vm1167
  %v1169 = vsel %vm1168, %v1161, %v1165
  %v1170 = vand.u32 2147483647, %v1003
  %vm1171 = vcmp.eq.f32.partialorder %v1170, 8.507059e+37
  %v1172 = vand.u32 %v1003, 2147483648
  %v1173 = vor.u32 1.1754944e-38, %v1172
  %v1174 = vsel %vm1171, %v1173, %v1169
  %v1175 = vmul.f32 1.0, %v1174
  %v1176 = vrcp.pop %v1004
  %v1177 = vmul.f32 %v1004, %v1176
  %v1178 = vsub.f32 1.0, %v1177
  %v1179 = vmul.f32 %v1176, %v1178
  %v1180 = vadd.f32 %v1176, %v1179
  %vm1181 = vweird.f32 %v1004
  %vm1182 = vweird.f32 %v1176
  %vm1183 = vmor %vm1181, %vm1182
  %v1184 = vsel %vm1183, %v1176, %v1180
  %v1185 = vand.u32 2147483647, %v1004
  %vm1186 = vcmp.eq.f32.partialorder %v1185, 8.507059e+37
  %v1187 = vand.u32 %v1004, 2147483648
  %v1188 = vor.u32 1.1754944e-38, %v1187
  %v1189 = vsel %vm1186, %v1188, %v1184
  %v1190 = vmul.f32 1.0, %v1189
  %v1191 = vrcp.pop %v1005
  %v1192 = vmul.f32 %v1005, %v1191
  %v1193 = vsub.f32 1.0, %v1192
  %v1194 = vmul.f32 %v1191, %v1193
  %v1195 = vadd.f32 %v1191, %v1194
  %vm1196 = vweird.f32 %v1005
  %vm1197 = vweird.f32 %v1191
  %vm1198 = vmor %vm1196, %vm1197
  %v1199 = vsel %vm1198, %v1191, %v1195
  %v1200 = vand.u32 2147483647, %v1005
  %vm1201 = vcmp.eq.f32.partialorder %v1200, 8.507059e+37
  %v1202 = vand.u32 %v1005, 2147483648
  %v1203 = vor.u32 1.1754944e-38, %v1202
  %v1204 = vsel %vm1201, %v1203, %v1199
  %v1205 = vmul.f32 1.0, %v1204
  %v1206 = vrcp.pop %v1006
  %v1207 = vmul.f32 %v1006, %v1206
  %v1208 = vsub.f32 1.0, %v1207
  %v1209 = vmul.f32 %v1206, %v1208
  %v1210 = vadd.f32 %v1206, %v1209
  %vm1211 = vweird.f32 %v1006
  %vm1212 = vweird.f32 %v1206
  %vm1213 = vmor %vm1211, %vm1212
  %v1214 = vsel %vm1213, %v1206, %v1210
  %v1215 = vand.u32 2147483647, %v1006
  %vm1216 = vcmp.eq.f32.partialorder %v1215, 8.507059e+37
  %v1217 = vand.u32 %v1006, 2147483648
  %v1218 = vor.u32 1.1754944e-38, %v1217
  %v1219 = vsel %vm1216, %v1218, %v1214
  %v1220 = vmul.f32 1.0, %v1219
  %v1221 = vrcp.pop %v1007
  %v1222 = vmul.f32 %v1007, %v1221
  %v1223 = vsub.f32 1.0, %v1222
  %v1224 = vmul.f32 %v1221, %v1223
  %v1225 = vadd.f32 %v1221, %v1224
  %vm1226 = vweird.f32 %v1007
  %vm1227 = vweird.f32 %v1221
  %vm1228 = vmor %vm1226, %vm1227
  %v1229 = vsel %vm1228, %v1221, %v1225
  %v1230 = vand.u32 2147483647, %v1007
  %vm1231 = vcmp.eq.f32.partialorder %v1230, 8.507059e+37
  %v1232 = vand.u32 %v1007, 2147483648
  %v1233 = vor.u32 1.1754944e-38, %v1232
  %v1234 = vsel %vm1231, %v1233, %v1229
  %v1235 = vmul.f32 1.0, %v1234
  %v1236 = vrcp.pop %v1008
  %v1237 = vmul.f32 %v1008, %v1236
  %v1238 = vsub.f32 1.0, %v1237
  %v1239 = vmul.f32 %v1236, %v1238
  %v1240 = vadd.f32 %v1236, %v1239
  %vm1241 = vweird.f32 %v1008
  %vm1242 = vweird.f32 %v1236
  %vm1243 = vmor %vm1241, %vm1242
  %v1244 = vsel %vm1243, %v1236, %v1240
  %v1245 = vand.u32 2147483647, %v1008
  %vm1246 = vcmp.eq.f32.partialorder %v1245, 8.507059e+37
  %v1247 = vand.u32 %v1008, 2147483648
  %v1248 = vor.u32 1.1754944e-38, %v1247
  %v1249 = vsel %vm1246, %v1248, %v1244
  %v1250 = vmul.f32 1.0, %v1249
  %v1251 = vrcp.pop %v1009
  %v1252 = vmul.f32 %v1009, %v1251
  %v1253 = vsub.f32 1.0, %v1252
  %v1254 = vmul.f32 %v1251, %v1253
  %v1255 = vadd.f32 %v1251, %v1254
  %vm1256 = vweird.f32 %v1009
  %vm1257 = vweird.f32 %v1251
  %vm1258 = vmor %vm1256, %vm1257
  %v1259 = vsel %vm1258, %v1251, %v1255
  %v1260 = vand.u32 2147483647, %v1009
  %vm1261 = vcmp.eq.f32.partialorder %v1260, 8.507059e+37
  %v1262 = vand.u32 %v1009, 2147483648
  %v1263 = vor.u32 1.1754944e-38, %v1262
  %v1264 = vsel %vm1261, %v1263, %v1259
  %v1265 = vmul.f32 1.0, %v1264
  %v1266 = vrcp.pop %v1010
  %v1267 = vmul.f32 %v1010, %v1266
  %v1268 = vsub.f32 1.0, %v1267
  %v1269 = vmul.f32 %v1266, %v1268
  %v1270 = vadd.f32 %v1266, %v1269
  %vm1271 = vweird.f32 %v1010
  %vm1272 = vweird.f32 %v1266
  %vm1273 = vmor %vm1271, %vm1272
  %v1274 = vsel %vm1273, %v1266, %v1270
  %v1275 = vand.u32 2147483647, %v1010
  %vm1276 = vcmp.eq.f32.partialorder %v1275, 8.507059e+37
  %v1277 = vand.u32 %v1010, 2147483648
  %v1278 = vor.u32 1.1754944e-38, %v1277
  %v1279 = vsel %vm1276, %v1278, %v1274
  %v1280 = vmul.f32 1.0, %v1279
  %v1281 = vrcp.pop %v1011
  %v1282 = vmul.f32 %v1011, %v1281
  %v1283 = vsub.f32 1.0, %v1282
  %v1284 = vmul.f32 %v1281, %v1283
  %v1285 = vadd.f32 %v1281, %v1284
  %vm1286 = vweird.f32 %v1011
  %vm1287 = vweird.f32 %v1281
  %vm1288 = vmor %vm1286, %vm1287
  %v1289 = vsel %vm1288, %v1281, %v1285
  %v1290 = vand.u32 2147483647, %v1011
  %vm1291 = vcmp.eq.f32.partialorder %v1290, 8.507059e+37
  %v1292 = vand.u32 %v1011, 2147483648
  %v1293 = vor.u32 1.1754944e-38, %v1292
  %v1294 = vsel %vm1291, %v1293, %v1289
  %v1295 = vmul.f32 1.0, %v1294
  %v1296 = vrcp.pop %v1012
  %v1297 = vmul.f32 %v1012, %v1296
  %v1298 = vsub.f32 1.0, %v1297
  %v1299 = vmul.f32 %v1296, %v1298
  %v1300 = vadd.f32 %v1296, %v1299
  %vm1301 = vweird.f32 %v1012
  %vm1302 = vweird.f32 %v1296
  %vm1303 = vmor %vm1301, %vm1302
  %v1304 = vsel %vm1303, %v1296, %v1300
  %v1305 = vand.u32 2147483647, %v1012
  %vm1306 = vcmp.eq.f32.partialorder %v1305, 8.507059e+37
  %v1307 = vand.u32 %v1012, 2147483648
  %v1308 = vor.u32 1.1754944e-38, %v1307
  %v1309 = vsel %vm1306, %v1308, %v1304
  %v1310 = vmul.f32 1.0, %v1309
  %v1311 = vrcp.pop %v1013
  %v1312 = vmul.f32 %v1013, %v1311
  %v1313 = vsub.f32 1.0, %v1312
  %v1314 = vmul.f32 %v1311, %v1313
  %v1315 = vadd.f32 %v1311, %v1314
  %vm1316 = vweird.f32 %v1013
  %vm1317 = vweird.f32 %v1311
  %vm1318 = vmor %vm1316, %vm1317
  %v1319 = vsel %vm1318, %v1311, %v1315
  %v1320 = vand.u32 2147483647, %v1013
  %vm1321 = vcmp.eq.f32.partialorder %v1320, 8.507059e+37
  %v1322 = vand.u32 %v1013, 2147483648
  %v1323 = vor.u32 1.1754944e-38, %v1322
  %v1324 = vsel %vm1321, %v1323, %v1319
  %v1325 = vmul.f32 1.0, %v1324
  %v1326 = vrcp.pop %v1014
  %v1327 = vmul.f32 %v1014, %v1326
  %v1328 = vsub.f32 1.0, %v1327
  %v1329 = vmul.f32 %v1326, %v1328
  %v1330 = vadd.f32 %v1326, %v1329
  %vm1331 = vweird.f32 %v1014
  %vm1332 = vweird.f32 %v1326
  %vm1333 = vmor %vm1331, %vm1332
  %v1334 = vsel %vm1333, %v1326, %v1330
  %v1335 = vand.u32 2147483647, %v1014
  %vm1336 = vcmp.eq.f32.partialorder %v1335, 8.507059e+37
  %v1337 = vand.u32 %v1014, 2147483648
  %v1338 = vor.u32 1.1754944e-38, %v1337
  %v1339 = vsel %vm1336, %v1338, %v1334
  %v1340 = vmul.f32 1.0, %v1339
  %v1341 = vrcp.pop %v1015
  %v1342 = vmul.f32 %v1015, %v1341
  %v1343 = vsub.f32 1.0, %v1342
  %v1344 = vmul.f32 %v1341, %v1343
  %v1345 = vadd.f32 %v1341, %v1344
  %vm1346 = vweird.f32 %v1015
  %vm1347 = vweird.f32 %v1341
  %vm1348 = vmor %vm1346, %vm1347
  %v1349 = vsel %vm1348, %v1341, %v1345
  %v1350 = vand.u32 2147483647, %v1015
  %vm1351 = vcmp.eq.f32.partialorder %v1350, 8.507059e+37
  %v1352 = vand.u32 %v1015, 2147483648
  %v1353 = vor.u32 1.1754944e-38, %v1352
  %v1354 = vsel %vm1351, %v1353, %v1349
  %v1355 = vmul.f32 1.0, %v1354
  %v1356 = vrcp.pop %v1016
  %v1357 = vmul.f32 %v1016, %v1356
  %v1358 = vsub.f32 1.0, %v1357
  %v1359 = vmul.f32 %v1356, %v1358
  %v1360 = vadd.f32 %v1356, %v1359
  %vm1361 = vweird.f32 %v1016
  %vm1362 = vweird.f32 %v1356
  %vm1363 = vmor %vm1361, %vm1362
  %v1364 = vsel %vm1363, %v1356, %v1360
  %v1365 = vand.u32 2147483647, %v1016
  %vm1366 = vcmp.eq.f32.partialorder %v1365, 8.507059e+37
  %v1367 = vand.u32 %v1016, 2147483648
  %v1368 = vor.u32 1.1754944e-38, %v1367
  %v1369 = vsel %vm1366, %v1368, %v1364
  %v1370 = vmul.f32 1.0, %v1369
  %v1371 = vrcp.pop %v1017
  %v1372 = vmul.f32 %v1017, %v1371
  %v1373 = vsub.f32 1.0, %v1372
  %v1374 = vmul.f32 %v1371, %v1373
  %v1375 = vadd.f32 %v1371, %v1374
  %vm1376 = vweird.f32 %v1017
  %vm1377 = vweird.f32 %v1371
  %vm1378 = vmor %vm1376, %vm1377
  %v1379 = vsel %vm1378, %v1371, %v1375
  %v1380 = vand.u32 2147483647, %v1017
  %vm1381 = vcmp.eq.f32.partialorder %v1380, 8.507059e+37
  %v1382 = vand.u32 %v1017, 2147483648
  %v1383 = vor.u32 1.1754944e-38, %v1382
  %v1384 = vsel %vm1381, %v1383, %v1379
  %v1385 = vmul.f32 1.0, %v1384
  %v1386 = vrcp.pop %v1018
  %v1387 = vmul.f32 %v1018, %v1386
  %v1388 = vsub.f32 1.0, %v1387
  %v1389 = vmul.f32 %v1386, %v1388
  %v1390 = vadd.f32 %v1386, %v1389
  %vm1391 = vweird.f32 %v1018
  %vm1392 = vweird.f32 %v1386
  %vm1393 = vmor %vm1391, %vm1392
  %v1394 = vsel %vm1393, %v1386, %v1390
  %v1395 = vand.u32 2147483647, %v1018
  %vm1396 = vcmp.eq.f32.partialorder %v1395, 8.507059e+37
  %v1397 = vand.u32 %v1018, 2147483648
  %v1398 = vor.u32 1.1754944e-38, %v1397
  %v1399 = vsel %vm1396, %v1398, %v1394
  %v1400 = vmul.f32 1.0, %v1399
  %v1401 = vrcp.pop %v1019
  %v1402 = vmul.f32 %v1019, %v1401
  %v1403 = vsub.f32 1.0, %v1402
  %v1404 = vmul.f32 %v1401, %v1403
  %v1405 = vadd.f32 %v1401, %v1404
  %vm1406 = vweird.f32 %v1019
  %vm1407 = vweird.f32 %v1401
  %vm1408 = vmor %vm1406, %vm1407
  %v1409 = vsel %vm1408, %v1401, %v1405
  %v1410 = vand.u32 2147483647, %v1019
  %vm1411 = vcmp.eq.f32.partialorder %v1410, 8.507059e+37
  %v1412 = vand.u32 %v1019, 2147483648
  %v1413 = vor.u32 1.1754944e-38, %v1412
  %v1414 = vsel %vm1411, %v1413, %v1409
  %v1415 = vmul.f32 1.0, %v1414
  %v1416 = vrcp.pop %v1020
  %v1417 = vmul.f32 %v1020, %v1416
  %v1418 = vsub.f32 1.0, %v1417
  %v1419 = vmul.f32 %v1416, %v1418
  %v1420 = vadd.f32 %v1416, %v1419
  %vm1421 = vweird.f32 %v1020
  %vm1422 = vweird.f32 %v1416
  %vm1423 = vmor %vm1421, %vm1422
  %v1424 = vsel %vm1423, %v1416, %v1420
  %v1425 = vand.u32 2147483647, %v1020
  %vm1426 = vcmp.eq.f32.partialorder %v1425, 8.507059e+37
  %v1427 = vand.u32 %v1020, 2147483648
  %v1428 = vor.u32 1.1754944e-38, %v1427
  %v1429 = vsel %vm1426, %v1428, %v1424
  %v1430 = vmul.f32 1.0, %v1429
  %v1431 = vrcp.pop %v1021
  %v1432 = vmul.f32 %v1021, %v1431
  %v1433 = vsub.f32 1.0, %v1432
  %v1434 = vmul.f32 %v1431, %v1433
  %v1435 = vadd.f32 %v1431, %v1434
  %vm1436 = vweird.f32 %v1021
  %vm1437 = vweird.f32 %v1431
  %vm1438 = vmor %vm1436, %vm1437
  %v1439 = vsel %vm1438, %v1431, %v1435
  %v1440 = vand.u32 2147483647, %v1021
  %vm1441 = vcmp.eq.f32.partialorder %v1440, 8.507059e+37
  %v1442 = vand.u32 %v1021, 2147483648
  %v1443 = vor.u32 1.1754944e-38, %v1442
  %v1444 = vsel %vm1441, %v1443, %v1439
  %v1445 = vmul.f32 1.0, %v1444
  %v1446 = vrcp.pop %v1022
  %v1447 = vmul.f32 %v1022, %v1446
  %v1448 = vsub.f32 1.0, %v1447
  %v1449 = vmul.f32 %v1446, %v1448
  %v1450 = vadd.f32 %v1446, %v1449
  %vm1451 = vweird.f32 %v1022
  %vm1452 = vweird.f32 %v1446
  %vm1453 = vmor %vm1451, %vm1452
  %v1454 = vsel %vm1453, %v1446, %v1450
  %v1455 = vand.u32 2147483647, %v1022
  %vm1456 = vcmp.eq.f32.partialorder %v1455, 8.507059e+37
  %v1457 = vand.u32 %v1022, 2147483648
  %v1458 = vor.u32 1.1754944e-38, %v1457
  %v1459 = vsel %vm1456, %v1458, %v1454
  %v1460 = vmul.f32 1.0, %v1459
  %v1461 = vrcp.pop %v1023
  %v1462 = vmul.f32 %v1023, %v1461
  %v1463 = vsub.f32 1.0, %v1462
  %v1464 = vmul.f32 %v1461, %v1463
  %v1465 = vadd.f32 %v1461, %v1464
  %vm1466 = vweird.f32 %v1023
  %vm1467 = vweird.f32 %v1461
  %vm1468 = vmor %vm1466, %vm1467
  %v1469 = vsel %vm1468, %v1461, %v1465
  %v1470 = vand.u32 2147483647, %v1023
  %vm1471 = vcmp.eq.f32.partialorder %v1470, 8.507059e+37
  %v1472 = vand.u32 %v1023, 2147483648
  %v1473 = vor.u32 1.1754944e-38, %v1472
  %v1474 = vsel %vm1471, %v1473, %v1469
  %v1475 = vmul.f32 1.0, %v1474
  %v1476 = vrcp.pop %v1024
  %v1477 = vmul.f32 %v1024, %v1476
  %v1478 = vsub.f32 1.0, %v1477
  %v1479 = vmul.f32 %v1476, %v1478
  %v1480 = vadd.f32 %v1476, %v1479
  %vm1481 = vweird.f32 %v1024
  %vm1482 = vweird.f32 %v1476
  %vm1483 = vmor %vm1481, %vm1482
  %v1484 = vsel %vm1483, %v1476, %v1480
  %v1485 = vand.u32 2147483647, %v1024
  %vm1486 = vcmp.eq.f32.partialorder %v1485, 8.507059e+37
  %v1487 = vand.u32 %v1024, 2147483648
  %v1488 = vor.u32 1.1754944e-38, %v1487
  %v1489 = vsel %vm1486, %v1488, %v1484
  %v1490 = vmul.f32 1.0, %v1489
  %v1491 = vrcp.pop %v1025
  %v1492 = vmul.f32 %v1025, %v1491
  %v1493 = vsub.f32 1.0, %v1492
  %v1494 = vmul.f32 %v1491, %v1493
  %v1495 = vadd.f32 %v1491, %v1494
  %vm1496 = vweird.f32 %v1025
  %vm1497 = vweird.f32 %v1491
  %vm1498 = vmor %vm1496, %vm1497
  %v1499 = vsel %vm1498, %v1491, %v1495
  %v1500 = vand.u32 2147483647, %v1025
  %vm1501 = vcmp.eq.f32.partialorder %v1500, 8.507059e+37
  %v1502 = vand.u32 %v1025, 2147483648
  %v1503 = vor.u32 1.1754944e-38, %v1502
  %v1504 = vsel %vm1501, %v1503, %v1499
  %v1505 = vmul.f32 1.0, %v1504
  %v1506 = vrcp.pop %v1026
  %v1507 = vmul.f32 %v1026, %v1506
  %v1508 = vsub.f32 1.0, %v1507
  %v1509 = vmul.f32 %v1506, %v1508
  %v1510 = vadd.f32 %v1506, %v1509
  %vm1511 = vweird.f32 %v1026
  %vm1512 = vweird.f32 %v1506
  %vm1513 = vmor %vm1511, %vm1512
  %v1514 = vsel %vm1513, %v1506, %v1510
  %v1515 = vand.u32 2147483647, %v1026
  %vm1516 = vcmp.eq.f32.partialorder %v1515, 8.507059e+37
  %v1517 = vand.u32 %v1026, 2147483648
  %v1518 = vor.u32 1.1754944e-38, %v1517
  %v1519 = vsel %vm1516, %v1518, %v1514
  %v1520 = vmul.f32 1.0, %v1519
  %v1521 = vrcp.pop %v1027
  %v1522 = vmul.f32 %v1027, %v1521
  %v1523 = vsub.f32 1.0, %v1522
  %v1524 = vmul.f32 %v1521, %v1523
  %v1525 = vadd.f32 %v1521, %v1524
  %vm1526 = vweird.f32 %v1027
  %vm1527 = vweird.f32 %v1521
  %vm1528 = vmor %vm1526, %vm1527
  %v1529 = vsel %vm1528, %v1521, %v1525
  %v1530 = vand.u32 2147483647, %v1027
  %vm1531 = vcmp.eq.f32.partialorder %v1530, 8.507059e+37
  %v1532 = vand.u32 %v1027, 2147483648
  %v1533 = vor.u32 1.1754944e-38, %v1532
  %v1534 = vsel %vm1531, %v1533, %v1529
  %v1535 = vmul.f32 1.0, %v1534
  %v1536 = vrcp.pop %v1028
  %v1537 = vmul.f32 %v1028, %v1536
  %v1538 = vsub.f32 1.0, %v1537
  %v1539 = vmul.f32 %v1536, %v1538
  %v1540 = vadd.f32 %v1536, %v1539
  %vm1541 = vweird.f32 %v1028
  %vm1542 = vweird.f32 %v1536
  %vm1543 = vmor %vm1541, %vm1542
  %v1544 = vsel %vm1543, %v1536, %v1540
  %v1545 = vand.u32 2147483647, %v1028
  %vm1546 = vcmp.eq.f32.partialorder %v1545, 8.507059e+37
  %v1547 = vand.u32 %v1028, 2147483648
  %v1548 = vor.u32 1.1754944e-38, %v1547
  %v1549 = vsel %vm1546, %v1548, %v1544
  %v1550 = vmul.f32 1.0, %v1549
  %v1551 = vrcp.pop %v1029
  %v1552 = vmul.f32 %v1029, %v1551
  %v1553 = vsub.f32 1.0, %v1552
  %v1554 = vmul.f32 %v1551, %v1553
  %v1555 = vadd.f32 %v1551, %v1554
  %vm1556 = vweird.f32 %v1029
  %vm1557 = vweird.f32 %v1551
  %vm1558 = vmor %vm1556, %vm1557
  %v1559 = vsel %vm1558, %v1551, %v1555
  %v1560 = vand.u32 2147483647, %v1029
  %vm1561 = vcmp.eq.f32.partialorder %v1560, 8.507059e+37
  %v1562 = vand.u32 %v1029, 2147483648
  %v1563 = vor.u32 1.1754944e-38, %v1562
  %v1564 = vsel %vm1561, %v1563, %v1559
  %v1565 = vmul.f32 1.0, %v1564
  %v1566 = vrcp.pop %v1030
  %v1567 = vmul.f32 %v1030, %v1566
  %v1568 = vsub.f32 1.0, %v1567
  %v1569 = vmul.f32 %v1566, %v1568
  %v1570 = vadd.f32 %v1566, %v1569
  %vm1571 = vweird.f32 %v1030
  %vm1572 = vweird.f32 %v1566
  %vm1573 = vmor %vm1571, %vm1572
  %v1574 = vsel %vm1573, %v1566, %v1570
  %v1575 = vand.u32 2147483647, %v1030
  %vm1576 = vcmp.eq.f32.partialorder %v1575, 8.507059e+37
  %v1577 = vand.u32 %v1030, 2147483648
  %v1578 = vor.u32 1.1754944e-38, %v1577
  %v1579 = vsel %vm1576, %v1578, %v1574
  %v1580 = vmul.f32 1.0, %v1579
  %v1581 = vrcp.pop %v1031
  %v1582 = vmul.f32 %v1031, %v1581
  %v1583 = vsub.f32 1.0, %v1582
  %v1584 = vmul.f32 %v1581, %v1583
  %v1585 = vadd.f32 %v1581, %v1584
  %vm1586 = vweird.f32 %v1031
  %vm1587 = vweird.f32 %v1581
  %vm1588 = vmor %vm1586, %vm1587
  %v1589 = vsel %vm1588, %v1581, %v1585
  %v1590 = vand.u32 2147483647, %v1031
  %vm1591 = vcmp.eq.f32.partialorder %v1590, 8.507059e+37
  %v1592 = vand.u32 %v1031, 2147483648
  %v1593 = vor.u32 1.1754944e-38, %v1592
  %v1594 = vsel %vm1591, %v1593, %v1589
  %v1595 = vmul.f32 1.0, %v1594
  %v1596 = vrcp.pop %v1032
  %v1597 = vmul.f32 %v1032, %v1596
  %v1598 = vsub.f32 1.0, %v1597
  %v1599 = vmul.f32 %v1596, %v1598
  %v1600 = vadd.f32 %v1596, %v1599
  %vm1601 = vweird.f32 %v1032
  %vm1602 = vweird.f32 %v1596
  %vm1603 = vmor %vm1601, %vm1602
  %v1604 = vsel %vm1603, %v1596, %v1600
  %v1605 = vand.u32 2147483647, %v1032
  %vm1606 = vcmp.eq.f32.partialorder %v1605, 8.507059e+37
  %v1607 = vand.u32 %v1032, 2147483648
  %v1608 = vor.u32 1.1754944e-38, %v1607
  %v1609 = vsel %vm1606, %v1608, %v1604
  %v1610 = vmul.f32 1.0, %v1609
  %v1611 = vrcp.pop %v1033
  %v1612 = vmul.f32 %v1033, %v1611
  %v1613 = vsub.f32 1.0, %v1612
  %v1614 = vmul.f32 %v1611, %v1613
  %v1615 = vadd.f32 %v1611, %v1614
  %vm1616 = vweird.f32 %v1033
  %vm1617 = vweird.f32 %v1611
  %vm1618 = vmor %vm1616, %vm1617
  %v1619 = vsel %vm1618, %v1611, %v1615
  %v1620 = vand.u32 2147483647, %v1033
  %vm1621 = vcmp.eq.f32.partialorder %v1620, 8.507059e+37
  %v1622 = vand.u32 %v1033, 2147483648
  %v1623 = vor.u32 1.1754944e-38, %v1622
  %v1624 = vsel %vm1621, %v1623, %v1619
  %v1625 = vmul.f32 1.0, %v1624
  %v1626 = vrcp.pop %v1034
  %v1627 = vmul.f32 %v1034, %v1626
  %v1628 = vsub.f32 1.0, %v1627
  %v1629 = vmul.f32 %v1626, %v1628
  %v1630 = vadd.f32 %v1626, %v1629
  %vm1631 = vweird.f32 %v1034
  %vm1632 = vweird.f32 %v1626
  %vm1633 = vmor %vm1631, %vm1632
  %v1634 = vsel %vm1633, %v1626, %v1630
  %v1635 = vand.u32 2147483647, %v1034
  %vm1636 = vcmp.eq.f32.partialorder %v1635, 8.507059e+37
  %v1637 = vand.u32 %v1034, 2147483648
  %v1638 = vor.u32 1.1754944e-38, %v1637
  %v1639 = vsel %vm1636, %v1638, %v1634
  %v1640 = vmul.f32 1.0, %v1639
  %v1641 = vrcp.pop %v1035
  %v1642 = vmul.f32 %v1035, %v1641
  %v1643 = vsub.f32 1.0, %v1642
  %v1644 = vmul.f32 %v1641, %v1643
  %v1645 = vadd.f32 %v1641, %v1644
  %vm1646 = vweird.f32 %v1035
  %vm1647 = vweird.f32 %v1641
  %vm1648 = vmor %vm1646, %vm1647
  %v1649 = vsel %vm1648, %v1641, %v1645
  %v1650 = vand.u32 2147483647, %v1035
  %vm1651 = vcmp.eq.f32.partialorder %v1650, 8.507059e+37
  %v1652 = vand.u32 %v1035, 2147483648
  %v1653 = vor.u32 1.1754944e-38, %v1652
  %v1654 = vsel %vm1651, %v1653, %v1649
  %v1655 = vmul.f32 1.0, %v1654
  %v1656 = vrcp.pop %v1036
  %v1657 = vmul.f32 %v1036, %v1656
  %v1658 = vsub.f32 1.0, %v1657
  %v1659 = vmul.f32 %v1656, %v1658
  %v1660 = vadd.f32 %v1656, %v1659
  %vm1661 = vweird.f32 %v1036
  %vm1662 = vweird.f32 %v1656
  %vm1663 = vmor %vm1661, %vm1662
  %v1664 = vsel %vm1663, %v1656, %v1660
  %v1665 = vand.u32 2147483647, %v1036
  %vm1666 = vcmp.eq.f32.partialorder %v1665, 8.507059e+37
  %v1667 = vand.u32 %v1036, 2147483648
  %v1668 = vor.u32 1.1754944e-38, %v1667
  %v1669 = vsel %vm1666, %v1668, %v1664
  %v1670 = vmul.f32 1.0, %v1669
  %v1671 = vrcp.pop %v1037
  %v1672 = vmul.f32 %v1037, %v1671
  %v1673 = vsub.f32 1.0, %v1672
  %v1674 = vmul.f32 %v1671, %v1673
  %v1675 = vadd.f32 %v1671, %v1674
  %vm1676 = vweird.f32 %v1037
  %vm1677 = vweird.f32 %v1671
  %vm1678 = vmor %vm1676, %vm1677
  %v1679 = vsel %vm1678, %v1671, %v1675
  %v1680 = vand.u32 2147483647, %v1037
  %vm1681 = vcmp.eq.f32.partialorder %v1680, 8.507059e+37
  %v1682 = vand.u32 %v1037, 2147483648
  %v1683 = vor.u32 1.1754944e-38, %v1682
  %v1684 = vsel %vm1681, %v1683, %v1679
  %v1685 = vmul.f32 1.0, %v1684
  %v1686 = vrcp.pop %v1038
  %v1687 = vmul.f32 %v1038, %v1686
  %v1688 = vsub.f32 1.0, %v1687
  %v1689 = vmul.f32 %v1686, %v1688
  %v1690 = vadd.f32 %v1686, %v1689
  %vm1691 = vweird.f32 %v1038
  %vm1692 = vweird.f32 %v1686
  %vm1693 = vmor %vm1691, %vm1692
  %v1694 = vsel %vm1693, %v1686, %v1690
  %v1695 = vand.u32 2147483647, %v1038
  %vm1696 = vcmp.eq.f32.partialorder %v1695, 8.507059e+37
  %v1697 = vand.u32 %v1038, 2147483648
  %v1698 = vor.u32 1.1754944e-38, %v1697
  %v1699 = vsel %vm1696, %v1698, %v1694
  %v1700 = vmul.f32 1.0, %v1699
  %v1701 = vrcp.pop %v1039
  %v1702 = vmul.f32 %v1039, %v1701
  %v1703 = vsub.f32 1.0, %v1702
  %v1704 = vmul.f32 %v1701, %v1703
  %v1705 = vadd.f32 %v1701, %v1704
  %vm1706 = vweird.f32 %v1039
  %vm1707 = vweird.f32 %v1701
  %vm1708 = vmor %vm1706, %vm1707
  %v1709 = vsel %vm1708, %v1701, %v1705
  %v1710 = vand.u32 2147483647, %v1039
  %vm1711 = vcmp.eq.f32.partialorder %v1710, 8.507059e+37
  %v1712 = vand.u32 %v1039, 2147483648
  %v1713 = vor.u32 1.1754944e-38, %v1712
  %v1714 = vsel %vm1711, %v1713, %v1709
  %v1715 = vmul.f32 1.0, %v1714
  %v1716 = vrcp.pop %v1040
  %v1717 = vmul.f32 %v1040, %v1716
  %v1718 = vsub.f32 1.0, %v1717
  %v1719 = vmul.f32 %v1716, %v1718
  %v1720 = vadd.f32 %v1716, %v1719
  %vm1721 = vweird.f32 %v1040
  %vm1722 = vweird.f32 %v1716
  %vm1723 = vmor %vm1721, %vm1722
  %v1724 = vsel %vm1723, %v1716, %v1720
  %v1725 = vand.u32 2147483647, %v1040
  %vm1726 = vcmp.eq.f32.partialorder %v1725, 8.507059e+37
  %v1727 = vand.u32 %v1040, 2147483648
  %v1728 = vor.u32 1.1754944e-38, %v1727
  %v1729 = vsel %vm1726, %v1728, %v1724
  %v1730 = vmul.f32 1.0, %v1729
  %v1731 = vrcp.pop %v1041
  %v1732 = vmul.f32 %v1041, %v1731
  %v1733 = vsub.f32 1.0, %v1732
  %v1734 = vmul.f32 %v1731, %v1733
  %v1735 = vadd.f32 %v1731, %v1734
  %vm1736 = vweird.f32 %v1041
  %vm1737 = vweird.f32 %v1731
  %vm1738 = vmor %vm1736, %vm1737
  %v1739 = vsel %vm1738, %v1731, %v1735
  %v1740 = vand.u32 2147483647, %v1041
  %vm1741 = vcmp.eq.f32.partialorder %v1740, 8.507059e+37
  %v1742 = vand.u32 %v1041, 2147483648
  %v1743 = vor.u32 1.1754944e-38, %v1742
  %v1744 = vsel %vm1741, %v1743, %v1739
  %v1745 = vmul.f32 1.0, %v1744
  %v1746 = vrcp.pop %v1042
  %v1747 = vmul.f32 %v1042, %v1746
  %v1748 = vsub.f32 1.0, %v1747
  %v1749 = vmul.f32 %v1746, %v1748
  %v1750 = vadd.f32 %v1746, %v1749
  %vm1751 = vweird.f32 %v1042
  %vm1752 = vweird.f32 %v1746
  %vm1753 = vmor %vm1751, %vm1752
  %v1754 = vsel %vm1753, %v1746, %v1750
  %v1755 = vand.u32 2147483647, %v1042
  %vm1756 = vcmp.eq.f32.partialorder %v1755, 8.507059e+37
  %v1757 = vand.u32 %v1042, 2147483648
  %v1758 = vor.u32 1.1754944e-38, %v1757
  %v1759 = vsel %vm1756, %v1758, %v1754
  %v1760 = vmul.f32 1.0, %v1759
  %v1761 = vrcp.pop %v1043
  %v1762 = vmul.f32 %v1043, %v1761
  %v1763 = vsub.f32 1.0, %v1762
  %v1764 = vmul.f32 %v1761, %v1763
  %v1765 = vadd.f32 %v1761, %v1764
  %vm1766 = vweird.f32 %v1043
  %vm1767 = vweird.f32 %v1761
  %vm1768 = vmor %vm1766, %vm1767
  %v1769 = vsel %vm1768, %v1761, %v1765
  %v1770 = vand.u32 2147483647, %v1043
  %vm1771 = vcmp.eq.f32.partialorder %v1770, 8.507059e+37
  %v1772 = vand.u32 %v1043, 2147483648
  %v1773 = vor.u32 1.1754944e-38, %v1772
  %v1774 = vsel %vm1771, %v1773, %v1769
  %v1775 = vmul.f32 1.0, %v1774
  %v1776 = vrcp.pop %v1044
  %v1777 = vmul.f32 %v1044, %v1776
  %v1778 = vsub.f32 1.0, %v1777
  %v1779 = vmul.f32 %v1776, %v1778
  %v1780 = vadd.f32 %v1776, %v1779
  %vm1781 = vweird.f32 %v1044
  %vm1782 = vweird.f32 %v1776
  %vm1783 = vmor %vm1781, %vm1782
  %v1784 = vsel %vm1783, %v1776, %v1780
  %v1785 = vand.u32 2147483647, %v1044
  %vm1786 = vcmp.eq.f32.partialorder %v1785, 8.507059e+37
  %v1787 = vand.u32 %v1044, 2147483648
  %v1788 = vor.u32 1.1754944e-38, %v1787
  %v1789 = vsel %vm1786, %v1788, %v1784
  %v1790 = vmul.f32 1.0, %v1789
  %v1791 = vrcp.pop %v1045
  %v1792 = vmul.f32 %v1045, %v1791
  %v1793 = vsub.f32 1.0, %v1792
  %v1794 = vmul.f32 %v1791, %v1793
  %v1795 = vadd.f32 %v1791, %v1794
  %vm1796 = vweird.f32 %v1045
  %vm1797 = vweird.f32 %v1791
  %vm1798 = vmor %vm1796, %vm1797
  %v1799 = vsel %vm1798, %v1791, %v1795
  %v1800 = vand.u32 2147483647, %v1045
  %vm1801 = vcmp.eq.f32.partialorder %v1800, 8.507059e+37
  %v1802 = vand.u32 %v1045, 2147483648
  %v1803 = vor.u32 1.1754944e-38, %v1802
  %v1804 = vsel %vm1801, %v1803, %v1799
  %v1805 = vmul.f32 1.0, %v1804
  %v1806 = vrcp.pop %v1046
  %v1807 = vmul.f32 %v1046, %v1806
  %v1808 = vsub.f32 1.0, %v1807
  %v1809 = vmul.f32 %v1806, %v1808
  %v1810 = vadd.f32 %v1806, %v1809
  %vm1811 = vweird.f32 %v1046
  %vm1812 = vweird.f32 %v1806
  %vm1813 = vmor %vm1811, %vm1812
  %v1814 = vsel %vm1813, %v1806, %v1810
  %v1815 = vand.u32 2147483647, %v1046
  %vm1816 = vcmp.eq.f32.partialorder %v1815, 8.507059e+37
  %v1817 = vand.u32 %v1046, 2147483648
  %v1818 = vor.u32 1.1754944e-38, %v1817
  %v1819 = vsel %vm1816, %v1818, %v1814
  %v1820 = vmul.f32 1.0, %v1819
  %v1821 = vrcp.pop %v1047
  %v1822 = vmul.f32 %v1047, %v1821
  %v1823 = vsub.f32 1.0, %v1822
  %v1824 = vmul.f32 %v1821, %v1823
  %v1825 = vadd.f32 %v1821, %v1824
  %vm1826 = vweird.f32 %v1047
  %vm1827 = vweird.f32 %v1821
  %vm1828 = vmor %vm1826, %vm1827
  %v1829 = vsel %vm1828, %v1821, %v1825
  %v1830 = vand.u32 2147483647, %v1047
  %vm1831 = vcmp.eq.f32.partialorder %v1830, 8.507059e+37
  %v1832 = vand.u32 %v1047, 2147483648
  %v1833 = vor.u32 1.1754944e-38, %v1832
  %v1834 = vsel %vm1831, %v1833, %v1829
  %v1835 = vmul.f32 1.0, %v1834
  %v1836 = vrcp.pop %v1048
  %v1837 = vmul.f32 %v1048, %v1836
  %v1838 = vsub.f32 1.0, %v1837
  %v1839 = vmul.f32 %v1836, %v1838
  %v1840 = vadd.f32 %v1836, %v1839
  %vm1841 = vweird.f32 %v1048
  %vm1842 = vweird.f32 %v1836
  %vm1843 = vmor %vm1841, %vm1842
  %v1844 = vsel %vm1843, %v1836, %v1840
  %v1845 = vand.u32 2147483647, %v1048
  %vm1846 = vcmp.eq.f32.partialorder %v1845, 8.507059e+37
  %v1847 = vand.u32 %v1048, 2147483648
  %v1848 = vor.u32 1.1754944e-38, %v1847
  %v1849 = vsel %vm1846, %v1848, %v1844
  %v1850 = vmul.f32 1.0, %v1849
  %v1851 = vrcp.pop %v1049
  %v1852 = vmul.f32 %v1049, %v1851
  %v1853 = vsub.f32 1.0, %v1852
  %v1854 = vmul.f32 %v1851, %v1853
  %v1855 = vadd.f32 %v1851, %v1854
  %vm1856 = vweird.f32 %v1049
  %vm1857 = vweird.f32 %v1851
  %vm1858 = vmor %vm1856, %vm1857
  %v1859 = vsel %vm1858, %v1851, %v1855
  %v1860 = vand.u32 2147483647, %v1049
  %vm1861 = vcmp.eq.f32.partialorder %v1860, 8.507059e+37
  %v1862 = vand.u32 %v1049, 2147483648
  %v1863 = vor.u32 1.1754944e-38, %v1862
  %v1864 = vsel %vm1861, %v1863, %v1859
  %v1865 = vmul.f32 1.0, %v1864
  %v1866 = vrcp.pop %v1050
  %v1867 = vmul.f32 %v1050, %v1866
  %v1868 = vsub.f32 1.0, %v1867
  %v1869 = vmul.f32 %v1866, %v1868
  %v1870 = vadd.f32 %v1866, %v1869
  %vm1871 = vweird.f32 %v1050
  %vm1872 = vweird.f32 %v1866
  %vm1873 = vmor %vm1871, %vm1872
  %v1874 = vsel %vm1873, %v1866, %v1870
  %v1875 = vand.u32 2147483647, %v1050
  %vm1876 = vcmp.eq.f32.partialorder %v1875, 8.507059e+37
  %v1877 = vand.u32 %v1050, 2147483648
  %v1878 = vor.u32 1.1754944e-38, %v1877
  %v1879 = vsel %vm1876, %v1878, %v1874
  %v1880 = vmul.f32 1.0, %v1879
  %v1881 = vrcp.pop %v1051
  %v1882 = vmul.f32 %v1051, %v1881
  %v1883 = vsub.f32 1.0, %v1882
  %v1884 = vmul.f32 %v1881, %v1883
  %v1885 = vadd.f32 %v1881, %v1884
  %vm1886 = vweird.f32 %v1051
  %vm1887 = vweird.f32 %v1881
  %vm1888 = vmor %vm1886, %vm1887
  %v1889 = vsel %vm1888, %v1881, %v1885
  %v1890 = vand.u32 2147483647, %v1051
  %vm1891 = vcmp.eq.f32.partialorder %v1890, 8.507059e+37
  %v1892 = vand.u32 %v1051, 2147483648
  %v1893 = vor.u32 1.1754944e-38, %v1892
  %v1894 = vsel %vm1891, %v1893, %v1889
  %v1895 = vmul.f32 1.0, %v1894
  %v1896 = vrcp.pop %v1052
  %v1897 = vmul.f32 %v1052, %v1896
  %v1898 = vsub.f32 1.0, %v1897
  %v1899 = vmul.f32 %v1896, %v1898
  %v1900 = vadd.f32 %v1896, %v1899
  %vm1901 = vweird.f32 %v1052
  %vm1902 = vweird.f32 %v1896
  %vm1903 = vmor %vm1901, %vm1902
  %v1904 = vsel %vm1903, %v1896, %v1900
  %v1905 = vand.u32 2147483647, %v1052
  %vm1906 = vcmp.eq.f32.partialorder %v1905, 8.507059e+37
  %v1907 = vand.u32 %v1052, 2147483648
  %v1908 = vor.u32 1.1754944e-38, %v1907
  %v1909 = vsel %vm1906, %v1908, %v1904
  %v1910 = vmul.f32 1.0, %v1909
  %v1911 = vrcp.pop %v1053
  %v1912 = vmul.f32 %v1053, %v1911
  %v1913 = vsub.f32 1.0, %v1912
  %v1914 = vmul.f32 %v1911, %v1913
  %v1915 = vadd.f32 %v1911, %v1914
  %vm1916 = vweird.f32 %v1053
  %vm1917 = vweird.f32 %v1911
  %vm1918 = vmor %vm1916, %vm1917
  %v1919 = vsel %vm1918, %v1911, %v1915
  %v1920 = vand.u32 2147483647, %v1053
  %vm1921 = vcmp.eq.f32.partialorder %v1920, 8.507059e+37
  %v1922 = vand.u32 %v1053, 2147483648
  %v1923 = vor.u32 1.1754944e-38, %v1922
  %v1924 = vsel %vm1921, %v1923, %v1919
  %v1925 = vmul.f32 1.0, %v1924
  %v1926 = vrcp.pop %v1054
  %v1927 = vmul.f32 %v1054, %v1926
  %v1928 = vsub.f32 1.0, %v1927
  %v1929 = vmul.f32 %v1926, %v1928
  %v1930 = vadd.f32 %v1926, %v1929
  %vm1931 = vweird.f32 %v1054
  %vm1932 = vweird.f32 %v1926
  %vm1933 = vmor %vm1931, %vm1932
  %v1934 = vsel %vm1933, %v1926, %v1930
  %v1935 = vand.u32 2147483647, %v1054
  %vm1936 = vcmp.eq.f32.partialorder %v1935, 8.507059e+37
  %v1937 = vand.u32 %v1054, 2147483648
  %v1938 = vor.u32 1.1754944e-38, %v1937
  %v1939 = vsel %vm1936, %v1938, %v1934
  %v1940 = vmul.f32 1.0, %v1939
  %v1941 = vrcp.pop %v1055
  %v1942 = vmul.f32 %v1055, %v1941
  %v1943 = vsub.f32 1.0, %v1942
  %v1944 = vmul.f32 %v1941, %v1943
  %v1945 = vadd.f32 %v1941, %v1944
  %vm1946 = vweird.f32 %v1055
  %vm1947 = vweird.f32 %v1941
  %vm1948 = vmor %vm1946, %vm1947
  %v1949 = vsel %vm1948, %v1941, %v1945
  %v1950 = vand.u32 2147483647, %v1055
  %vm1951 = vcmp.eq.f32.partialorder %v1950, 8.507059e+37
  %v1952 = vand.u32 %v1055, 2147483648
  %v1953 = vor.u32 1.1754944e-38, %v1952
  %v1954 = vsel %vm1951, %v1953, %v1949
  %v1955 = vmul.f32 1.0, %v1954
  %1966 = vrot.lane.b32.xlu0 %v1085, 64
  %v1967 = vpop.permute.xlu0 %1966
  %1968 = vrot.lane.b32.xlu0 %v1100, 64
  %v1969 = vpop.permute.xlu0 %1968
  %1970 = vrot.lane.b32.xlu0 %v1130, 64
  %v1971 = vpop.permute.xlu0 %1970
  %1972 = vrot.lane.b32.xlu0 %v1145, 64
  %v1973 = vpop.permute.xlu0 %1972
  %1974 = vrot.lane.b32.xlu0 %v1175, 64
  %v1975 = vpop.permute.xlu0 %1974
  %1976 = vrot.lane.b32.xlu0 %v1190, 64
  %v1977 = vpop.permute.xlu0 %1976
  %1978 = vrot.lane.b32.xlu0 %v1220, 64
  %v1979 = vpop.permute.xlu0 %1978
  %1980 = vrot.lane.b32.xlu0 %v1235, 64
  %v1981 = vpop.permute.xlu0 %1980
  %1982 = vrot.lane.b32.xlu0 %v1265, 64
  %v1983 = vpop.permute.xlu0 %1982
  %1984 = vrot.lane.b32.xlu0 %v1280, 64
  %v1985 = vpop.permute.xlu0 %1984
  %vm1986 = vcmask 523264
  %v1987 = vsel %vm1986, %v1967, %v1969
  %v1988 = vsel %vm1986, %v1971, %v1973
  %v1989 = vsel %vm1986, %v1975, %v1977
  %v1990 = vsel %vm1986, %v1979, %v1981
  %v1991 = vsel %vm1986, %v1983, %v1985
  %v2002 = vmax.f32 %v1070, %v1987
  %v2003 = vmax.f32 %v1085, %v1969
  %v2004 = vmax.f32 %v1115, %v1988
  %v2005 = vmax.f32 %v1130, %v1973
  %v2006 = vmax.f32 %v1160, %v1989
  %v2007 = vmax.f32 %v1175, %v1977
  %v2008 = vmax.f32 %v1205, %v1990
  %v2009 = vmax.f32 %v1220, %v1981
  %v2010 = vmax.f32 %v1250, %v1991
  %v2011 = vmax.f32 %v1265, %v1985
  %2022 = vrot.lane.b32.xlu0 %v1310, 64
  %v2023 = vpop.permute.xlu0 %2022
  %2024 = vrot.lane.b32.xlu0 %v1325, 64
  %v2025 = vpop.permute.xlu0 %2024
  %2026 = vrot.lane.b32.xlu0 %v1355, 64
  %v2027 = vpop.permute.xlu0 %2026
  %2028 = vrot.lane.b32.xlu0 %v1370, 64
  %v2029 = vpop.permute.xlu0 %2028
  %2030 = vrot.lane.b32.xlu0 %v1400, 64
  %v2031 = vpop.permute.xlu0 %2030
  %2032 = vrot.lane.b32.xlu0 %v1415, 64
  %v2033 = vpop.permute.xlu0 %2032
  %2034 = vrot.lane.b32.xlu0 %v1445, 64
  %v2035 = vpop.permute.xlu0 %2034
  %2036 = vrot.lane.b32.xlu0 %v1460, 64
  %v2037 = vpop.permute.xlu0 %2036
  %2038 = vrot.lane.b32.xlu0 %v1490, 64
  %v2039 = vpop.permute.xlu0 %2038
  %2040 = vrot.lane.b32.xlu0 %v1505, 64
  %v2041 = vpop.permute.xlu0 %2040
  %v2042 = vsel %vm1986, %v2023, %v2025
  %v2043 = vsel %vm1986, %v2027, %v2029
  %v2044 = vsel %vm1986, %v2031, %v2033
  %v2045 = vsel %vm1986, %v2035, %v2037
  %v2046 = vsel %vm1986, %v2039, %v2041
  %v2057 = vmax.f32 %v1295, %v2042
  %v2058 = vmax.f32 %v1310, %v2025
  %v2059 = vmax.f32 %v1340, %v2043
  %v2060 = vmax.f32 %v1355, %v2029
  %v2061 = vmax.f32 %v1385, %v2044
  %v2062 = vmax.f32 %v1400, %v2033
  %v2063 = vmax.f32 %v1430, %v2045
  %v2064 = vmax.f32 %v1445, %v2037
  %v2065 = vmax.f32 %v1475, %v2046
  %v2066 = vmax.f32 %v1490, %v2041
  %v2067 = vmax.f32 %v2002, %v2057
  %v2068 = vmax.f32 %v2003, %v2058
  %v2069 = vmax.f32 %v2004, %v2059
  %v2070 = vmax.f32 %v2005, %v2060
  %v2071 = vmax.f32 %v2006, %v2061
  %v2072 = vmax.f32 %v2007, %v2062
  %v2073 = vmax.f32 %v2008, %v2063
  %v2074 = vmax.f32 %v2009, %v2064
  %v2075 = vmax.f32 %v2010, %v2065
  %v2076 = vmax.f32 %v2011, %v2066
  %2087 = vrot.lane.b32.xlu0 %v1535, 64
  %v2088 = vpop.permute.xlu0 %2087
  %2089 = vrot.lane.b32.xlu0 %v1550, 64
  %v2090 = vpop.permute.xlu0 %2089
  %2091 = vrot.lane.b32.xlu0 %v1580, 64
  %v2092 = vpop.permute.xlu0 %2091
  %2093 = vrot.lane.b32.xlu0 %v1595, 64
  %v2094 = vpop.permute.xlu0 %2093
  %2095 = vrot.lane.b32.xlu0 %v1625, 64
  %v2096 = vpop.permute.xlu0 %2095
  %2097 = vrot.lane.b32.xlu0 %v1640, 64
  %v2098 = vpop.permute.xlu0 %2097
  %2099 = vrot.lane.b32.xlu0 %v1670, 64
  %v2100 = vpop.permute.xlu0 %2099
  %2101 = vrot.lane.b32.xlu0 %v1685, 64
  %v2102 = vpop.permute.xlu0 %2101
  %2103 = vrot.lane.b32.xlu0 %v1715, 64
  %v2104 = vpop.permute.xlu0 %2103
  %2105 = vrot.lane.b32.xlu0 %v1730, 64
  %v2106 = vpop.permute.xlu0 %2105
  %v2107 = vsel %vm1986, %v2088, %v2090
  %v2108 = vsel %vm1986, %v2092, %v2094
  %v2109 = vsel %vm1986, %v2096, %v2098
  %v2110 = vsel %vm1986, %v2100, %v2102
  %v2111 = vsel %vm1986, %v2104, %v2106
  %v2122 = vmax.f32 %v1520, %v2107
  %v2123 = vmax.f32 %v1535, %v2090
  %v2124 = vmax.f32 %v1565, %v2108
  %v2125 = vmax.f32 %v1580, %v2094
  %v2126 = vmax.f32 %v1610, %v2109
  %v2127 = vmax.f32 %v1625, %v2098
  %v2128 = vmax.f32 %v1655, %v2110
  %v2129 = vmax.f32 %v1670, %v2102
  %v2130 = vmax.f32 %v1700, %v2111
  %v2131 = vmax.f32 %v1715, %v2106
  %2142 = vrot.lane.b32.xlu0 %v1760, 64
  %v2143 = vpop.permute.xlu0 %2142
  %2144 = vrot.lane.b32.xlu0 %v1775, 64
  %v2145 = vpop.permute.xlu0 %2144
  %2146 = vrot.lane.b32.xlu0 %v1805, 64
  %v2147 = vpop.permute.xlu0 %2146
  %2148 = vrot.lane.b32.xlu0 %v1820, 64
  %v2149 = vpop.permute.xlu0 %2148
  %2150 = vrot.lane.b32.xlu0 %v1850, 64
  %v2151 = vpop.permute.xlu0 %2150
  %2152 = vrot.lane.b32.xlu0 %v1865, 64
  %v2153 = vpop.permute.xlu0 %2152
  %2154 = vrot.lane.b32.xlu0 %v1895, 64
  %v2155 = vpop.permute.xlu0 %2154
  %2156 = vrot.lane.b32.xlu0 %v1910, 64
  %v2157 = vpop.permute.xlu0 %2156
  %2158 = vrot.lane.b32.xlu0 %v1940, 64
  %v2159 = vpop.permute.xlu0 %2158
  %2160 = vrot.lane.b32.xlu0 %v1955, 64
  %v2161 = vpop.permute.xlu0 %2160
  %v2162 = vsel %vm1986, %v2143, %v2145
  %v2163 = vsel %vm1986, %v2147, %v2149
  %v2164 = vsel %vm1986, %v2151, %v2153
  %v2165 = vsel %vm1986, %v2155, %v2157
  %v2166 = vsel %vm1986, %v2159, %v2161
  %v2177 = vmax.f32 %v1745, %v2162
  %v2178 = vmax.f32 %v1760, %v2145
  %v2179 = vmax.f32 %v1790, %v2163
  %v2180 = vmax.f32 %v1805, %v2149
  %v2181 = vmax.f32 %v1835, %v2164
  %v2182 = vmax.f32 %v1850, %v2153
  %v2183 = vmax.f32 %v1880, %v2165
  %v2184 = vmax.f32 %v1895, %v2157
  %v2185 = vmax.f32 %v1925, %v2166
  %v2186 = vmax.f32 %v1940, %v2161
  %v2187 = vmax.f32 %v2122, %v2177
  %v2188 = vmax.f32 %v2123, %v2178
  %v2189 = vmax.f32 %v2124, %v2179
  %v2190 = vmax.f32 %v2125, %v2180
  %v2191 = vmax.f32 %v2126, %v2181
  %v2192 = vmax.f32 %v2127, %v2182
  %v2193 = vmax.f32 %v2128, %v2183
  %v2194 = vmax.f32 %v2129, %v2184
  %v2195 = vmax.f32 %v2130, %v2185
  %v2196 = vmax.f32 %v2131, %v2186
  %2197 = vst [vmem:[#allocation2] sm:$0xff] 0.0
  %2198 = vst.msk [vmem:[#allocation2 + $0x8] sm:$0xff] %vm1986, 0.0
  %2199 = vst [vmem:[#allocation2 + $0x28] sm:$0xff] %v2187
  %2200 = vst.msk [vmem:[#allocation2 + $0x30] sm:$0xff] %vm1986, %v2188
  %2201 = vst [vmem:[#allocation2 + $0x50] sm:$0xff] %v2189
  %2202 = vst.msk [vmem:[#allocation2 + $0x58] sm:$0xff] %vm1986, %v2190
  %2203 = vst [vmem:[#allocation2 + $0x78] sm:$0xff] %v2191
  %2204 = vst.msk [vmem:[#allocation2 + $0x80] sm:$0xff] %vm1986, %v2192
  %2205 = vst [vmem:[#allocation2 + $0xa0] sm:$0xff] %v2193
  %2206 = vst.msk [vmem:[#allocation2 + $0xa8] sm:$0xff] %vm1986, %v2194
  %2217 = vrot.lane.b32.xlu0 %v2067, 64
  %v2218 = vpop.permute.xlu0 %2217
  %2219 = vrot.lane.b32.xlu0 %v2068, 64
  %v2220 = vpop.permute.xlu0 %2219
  %2221 = vrot.lane.b32.xlu0 %v2069, 64
  %v2222 = vpop.permute.xlu0 %2221
  %2223 = vrot.lane.b32.xlu0 %v2070, 64
  %v2224 = vpop.permute.xlu0 %2223
  %2225 = vrot.lane.b32.xlu0 %v2071, 64
  %v2226 = vpop.permute.xlu0 %2225
  %2227 = vrot.lane.b32.xlu0 %v2072, 64
  %v2228 = vpop.permute.xlu0 %2227
  %2229 = vrot.lane.b32.xlu0 %v2073, 64
  %v2230 = vpop.permute.xlu0 %2229
  %2231 = vrot.lane.b32.xlu0 %v2074, 64
  %v2232 = vpop.permute.xlu0 %2231
  %2233 = vrot.lane.b32.xlu0 %v2075, 64
  %v2234 = vpop.permute.xlu0 %2233
  %2235 = vrot.lane.b32.xlu0 %v2076, 64
  %v2236 = vpop.permute.xlu0 %2235
  %v2237 = vsel %vm1986, %v2218, %v2220
  %v2238 = vsel %vm1986, %v2222, %v2224
  %v2239 = vsel %vm1986, %v2226, %v2228
  %v2240 = vsel %vm1986, %v2230, %v2232
  %v2241 = vsel %vm1986, %v2234, %v2236
  %vm2252 = vcmask 1048064
  %2253 = vst.msk [vmem:[#allocation2 + $0x8] sm:$0xff] %vm2252, %v2218
  %2254 = vst [vmem:[#allocation2 + $0x10] sm:$0xff] %v2237
  %2255 = vst.msk [vmem:[#allocation2 + $0x30] sm:$0xff] %vm2252, %v2222
  %2256 = vst [vmem:[#allocation2 + $0x38] sm:$0xff] %v2238
  %2257 = vst.msk [vmem:[#allocation2 + $0x58] sm:$0xff] %vm2252, %v2226
  %2258 = vst [vmem:[#allocation2 + $0x60] sm:$0xff] %v2239
  %2259 = vst.msk [vmem:[#allocation2 + $0x80] sm:$0xff] %vm2252, %v2230
  %2260 = vst [vmem:[#allocation2 + $0x88] sm:$0xff] %v2240
  %2261 = vst.msk [vmem:[#allocation2 + $0xa8] sm:$0xff] %vm2252, %v2234
  %2262 = vst [vmem:[#allocation2 + $0xb0] sm:$0xff] %v2241
  %2263 = vst [vmem:[#allocation2 + $0x18] sm:$0xff] %v2187
  %2264 = vst.msk [vmem:[#allocation2 + $0x20] sm:$0xff] %vm1986, %v2188
  %2265 = vst [vmem:[#allocation2 + $0x40] sm:$0xff] %v2189
  %2266 = vst.msk [vmem:[#allocation2 + $0x48] sm:$0xff] %vm1986, %v2190
  %2267 = vst [vmem:[#allocation2 + $0x68] sm:$0xff] %v2191
  %2268 = vst.msk [vmem:[#allocation2 + $0x70] sm:$0xff] %vm1986, %v2192
  %2269 = vst [vmem:[#allocation2 + $0x90] sm:$0xff] %v2193
  %2270 = vst.msk [vmem:[#allocation2 + $0x98] sm:$0xff] %vm1986, %v2194
  %2271 = vst [vmem:[#allocation2 + $0xb8] sm:$0xff] %v2195
  %2272 = vst.msk [vmem:[#allocation2 + $0xc0] sm:$0xff] %vm1986, %v2196
  %2273 = vst [vmem:[#allocation2 + $0xc8] sm:$0xff] %v2067
  %2274 = vst.msk [vmem:[#allocation2 + $0xd0] sm:$0xff] %vm1986, %v2068
  %2275 = vst [vmem:[#allocation2 + $0xf0] sm:$0xff] %v2069
  %2276 = vst.msk [vmem:[#allocation2 + $0xf8] sm:$0xff] %vm1986, %v2070
  %2277 = vst [vmem:[#allocation2 + $0x118] sm:$0xff] %v2071
  %2278 = vst.msk [vmem:[#allocation2 + $0x120] sm:$0xff] %vm1986, %v2072
  %2279 = vst [vmem:[#allocation2 + $0x140] sm:$0xff] %v2073
  %2280 = vst.msk [vmem:[#allocation2 + $0x148] sm:$0xff] %vm1986, %v2074
  %2281 = vst [vmem:[#allocation2 + $0x168] sm:$0xff] %v2075
  %2282 = vst.msk [vmem:[#allocation2 + $0x170] sm:$0xff] %vm1986, %v2076
  %2293 = vrot.lane.b32.xlu0 %v2187, 64
  %v2294 = vpop.permute.xlu0 %2293
  %2295 = vrot.lane.b32.xlu0 %v2188, 64
  %v2296 = vpop.permute.xlu0 %2295
  %2297 = vrot.lane.b32.xlu0 %v2189, 64
  %v2298 = vpop.permute.xlu0 %2297
  %2299 = vrot.lane.b32.xlu0 %v2190, 64
  %v2300 = vpop.permute.xlu0 %2299
  %2301 = vrot.lane.b32.xlu0 %v2191, 64
  %v2302 = vpop.permute.xlu0 %2301
  %2303 = vrot.lane.b32.xlu0 %v2192, 64
  %v2304 = vpop.permute.xlu0 %2303
  %2305 = vrot.lane.b32.xlu0 %v2193, 64
  %v2306 = vpop.permute.xlu0 %2305
  %2307 = vrot.lane.b32.xlu0 %v2194, 64
  %v2308 = vpop.permute.xlu0 %2307
  %2309 = vrot.lane.b32.xlu0 %v2195, 64
  %v2310 = vpop.permute.xlu0 %2309
  %2311 = vrot.lane.b32.xlu0 %v2196, 64
  %v2312 = vpop.permute.xlu0 %2311
  %v2313 = vsel %vm1986, %v2294, %v2296
  %v2314 = vsel %vm1986, %v2298, %v2300
  %v2315 = vsel %vm1986, %v2302, %v2304
  %v2316 = vsel %vm1986, %v2306, %v2308
  %v2317 = vsel %vm1986, %v2310, %v2312
  %2328 = vst.msk [vmem:[#allocation2 + $0xd0] sm:$0xff] %vm2252, %v2294
  %2329 = vst [vmem:[#allocation2 + $0xd8] sm:$0xff] %v2313
  %2330 = vst.msk [vmem:[#allocation2 + $0xf8] sm:$0xff] %vm2252, %v2298
  %2331 = vst [vmem:[#allocation2 + $0x100] sm:$0xff] %v2314
  %2332 = vst.msk [vmem:[#allocation2 + $0x120] sm:$0xff] %vm2252, %v2302
  %2333 = vst [vmem:[#allocation2 + $0x128] sm:$0xff] %v2315
  %2334 = vst.msk [vmem:[#allocation2 + $0x148] sm:$0xff] %vm2252, %v2306
  %2335 = vst [vmem:[#allocation2 + $0x150] sm:$0xff] %v2316
  %2336 = vst.msk [vmem:[#allocation2 + $0x170] sm:$0xff] %vm2252, %v2310
  %2337 = vst [vmem:[#allocation2 + $0x178] sm:$0xff] %v2317
  %2338 = vst [vmem:[#allocation2 + $0xe0] sm:$0xff] %v2069
  %2339 = vst.msk [vmem:[#allocation2 + $0xe8] sm:$0xff] %vm1986, %v2070
  %2340 = vst [vmem:[#allocation2 + $0x108] sm:$0xff] %v2071
  %2341 = vst.msk [vmem:[#allocation2 + $0x110] sm:$0xff] %vm1986, %v2072
  %2342 = vst [vmem:[#allocation2 + $0x130] sm:$0xff] %v2073
  %2343 = vst.msk [vmem:[#allocation2 + $0x138] sm:$0xff] %vm1986, %v2074
  %2344 = vst [vmem:[#allocation2 + $0x158] sm:$0xff] %v2075
  %2345 = vst.msk [vmem:[#allocation2 + $0x160] sm:$0xff] %vm1986, %v2076
  %2346 = vst [vmem:[#allocation2 + $0x180] sm:$0xff] 0.0
  %2347 = vst.msk [vmem:[#allocation2 + $0x188] sm:$0xff] %vm1986, 0.0
  %v2348 = vld [vmem:[#allocation2] sm:$0xff]
  %v2349 = vld [vmem:[#allocation2 + $0x8] sm:$0xff]
  %v2350 = vld [vmem:[#allocation2 + $0x10] sm:$0xff]
  %v2351 = vld [vmem:[#allocation2 + $0x18] sm:$0xff]
  %v2352 = vld [vmem:[#allocation2 + $0x20] sm:$0xff]
  %v2353 = vld [vmem:[#allocation2 + $0x28] sm:$0xff]
  %v2354 = vld [vmem:[#allocation2 + $0x30] sm:$0xff]
  %v2355 = vld [vmem:[#allocation2 + $0x38] sm:$0xff]
  %v2356 = vld [vmem:[#allocation2 + $0x40] sm:$0xff]
  %v2357 = vld [vmem:[#allocation2 + $0x48] sm:$0xff]
  %v2358 = vld [vmem:[#allocation2 + $0x50] sm:$0xff]
  %v2359 = vld [vmem:[#allocation2 + $0x58] sm:$0xff]
  %v2360 = vld [vmem:[#allocation2 + $0x60] sm:$0xff]
  %v2361 = vld [vmem:[#allocation2 + $0x68] sm:$0xff]
  %v2362 = vld [vmem:[#allocation2 + $0x70] sm:$0xff]
  %v2363 = vld [vmem:[#allocation2 + $0x78] sm:$0xff]
  %v2364 = vld [vmem:[#allocation2 + $0x80] sm:$0xff]
  %v2365 = vld [vmem:[#allocation2 + $0x88] sm:$0xff]
  %v2366 = vld [vmem:[#allocation2 + $0x90] sm:$0xff]
  %v2367 = vld [vmem:[#allocation2 + $0x98] sm:$0xff]
  %v2368 = vld [vmem:[#allocation2 + $0xa0] sm:$0xff]
  %v2369 = vld [vmem:[#allocation2 + $0xa8] sm:$0xff]
  %v2370 = vld [vmem:[#allocation2 + $0xb0] sm:$0xff]
  %v2371 = vld [vmem:[#allocation2 + $0xb8] sm:$0xff]
  %v2372 = vld [vmem:[#allocation2 + $0xc0] sm:$0xff]
  %v2373 = vld [vmem:[#allocation2 + $0xc8] sm:$0xff]
  %v2374 = vld [vmem:[#allocation2 + $0xd0] sm:$0xff]
  %v2375 = vld [vmem:[#allocation2 + $0xd8] sm:$0xff]
  %v2376 = vld [vmem:[#allocation2 + $0xe0] sm:$0xff]
  %v2377 = vld [vmem:[#allocation2 + $0xe8] sm:$0xff]
  %v2378 = vld [vmem:[#allocation2 + $0xf0] sm:$0xff]
  %v2379 = vld [vmem:[#allocation2 + $0xf8] sm:$0xff]
  %v2380 = vld [vmem:[#allocation2 + $0x100] sm:$0xff]
  %v2381 = vld [vmem:[#allocation2 + $0x108] sm:$0xff]
  %v2382 = vld [vmem:[#allocation2 + $0x110] sm:$0xff]
  %v2383 = vld [vmem:[#allocation2 + $0x118] sm:$0xff]
  %v2384 = vld [vmem:[#allocation2 + $0x120] sm:$0xff]
  %v2385 = vld [vmem:[#allocation2 + $0x128] sm:$0xff]
  %v2386 = vld [vmem:[#allocation2 + $0x130] sm:$0xff]
  %v2387 = vld [vmem:[#allocation2 + $0x138] sm:$0xff]
  %v2388 = vld [vmem:[#allocation2 + $0x140] sm:$0xff]
  %v2389 = vld [vmem:[#allocation2 + $0x148] sm:$0xff]
  %v2390 = vld [vmem:[#allocation2 + $0x150] sm:$0xff]
  %v2391 = vld [vmem:[#allocation2 + $0x158] sm:$0xff]
  %v2392 = vld [vmem:[#allocation2 + $0x160] sm:$0xff]
  %v2393 = vld [vmem:[#allocation2 + $0x168] sm:$0xff]
  %v2394 = vld [vmem:[#allocation2 + $0x170] sm:$0xff]
  %v2395 = vld [vmem:[#allocation2 + $0x178] sm:$0xff]
  %v2396 = vld [vmem:[#allocation2 + $0x180] sm:$0xff]
  %v2397 = vld [vmem:[#allocation2 + $0x188] sm:$0xff]
  %v2398 = vpack.c.bf16 %v2353, %v2348
  %v2399 = vpack.c.bf16 %v2354, %v2349
  %v2400 = vpack.c.bf16 %v2355, %v2350
  %v2401 = vpack.c.bf16 %v2356, %v2351
  %v2402 = vpack.c.bf16 %v2357, %v2352
  %v2403 = vpack.c.bf16 %v2363, %v2358
  %v2404 = vpack.c.bf16 %v2364, %v2359
  %v2405 = vpack.c.bf16 %v2365, %v2360
  %v2406 = vpack.c.bf16 %v2366, %v2361
  %v2407 = vpack.c.bf16 %v2367, %v2362
  %v2408 = vpack.c.bf16 %v2373, %v2368
  %v2409 = vpack.c.bf16 %v2374, %v2369
  %v2410 = vpack.c.bf16 %v2375, %v2370
  %v2411 = vpack.c.bf16 %v2376, %v2371
  %v2412 = vpack.c.bf16 %v2377, %v2372
  %v2413 = vpack.c.bf16 %v2383, %v2378
  %v2414 = vpack.c.bf16 %v2384, %v2379
  %v2415 = vpack.c.bf16 %v2385, %v2380
  %v2416 = vpack.c.bf16 %v2386, %v2381
  %v2417 = vpack.c.bf16 %v2387, %v2382
  %v2418 = vpack.c.bf16 %v2393, %v2388
  %v2419 = vpack.c.bf16 %v2394, %v2389
  %v2420 = vpack.c.bf16 %v2395, %v2390
  %v2421 = vpack.c.bf16 %v2396, %v2391
  %v2422 = vpack.c.bf16 %v2397, %v2392
  %v2423 = vld [vmem:[%s3] sm:$0xff]
  %v2424 = vld [vmem:[%s3 + $0x8] sm:$0xf]
  %v2425 = vld [vmem:[%s3 + $0xc] sm:$0xff]
  %v2426 = vld [vmem:[%s3 + $0x14] sm:$0xf]
  %v2427 = vld [vmem:[%s3 + $0x18] sm:$0xff]
  %v2428 = vld [vmem:[%s3 + $0x20] sm:$0xf]
  %v2429 = vld [vmem:[%s3 + $0x24] sm:$0xff]
  %v2430 = vld [vmem:[%s3 + $0x2c] sm:$0xf]
  %v2431 = vld [vmem:[%s3 + $0x30] sm:$0xff]
  %v2432 = vld [vmem:[%s3 + $0x38] sm:$0xf]
  %v2433 = vld [vmem:[%s3 + $0x3c] sm:$0xff]
  %v2434 = vld [vmem:[%s3 + $0x44] sm:$0xf]
  %v2435 = vld [vmem:[%s3 + $0x48] sm:$0xff]
  %v2436 = vld [vmem:[%s3 + $0x50] sm:$0xf]
  %v2437 = vld [vmem:[%s3 + $0x54] sm:$0xff]
  %v2438 = vld [vmem:[%s3 + $0x5c] sm:$0xf]
  %v2439 = vld [vmem:[%s3 + $0x60] sm:$0xff]
  %v2440 = vld [vmem:[%s3 + $0x68] sm:$0xf]
  %v2441 = vld [vmem:[%s3 + $0x6c] sm:$0xff]
  %v2442 = vld [vmem:[%s3 + $0x74] sm:$0xf]
  %v2443 = vld [vmem:[%s3 + $0x78] sm:$0xff]
  %v2444 = vld [vmem:[%s3 + $0x80] sm:$0xf]
  %v2445 = vld [vmem:[%s3 + $0x84] sm:$0xff]
  %v2446 = vld [vmem:[%s3 + $0x8c] sm:$0xf]
  %v2447 = vld [vmem:[%s3 + $0x90] sm:$0xff]
  %v2448 = vld [vmem:[%s3 + $0x98] sm:$0xf]
  %v2449 = vld [vmem:[%s3 + $0x9c] sm:$0xff]
  %v2450 = vld [vmem:[%s3 + $0xa4] sm:$0xf]
  %v2451 = vld [vmem:[%s3 + $0xa8] sm:$0xff]
  %v2452 = vld [vmem:[%s3 + $0xb0] sm:$0xf]
  %v2453 = vld [vmem:[%s3 + $0xb4] sm:$0xff]
  %v2454 = vld [vmem:[%s3 + $0xbc] sm:$0xf]
  %v2455 = vld [vmem:[%s3 + $0xc0] sm:$0xff]
  %v2456 = vld [vmem:[%s3 + $0xc8] sm:$0xf]
  %v2457 = vld [vmem:[%s3 + $0xcc] sm:$0xff]
  %v2458 = vld [vmem:[%s3 + $0xd4] sm:$0xf]
  %v2459 = vld [vmem:[%s3 + $0xd8] sm:$0xff]
  %v2460 = vld [vmem:[%s3 + $0xe0] sm:$0xf]
  %v2461 = vld [vmem:[%s3 + $0xe4] sm:$0xff]
  %v2462 = vld [vmem:[%s3 + $0xec] sm:$0xf]
  %v2463 = vld [vmem:[%s3 + $0xf0] sm:$0xff]
  %v2464 = vld [vmem:[%s3 + $0xf8] sm:$0xf]
  %v2465 = vld [vmem:[%s3 + $0xfc] sm:$0xff]
  %v2466 = vld [vmem:[%s3 + $0x104] sm:$0xf]
  %v2467 = vld [vmem:[%s3 + $0x108] sm:$0xff]
  %v2468 = vld [vmem:[%s3 + $0x110] sm:$0xf]
  %v2469 = vld [vmem:[%s3 + $0x114] sm:$0xff]
  %v2470 = vld [vmem:[%s3 + $0x11c] sm:$0xf]
  %v2471 = vld [vmem:[%s3 + $0x120] sm:$0xff]
  %v2472 = vld [vmem:[%s3 + $0x128] sm:$0xf]
  %v2473 = vld [vmem:[%s3 + $0x12c] sm:$0xff]
  %v2474 = vld [vmem:[%s3 + $0x134] sm:$0xf]
  %v2475 = vld [vmem:[%s3 + $0x138] sm:$0xff]
  %v2476 = vld [vmem:[%s3 + $0x140] sm:$0xf]
  %v2477 = vld [vmem:[%s3 + $0x144] sm:$0xff]
  %v2478 = vld [vmem:[%s3 + $0x14c] sm:$0xf]
  %v2479 = vld [vmem:[%s3 + $0x150] sm:$0xff]
  %v2480 = vld [vmem:[%s3 + $0x158] sm:$0xf]
  %v2481 = vld [vmem:[%s3 + $0x15c] sm:$0xff]
  %v2482 = vld [vmem:[%s3 + $0x164] sm:$0xf]
  %v2483 = vld [vmem:[%s3 + $0x168] sm:$0xff]
  %v2484 = vld [vmem:[%s3 + $0x170] sm:$0xf]
  %v2485 = vld [vmem:[%s3 + $0x174] sm:$0xff]
  %v2486 = vld [vmem:[%s3 + $0x17c] sm:$0xf]
  %v2487 = vld [vmem:[%s3 + $0x180] sm:$0xff]
  %v2488 = vld [vmem:[%s3 + $0x188] sm:$0xf]
  %v2489 = vld [vmem:[%s3 + $0x18c] sm:$0xff]
  %v2490 = vld [vmem:[%s3 + $0x194] sm:$0xf]
  %v2491 = vld [vmem:[%s3 + $0x198] sm:$0xff]
  %v2492 = vld [vmem:[%s3 + $0x1a0] sm:$0xf]
  %v2493 = vld [vmem:[%s3 + $0x1a4] sm:$0xff]
  %v2494 = vld [vmem:[%s3 + $0x1ac] sm:$0xf]
  %v2495 = vld [vmem:[%s3 + $0x1b0] sm:$0xff]
  %v2496 = vld [vmem:[%s3 + $0x1b8] sm:$0xf]
  %v2497 = vld [vmem:[%s3 + $0x1bc] sm:$0xff]
  %v2498 = vld [vmem:[%s3 + $0x1c4] sm:$0xf]
  %v2499 = vld [vmem:[%s3 + $0x1c8] sm:$0xff]
  %v2500 = vld [vmem:[%s3 + $0x1d0] sm:$0xf]
  %v2501 = vld [vmem:[%s3 + $0x1d4] sm:$0xff]
  %v2502 = vld [vmem:[%s3 + $0x1dc] sm:$0xf]
  %v2503 = vld [vmem:[%s3 + $0x1e0] sm:$0xff]
  %v2504 = vld [vmem:[%s3 + $0x1e8] sm:$0xf]
  %v2505 = vld [vmem:[%s3 + $0x1ec] sm:$0xff]
  %v2506 = vld [vmem:[%s3 + $0x1f4] sm:$0xf]
  %v2507 = vld [vmem:[%s3 + $0x1f8] sm:$0xff]
  %v2508 = vld [vmem:[%s3 + $0x200] sm:$0xf]
  %v2509 = vld [vmem:[%s3 + $0x204] sm:$0xff]
  %v2510 = vld [vmem:[%s3 + $0x20c] sm:$0xf]
  %v2511 = vld [vmem:[%s3 + $0x210] sm:$0xff]
  %v2512 = vld [vmem:[%s3 + $0x218] sm:$0xf]
  %v2513 = vld [vmem:[%s3 + $0x21c] sm:$0xff]
  %v2514 = vld [vmem:[%s3 + $0x224] sm:$0xf]
  %v2515 = vld [vmem:[%s3 + $0x228] sm:$0xff]
  %v2516 = vld [vmem:[%s3 + $0x230] sm:$0xf]
  %v2517 = vld [vmem:[%s3 + $0x234] sm:$0xff]
  %v2518 = vld [vmem:[%s3 + $0x23c] sm:$0xf]
  %v2519 = vld [vmem:[%s3 + $0x240] sm:$0xff]
  %v2520 = vld [vmem:[%s3 + $0x248] sm:$0xf]
  %v2521 = vld [vmem:[%s3 + $0x24c] sm:$0xff]
  %v2522 = vld [vmem:[%s3 + $0x254] sm:$0xf]
  %v2523 = vld [vmem:[%s3 + $0x258] sm:$0xff]
  %v2524 = vld [vmem:[%s3 + $0x260] sm:$0xf]
  %v2525 = vld [vmem:[%s3 + $0x264] sm:$0xff]
  %v2526 = vld [vmem:[%s3 + $0x26c] sm:$0xf]
  %v2527 = vld [vmem:[%s3 + $0x270] sm:$0xff]
  %v2528 = vld [vmem:[%s3 + $0x278] sm:$0xf]
  %v2529 = vld [vmem:[%s3 + $0x27c] sm:$0xff]
  %v2530 = vld [vmem:[%s3 + $0x284] sm:$0xf]
  %v2531 = vld [vmem:[%s3 + $0x288] sm:$0xff]
  %v2532 = vld [vmem:[%s3 + $0x290] sm:$0xf]
  %v2533 = vld [vmem:[%s3 + $0x294] sm:$0xff]
  %v2534 = vld [vmem:[%s3 + $0x29c] sm:$0xf]
  %v2535 = vld [vmem:[%s3 + $0x2a0] sm:$0xff]
  %v2536 = vld [vmem:[%s3 + $0x2a8] sm:$0xf]
  %v2537 = vld [vmem:[%s3 + $0x2ac] sm:$0xff]
  %v2538 = vld [vmem:[%s3 + $0x2b4] sm:$0xf]
  %v2539 = vld [vmem:[%s3 + $0x2b8] sm:$0xff]
  %v2540 = vld [vmem:[%s3 + $0x2c0] sm:$0xf]
  %v2541 = vld [vmem:[%s3 + $0x2c4] sm:$0xff]
  %v2542 = vld [vmem:[%s3 + $0x2cc] sm:$0xf]
  %v2543 = vld [vmem:[%s3 + $0x2d0] sm:$0xff]
  %v2544 = vld [vmem:[%s3 + $0x2d8] sm:$0xf]
  %v2545 = vld [vmem:[%s3 + $0x2dc] sm:$0xff]
  %v2546 = vld [vmem:[%s3 + $0x2e4] sm:$0xf]
  %v2547 = vld [vmem:[%s3 + $0x2e8] sm:$0xff]
  %v2548 = vld [vmem:[%s3 + $0x2f0] sm:$0xf]
  %v2549 = vld [vmem:[%s3 + $0x2f4] sm:$0xff]
  %v2550 = vld [vmem:[%s3 + $0x2fc] sm:$0xf]
  %v2551 = vld [vmem:[%s3 + $0x300] sm:$0xff]
  %v2552 = vld [vmem:[%s3 + $0x308] sm:$0xf]
  %v2553 = vld [vmem:[%s3 + $0x30c] sm:$0xff]
  %v2554 = vld [vmem:[%s3 + $0x314] sm:$0xf]
  %v2555 = vld [vmem:[%s3 + $0x318] sm:$0xff]
  %v2556 = vld [vmem:[%s3 + $0x320] sm:$0xf]
  %v2557 = vld [vmem:[%s3 + $0x324] sm:$0xff]
  %v2558 = vld [vmem:[%s3 + $0x32c] sm:$0xf]
  %v2559 = vld [vmem:[%s3 + $0x330] sm:$0xff]
  %v2560 = vld [vmem:[%s3 + $0x338] sm:$0xf]
  %v2561 = vld [vmem:[%s3 + $0x33c] sm:$0xff]
  %v2562 = vld [vmem:[%s3 + $0x344] sm:$0xf]
  %v2563 = vld [vmem:[%s3 + $0x348] sm:$0xff]
  %v2564 = vld [vmem:[%s3 + $0x350] sm:$0xf]
  %v2565 = vld [vmem:[%s3 + $0x354] sm:$0xff]
  %v2566 = vld [vmem:[%s3 + $0x35c] sm:$0xf]
  %v2567 = vld [vmem:[%s4] sm:$0x7]
  %v2569 = vperm.slane %v2567, 0
  %v2570 = vperm.slane %v2567, 1
  %v2571 = vperm.slane %v2567, 2
  %v2719 = vunpack.c.l.b16 %v2423
  %v2720 = vunpack.c.h.b16 %v2423
  %v2721 = vunpack.c.l.b16 %v2424
  %v2722 = vunpack.c.l.b16 %v2425
  %v2723 = vunpack.c.h.b16 %v2425
  %v2724 = vunpack.c.l.b16 %v2426
  %v2725 = vunpack.c.l.b16 %v2427
  %v2726 = vunpack.c.h.b16 %v2427
  %v2727 = vunpack.c.l.b16 %v2428
  %v2728 = vunpack.c.l.b16 %v2429
  %v2729 = vunpack.c.h.b16 %v2429
  %v2730 = vunpack.c.l.b16 %v2430
  %v2731 = vunpack.c.l.b16 %v2431
  %v2732 = vunpack.c.h.b16 %v2431
  %v2733 = vunpack.c.l.b16 %v2432
  %v2734 = vunpack.c.l.b16 %v2433
  %v2735 = vunpack.c.h.b16 %v2433
  %v2736 = vunpack.c.l.b16 %v2434
  %v2737 = vunpack.c.l.b16 %v2435
  %v2738 = vunpack.c.h.b16 %v2435
  %v2739 = vunpack.c.l.b16 %v2436
  %v2740 = vunpack.c.l.b16 %v2437
  %v2741 = vunpack.c.h.b16 %v2437
  %v2742 = vunpack.c.l.b16 %v2438
  %v2743 = vunpack.c.l.b16 %v2439
  %v2744 = vunpack.c.h.b16 %v2439
  %v2745 = vunpack.c.l.b16 %v2440
  %v2746 = vunpack.c.l.b16 %v2441
  %v2747 = vunpack.c.h.b16 %v2441
  %v2748 = vunpack.c.l.b16 %v2442
  %v2749 = vunpack.c.l.b16 %v2443
  %v2750 = vunpack.c.h.b16 %v2443
  %v2751 = vunpack.c.l.b16 %v2444
  %v2752 = vunpack.c.l.b16 %v2445
  %v2753 = vunpack.c.h.b16 %v2445
  %v2754 = vunpack.c.l.b16 %v2446
  %v2755 = vunpack.c.l.b16 %v2447
  %v2756 = vunpack.c.h.b16 %v2447
  %v2757 = vunpack.c.l.b16 %v2448
  %v2758 = vunpack.c.l.b16 %v2449
  %v2759 = vunpack.c.h.b16 %v2449
  %v2760 = vunpack.c.l.b16 %v2450
  %v2761 = vunpack.c.l.b16 %v2451
  %v2762 = vunpack.c.h.b16 %v2451
  %v2763 = vunpack.c.l.b16 %v2452
  %v2764 = vunpack.c.l.b16 %v2453
  %v2765 = vunpack.c.h.b16 %v2453
  %v2766 = vunpack.c.l.b16 %v2454
  %v2767 = vunpack.c.l.b16 %v2455
  %v2768 = vunpack.c.h.b16 %v2455
  %v2769 = vunpack.c.l.b16 %v2456
  %v2770 = vunpack.c.l.b16 %v2457
  %v2771 = vunpack.c.h.b16 %v2457
  %v2772 = vunpack.c.l.b16 %v2458
  %v2773 = vunpack.c.l.b16 %v2459
  %v2774 = vunpack.c.h.b16 %v2459
  %v2775 = vunpack.c.l.b16 %v2460
  %v2776 = vunpack.c.l.b16 %v2461
  %v2777 = vunpack.c.h.b16 %v2461
  %v2778 = vunpack.c.l.b16 %v2462
  %v2779 = vunpack.c.l.b16 %v2463
  %v2780 = vunpack.c.h.b16 %v2463
  %v2781 = vunpack.c.l.b16 %v2464
  %v2782 = vunpack.c.l.b16 %v2465
  %v2783 = vunpack.c.h.b16 %v2465
  %v2784 = vunpack.c.l.b16 %v2466
  %v2785 = vunpack.c.l.b16 %v2467
  %v2786 = vunpack.c.h.b16 %v2467
  %v2787 = vunpack.c.l.b16 %v2468
  %v2788 = vunpack.c.l.b16 %v2469
  %v2789 = vunpack.c.h.b16 %v2469
  %v2790 = vunpack.c.l.b16 %v2470
  %v2791 = vunpack.c.l.b16 %v2471
  %v2792 = vunpack.c.h.b16 %v2471
  %v2793 = vunpack.c.l.b16 %v2472
  %v2794 = vunpack.c.l.b16 %v2473
  %v2795 = vunpack.c.h.b16 %v2473
  %v2796 = vunpack.c.l.b16 %v2474
  %v2797 = vunpack.c.l.b16 %v2475
  %v2798 = vunpack.c.h.b16 %v2475
  %v2799 = vunpack.c.l.b16 %v2476
  %v2800 = vunpack.c.l.b16 %v2477
  %v2801 = vunpack.c.h.b16 %v2477
  %v2802 = vunpack.c.l.b16 %v2478
  %v2803 = vunpack.c.l.b16 %v2479
  %v2804 = vunpack.c.h.b16 %v2479
  %v2805 = vunpack.c.l.b16 %v2480
  %v2806 = vunpack.c.l.b16 %v2481
  %v2807 = vunpack.c.h.b16 %v2481
  %v2808 = vunpack.c.l.b16 %v2482
  %v2809 = vunpack.c.l.b16 %v2483
  %v2810 = vunpack.c.h.b16 %v2483
  %v2811 = vunpack.c.l.b16 %v2484
  %v2812 = vunpack.c.l.b16 %v2485
  %v2813 = vunpack.c.h.b16 %v2485
  %v2814 = vunpack.c.l.b16 %v2486
  %v2815 = vunpack.c.l.b16 %v2487
  %v2816 = vunpack.c.h.b16 %v2487
  %v2817 = vunpack.c.l.b16 %v2488
  %v2818 = vunpack.c.l.b16 %v2489
  %v2819 = vunpack.c.h.b16 %v2489
  %v2820 = vunpack.c.l.b16 %v2490
  %v2821 = vunpack.c.l.b16 %v2491
  %v2822 = vunpack.c.h.b16 %v2491
  %v2823 = vunpack.c.l.b16 %v2492
  %v2824 = vunpack.c.l.b16 %v2493
  %v2825 = vunpack.c.h.b16 %v2493
  %v2826 = vunpack.c.l.b16 %v2494
  %v2827 = vunpack.c.l.b16 %v2495
  %v2828 = vunpack.c.h.b16 %v2495
  %v2829 = vunpack.c.l.b16 %v2496
  %v2830 = vunpack.c.l.b16 %v2497
  %v2831 = vunpack.c.h.b16 %v2497
  %v2832 = vunpack.c.l.b16 %v2498
  %v2833 = vunpack.c.l.b16 %v2499
  %v2834 = vunpack.c.h.b16 %v2499
  %v2835 = vunpack.c.l.b16 %v2500
  %v2836 = vunpack.c.l.b16 %v2501
  %v2837 = vunpack.c.h.b16 %v2501
  %v2838 = vunpack.c.l.b16 %v2502
  %v2839 = vunpack.c.l.b16 %v2503
  %v2840 = vunpack.c.h.b16 %v2503
  %v2841 = vunpack.c.l.b16 %v2504
  %v2842 = vunpack.c.l.b16 %v2505
  %v2843 = vunpack.c.h.b16 %v2505
  %v2844 = vunpack.c.l.b16 %v2506
  %v2845 = vunpack.c.l.b16 %v2507
  %v2846 = vunpack.c.h.b16 %v2507
  %v2847 = vunpack.c.l.b16 %v2508
  %v2848 = vunpack.c.l.b16 %v2509
  %v2849 = vunpack.c.h.b16 %v2509
  %v2850 = vunpack.c.l.b16 %v2510
  %v2851 = vunpack.c.l.b16 %v2511
  %v2852 = vunpack.c.h.b16 %v2511
  %v2853 = vunpack.c.l.b16 %v2512
  %v2854 = vunpack.c.l.b16 %v2513
  %v2855 = vunpack.c.h.b16 %v2513
  %v2856 = vunpack.c.l.b16 %v2514
  %v2857 = vunpack.c.l.b16 %v2515
  %v2858 = vunpack.c.h.b16 %v2515
  %v2859 = vunpack.c.l.b16 %v2516
  %v2860 = vunpack.c.l.b16 %v2517
  %v2861 = vunpack.c.h.b16 %v2517
  %v2862 = vunpack.c.l.b16 %v2518
  %v2863 = vunpack.c.l.b16 %v2519
  %v2864 = vunpack.c.h.b16 %v2519
  %v2865 = vunpack.c.l.b16 %v2520
  %v2866 = vunpack.c.l.b16 %v2521
  %v2867 = vunpack.c.h.b16 %v2521
  %v2868 = vunpack.c.l.b16 %v2522
  %v2869 = vunpack.c.l.b16 %v2523
  %v2870 = vunpack.c.h.b16 %v2523
  %v2871 = vunpack.c.l.b16 %v2524
  %v2872 = vunpack.c.l.b16 %v2525
  %v2873 = vunpack.c.h.b16 %v2525
  %v2874 = vunpack.c.l.b16 %v2526
  %v2875 = vunpack.c.l.b16 %v2527
  %v2876 = vunpack.c.h.b16 %v2527
  %v2877 = vunpack.c.l.b16 %v2528
  %v2878 = vunpack.c.l.b16 %v2529
  %v2879 = vunpack.c.h.b16 %v2529
  %v2880 = vunpack.c.l.b16 %v2530
  %v2881 = vunpack.c.l.b16 %v2531
  %v2882 = vunpack.c.h.b16 %v2531
  %v2883 = vunpack.c.l.b16 %v2532
  %v2884 = vunpack.c.l.b16 %v2533
  %v2885 = vunpack.c.h.b16 %v2533
  %v2886 = vunpack.c.l.b16 %v2534
  %v2887 = vunpack.c.l.b16 %v2535
  %v2888 = vunpack.c.h.b16 %v2535
  %v2889 = vunpack.c.l.b16 %v2536
  %v2890 = vunpack.c.l.b16 %v2537
  %v2891 = vunpack.c.h.b16 %v2537
  %v2892 = vunpack.c.l.b16 %v2538
  %v2893 = vunpack.c.l.b16 %v2539
  %v2894 = vunpack.c.h.b16 %v2539
  %v2895 = vunpack.c.l.b16 %v2540
  %v2896 = vunpack.c.l.b16 %v2541
  %v2897 = vunpack.c.h.b16 %v2541
  %v2898 = vunpack.c.l.b16 %v2542
  %v2899 = vunpack.c.l.b16 %v2543
  %v2900 = vunpack.c.h.b16 %v2543
  %v2901 = vunpack.c.l.b16 %v2544
  %v2902 = vunpack.c.l.b16 %v2545
  %v2903 = vunpack.c.h.b16 %v2545
  %v2904 = vunpack.c.l.b16 %v2546
  %v2905 = vunpack.c.l.b16 %v2547
  %v2906 = vunpack.c.h.b16 %v2547
  %v2907 = vunpack.c.l.b16 %v2548
  %v2908 = vunpack.c.l.b16 %v2549
  %v2909 = vunpack.c.h.b16 %v2549
  %v2910 = vunpack.c.l.b16 %v2550
  %v2911 = vunpack.c.l.b16 %v2551
  %v2912 = vunpack.c.h.b16 %v2551
  %v2913 = vunpack.c.l.b16 %v2552
  %v2914 = vunpack.c.l.b16 %v2553
  %v2915 = vunpack.c.h.b16 %v2553
  %v2916 = vunpack.c.l.b16 %v2554
  %v2917 = vunpack.c.l.b16 %v2555
  %v2918 = vunpack.c.h.b16 %v2555
  %v2919 = vunpack.c.l.b16 %v2556
  %v2920 = vunpack.c.l.b16 %v2557
  %v2921 = vunpack.c.h.b16 %v2557
  %v2922 = vunpack.c.l.b16 %v2558
  %v2923 = vunpack.c.l.b16 %v2559
  %v2924 = vunpack.c.h.b16 %v2559
  %v2925 = vunpack.c.l.b16 %v2560
  %v2926 = vunpack.c.l.b16 %v2561
  %v2927 = vunpack.c.h.b16 %v2561
  %v2928 = vunpack.c.l.b16 %v2562
  %v2929 = vunpack.c.l.b16 %v2563
  %v2930 = vunpack.c.h.b16 %v2563
  %v2931 = vunpack.c.l.b16 %v2564
  %v2932 = vunpack.c.l.b16 %v2565
  %v2933 = vunpack.c.h.b16 %v2565
  %v2934 = vunpack.c.l.b16 %v2566
  %v2935 = vpack.c.b16 %v2722, %v2719
  %v2936 = vpack.c.b16 %v2723, %v2720
  %v2937 = vpack.c.b16 %v2724, %v2721
  %v2938 = vpack.c.b16 %v2728, %v2725
  %v2939 = vpack.c.b16 %v2729, %v2726
  %v2940 = vpack.c.b16 %v2730, %v2727
  %v2941 = vpack.c.b16 %v2734, %v2731
  %v2942 = vpack.c.b16 %v2735, %v2732
  %v2943 = vpack.c.b16 %v2736, %v2733
  %v2944 = vpack.c.b16 %v2740, %v2737
  %v2945 = vpack.c.b16 %v2741, %v2738
  %v2946 = vpack.c.b16 %v2742, %v2739
  %v2947 = vpack.c.b16 %v2746, %v2743
  %v2948 = vpack.c.b16 %v2747, %v2744
  %v2949 = vpack.c.b16 %v2748, %v2745
  %v2950 = vpack.c.b16 %v2752, %v2749
  %v2951 = vpack.c.b16 %v2753, %v2750
  %v2952 = vpack.c.b16 %v2754, %v2751
  %v2953 = vpack.c.b16 %v2758, %v2755
  %v2954 = vpack.c.b16 %v2759, %v2756
  %v2955 = vpack.c.b16 %v2760, %v2757
  %v2956 = vpack.c.b16 %v2764, %v2761
  %v2957 = vpack.c.b16 %v2765, %v2762
  %v2958 = vpack.c.b16 %v2766, %v2763
  %v2959 = vpack.c.b16 %v2770, %v2767
  %v2960 = vpack.c.b16 %v2771, %v2768
  %v2961 = vpack.c.b16 %v2772, %v2769
  %v2962 = vpack.c.b16 %v2776, %v2773
  %v2963 = vpack.c.b16 %v2777, %v2774
  %v2964 = vpack.c.b16 %v2778, %v2775
  %v2965 = vpack.c.b16 %v2782, %v2779
  %v2966 = vpack.c.b16 %v2783, %v2780
  %v2967 = vpack.c.b16 %v2784, %v2781
  %v2968 = vpack.c.b16 %v2788, %v2785
  %v2969 = vpack.c.b16 %v2789, %v2786
  %v2970 = vpack.c.b16 %v2790, %v2787
  %v2971 = vpack.c.b16 %v2794, %v2791
  %v2972 = vpack.c.b16 %v2795, %v2792
  %v2973 = vpack.c.b16 %v2796, %v2793
  %v2974 = vpack.c.b16 %v2800, %v2797
  %v2975 = vpack.c.b16 %v2801, %v2798
  %v2976 = vpack.c.b16 %v2802, %v2799
  %v2977 = vpack.c.b16 %v2806, %v2803
  %v2978 = vpack.c.b16 %v2807, %v2804
  %v2979 = vpack.c.b16 %v2808, %v2805
  %v2980 = vpack.c.b16 %v2812, %v2809
  %v2981 = vpack.c.b16 %v2813, %v2810
  %v2982 = vpack.c.b16 %v2814, %v2811
  %v2983 = vpack.c.b16 %v2818, %v2815
  %v2984 = vpack.c.b16 %v2819, %v2816
  %v2985 = vpack.c.b16 %v2820, %v2817
  %v2986 = vpack.c.b16 %v2824, %v2821
  %v2987 = vpack.c.b16 %v2825, %v2822
  %v2988 = vpack.c.b16 %v2826, %v2823
  %v2989 = vpack.c.b16 %v2830, %v2827
  %v2990 = vpack.c.b16 %v2831, %v2828
  %v2991 = vpack.c.b16 %v2832, %v2829
  %v2992 = vpack.c.b16 %v2836, %v2833
  %v2993 = vpack.c.b16 %v2837, %v2834
  %v2994 = vpack.c.b16 %v2838, %v2835
  %v2995 = vpack.c.b16 %v2842, %v2839
  %v2996 = vpack.c.b16 %v2843, %v2840
  %v2997 = vpack.c.b16 %v2844, %v2841
  %v2998 = vpack.c.b16 %v2848, %v2845
  %v2999 = vpack.c.b16 %v2849, %v2846
  %v3000 = vpack.c.b16 %v2850, %v2847
  %v3001 = vpack.c.b16 %v2854, %v2851
  %v3002 = vpack.c.b16 %v2855, %v2852
  %v3003 = vpack.c.b16 %v2856, %v2853
  %v3004 = vpack.c.b16 %v2860, %v2857
  %v3005 = vpack.c.b16 %v2861, %v2858
  %v3006 = vpack.c.b16 %v2862, %v2859
  %v3007 = vpack.c.b16 %v2866, %v2863
  %v3008 = vpack.c.b16 %v2867, %v2864
  %v3009 = vpack.c.b16 %v2868, %v2865
  %v3010 = vpack.c.b16 %v2872, %v2869
  %v3011 = vpack.c.b16 %v2873, %v2870
  %v3012 = vpack.c.b16 %v2874, %v2871
  %v3013 = vpack.c.b16 %v2878, %v2875
  %v3014 = vpack.c.b16 %v2879, %v2876
  %v3015 = vpack.c.b16 %v2880, %v2877
  %v3016 = vpack.c.b16 %v2884, %v2881
  %v3017 = vpack.c.b16 %v2885, %v2882
  %v3018 = vpack.c.b16 %v2886, %v2883
  %v3019 = vpack.c.b16 %v2890, %v2887
  %v3020 = vpack.c.b16 %v2891, %v2888
  %v3021 = vpack.c.b16 %v2892, %v2889
  %v3022 = vpack.c.b16 %v2896, %v2893
  %v3023 = vpack.c.b16 %v2897, %v2894
  %v3024 = vpack.c.b16 %v2898, %v2895
  %v3025 = vpack.c.b16 %v2902, %v2899
  %v3026 = vpack.c.b16 %v2903, %v2900
  %v3027 = vpack.c.b16 %v2904, %v2901
  %v3028 = vpack.c.b16 %v2908, %v2905
  %v3029 = vpack.c.b16 %v2909, %v2906
  %v3030 = vpack.c.b16 %v2910, %v2907
  %v3031 = vpack.c.b16 %v2914, %v2911
  %v3032 = vpack.c.b16 %v2915, %v2912
  %v3033 = vpack.c.b16 %v2916, %v2913
  %v3034 = vpack.c.b16 %v2920, %v2917
  %v3035 = vpack.c.b16 %v2921, %v2918
  %v3036 = vpack.c.b16 %v2922, %v2919
  %v3037 = vpack.c.b16 %v2926, %v2923
  %v3038 = vpack.c.b16 %v2927, %v2924
  %v3039 = vpack.c.b16 %v2928, %v2925
  %v3040 = vpack.c.b16 %v2932, %v2929
  %v3041 = vpack.c.b16 %v2933, %v2930
  %v3042 = vpack.c.b16 %v2934, %v2931
  %v3152 = vsel %vm1986, %v2402, 0
  %v3155 = vsel %vm1986, %v2407, 0
  %v3158 = vsel %vm1986, %v2412, 0
  %v3161 = vsel %vm1986, %v2417, 0
  %v3164 = vsel %vm1986, %v2422, 0
  %3166 = vmatpush.bf16.msra.mxu0 %v2956
  %3167 = vmatpush.bf16.msra.mxu0 %v2953
  %3168 = vmatpush.bf16.msra.mxu0 %v2950
  %3169 = vmatpush.bf16.msra.mxu0 %v2947
  %3170 = vmatpush.bf16.msra.mxu0 %v2944
  %3171 = vmatpush.bf16.msra.mxu0 %v2941
  %3172 = vmatpush.bf16.msra.mxu0 %v2938
  %3173 = vmatpush.bf16.msra.mxu0 %v2935
  %3174 = vmatmul.bf16.gmra.mxu0 %v2398
  %v3175 = vpop.f32.mrf.mxu0
  %v3176 = vadd.f32 %v2569, %v3175
  %v3177 = vpop.f32.mrf.mxu0
  %v3178 = vadd.f32 %v2569, %v3177
  %3179 = vmatmul.bf16.gmra.mxu0 %v2403
  %v3180 = vpop.f32.mrf.mxu0
  %v3181 = vadd.f32 %v2569, %v3180
  %v3182 = vpop.f32.mrf.mxu0
  %v3183 = vadd.f32 %v2569, %v3182
  %3184 = vmatmul.bf16.gmra.mxu0 %v2408
  %v3185 = vpop.f32.mrf.mxu0
  %v3186 = vadd.f32 %v2569, %v3185
  %v3187 = vpop.f32.mrf.mxu0
  %v3188 = vadd.f32 %v2569, %v3187
  %3189 = vmatmul.bf16.gmra.mxu0 %v2413
  %v3190 = vpop.f32.mrf.mxu0
  %v3191 = vadd.f32 %v2569, %v3190
  %v3192 = vpop.f32.mrf.mxu0
  %v3193 = vadd.f32 %v2569, %v3192
  %3194 = vmatmul.bf16.gmra.mxu0 %v2418
  %v3195 = vpop.f32.mrf.mxu0
  %v3196 = vadd.f32 %v2569, %v3195
  %v3197 = vpop.f32.mrf.mxu0
  %v3198 = vadd.f32 %v2569, %v3197
  %3199 = vdwg.mxu0
  %3200 = vmatpush.bf16.msra.mxu0 %v2980
  %3201 = vmatpush.bf16.msra.mxu0 %v2977
  %3202 = vmatpush.bf16.msra.mxu0 %v2974
  %3203 = vmatpush.bf16.msra.mxu0 %v2971
  %3204 = vmatpush.bf16.msra.mxu0 %v2968
  %3205 = vmatpush.bf16.msra.mxu0 %v2965
  %3206 = vmatpush.bf16.msra.mxu0 %v2962
  %3207 = vmatpush.bf16.msra.mxu0 %v2959
  %3208 = vmatmul.bf16.gmra.mxu0 %v2399
  %v3209 = vpop.f32.mrf.mxu0
  %v3210 = vadd.f32 %v3176, %v3209
  %v3211 = vpop.f32.mrf.mxu0
  %v3212 = vadd.f32 %v3178, %v3211
  %3213 = vmatmul.bf16.gmra.mxu0 %v2404
  %v3214 = vpop.f32.mrf.mxu0
  %v3215 = vadd.f32 %v3181, %v3214
  %v3216 = vpop.f32.mrf.mxu0
  %v3217 = vadd.f32 %v3183, %v3216
  %3218 = vmatmul.bf16.gmra.mxu0 %v2409
  %v3219 = vpop.f32.mrf.mxu0
  %v3220 = vadd.f32 %v3186, %v3219
  %v3221 = vpop.f32.mrf.mxu0
  %v3222 = vadd.f32 %v3188, %v3221
  %3223 = vmatmul.bf16.gmra.mxu0 %v2414
  %v3224 = vpop.f32.mrf.mxu0
  %v3225 = vadd.f32 %v3191, %v3224
  %v3226 = vpop.f32.mrf.mxu0
  %v3227 = vadd.f32 %v3193, %v3226
  %3228 = vmatmul.bf16.gmra.mxu0 %v2419
  %v3229 = vpop.f32.mrf.mxu0
  %v3230 = vadd.f32 %v3196, %v3229
  %v3231 = vpop.f32.mrf.mxu0
  %v3232 = vadd.f32 %v3198, %v3231
  %3233 = vdwg.mxu0
  %3234 = vmatpush.bf16.msra.mxu0 %v3004
  %3235 = vmatpush.bf16.msra.mxu0 %v3001
  %3236 = vmatpush.bf16.msra.mxu0 %v2998
  %3237 = vmatpush.bf16.msra.mxu0 %v2995
  %3238 = vmatpush.bf16.msra.mxu0 %v2992
  %3239 = vmatpush.bf16.msra.mxu0 %v2989
  %3240 = vmatpush.bf16.msra.mxu0 %v2986
  %3241 = vmatpush.bf16.msra.mxu0 %v2983
  %3242 = vmatmul.bf16.gmra.mxu0 %v2400
  %v3243 = vpop.f32.mrf.mxu0
  %v3244 = vadd.f32 %v3210, %v3243
  %v3245 = vpop.f32.mrf.mxu0
  %v3246 = vadd.f32 %v3212, %v3245
  %3247 = vmatmul.bf16.gmra.mxu0 %v2405
  %v3248 = vpop.f32.mrf.mxu0
  %v3249 = vadd.f32 %v3215, %v3248
  %v3250 = vpop.f32.mrf.mxu0
  %v3251 = vadd.f32 %v3217, %v3250
  %3252 = vmatmul.bf16.gmra.mxu0 %v2410
  %v3253 = vpop.f32.mrf.mxu0
  %v3254 = vadd.f32 %v3220, %v3253
  %v3255 = vpop.f32.mrf.mxu0
  %v3256 = vadd.f32 %v3222, %v3255
  %3257 = vmatmul.bf16.gmra.mxu0 %v2415
  %v3258 = vpop.f32.mrf.mxu0
  %v3259 = vadd.f32 %v3225, %v3258
  %v3260 = vpop.f32.mrf.mxu0
  %v3261 = vadd.f32 %v3227, %v3260
  %3262 = vmatmul.bf16.gmra.mxu0 %v2420
  %v3263 = vpop.f32.mrf.mxu0
  %v3264 = vadd.f32 %v3230, %v3263
  %v3265 = vpop.f32.mrf.mxu0
  %v3266 = vadd.f32 %v3232, %v3265
  %3267 = vdwg.mxu0
  %3268 = vmatpush.bf16.msra.mxu0 %v3028
  %3269 = vmatpush.bf16.msra.mxu0 %v3025
  %3270 = vmatpush.bf16.msra.mxu0 %v3022
  %3271 = vmatpush.bf16.msra.mxu0 %v3019
  %3272 = vmatpush.bf16.msra.mxu0 %v3016
  %3273 = vmatpush.bf16.msra.mxu0 %v3013
  %3274 = vmatpush.bf16.msra.mxu0 %v3010
  %3275 = vmatpush.bf16.msra.mxu0 %v3007
  %3276 = vmatmul.bf16.gmra.mxu0 %v2401
  %v3277 = vpop.f32.mrf.mxu0
  %v3278 = vadd.f32 %v3244, %v3277
  %v3279 = vpop.f32.mrf.mxu0
  %v3280 = vadd.f32 %v3246, %v3279
  %3281 = vmatmul.bf16.gmra.mxu0 %v2406
  %v3282 = vpop.f32.mrf.mxu0
  %v3283 = vadd.f32 %v3249, %v3282
  %v3284 = vpop.f32.mrf.mxu0
  %v3285 = vadd.f32 %v3251, %v3284
  %3286 = vmatmul.bf16.gmra.mxu0 %v2411
  %v3287 = vpop.f32.mrf.mxu0
  %v3288 = vadd.f32 %v3254, %v3287
  %v3289 = vpop.f32.mrf.mxu0
  %v3290 = vadd.f32 %v3256, %v3289
  %3291 = vmatmul.bf16.gmra.mxu0 %v2416
  %v3292 = vpop.f32.mrf.mxu0
  %v3293 = vadd.f32 %v3259, %v3292
  %v3294 = vpop.f32.mrf.mxu0
  %v3295 = vadd.f32 %v3261, %v3294
  %3296 = vmatmul.bf16.gmra.mxu0 %v2421
  %v3297 = vpop.f32.mrf.mxu0
  %v3298 = vadd.f32 %v3264, %v3297
  %v3299 = vpop.f32.mrf.mxu0
  %v3300 = vadd.f32 %v3266, %v3299
  %3301 = vdwg.mxu0
  %3302 = vmatpush.bf16.msra.mxu0 0
  %3303 = vmatpush.bf16.msra.mxu0 0
  %3304 = vmatpush.bf16.msra.mxu0 0
  %3305 = vmatpush.bf16.msra.mxu0 0
  %3306 = vmatpush.bf16.msra.mxu0 %v3040
  %3307 = vmatpush.bf16.msra.mxu0 %v3037
  %3308 = vmatpush.bf16.msra.mxu0 %v3034
  %3309 = vmatpush.bf16.msra.mxu0 %v3031
  %3310 = vmatmul.bf16.gmra.mxu0 %v3152
  %v3311 = vpop.f32.mrf.mxu0
  %v3312 = vadd.f32 %v3278, %v3311
  %v3313 = vpop.f32.mrf.mxu0
  %v3314 = vadd.f32 %v3280, %v3313
  %3315 = vmatmul.bf16.gmra.mxu0 %v3155
  %v3316 = vpop.f32.mrf.mxu0
  %v3317 = vadd.f32 %v3283, %v3316
  %v3318 = vpop.f32.mrf.mxu0
  %v3319 = vadd.f32 %v3285, %v3318
  %3320 = vmatmul.bf16.gmra.mxu0 %v3158
  %v3321 = vpop.f32.mrf.mxu0
  %v3322 = vadd.f32 %v3288, %v3321
  %v3323 = vpop.f32.mrf.mxu0
  %v3324 = vadd.f32 %v3290, %v3323
  %3325 = vmatmul.bf16.gmra.mxu0 %v3161
  %v3326 = vpop.f32.mrf.mxu0
  %v3327 = vadd.f32 %v3293, %v3326
  %v3328 = vpop.f32.mrf.mxu0
  %v3329 = vadd.f32 %v3295, %v3328
  %3330 = vmatmul.bf16.gmra.mxu0 %v3164
  %v3331 = vpop.f32.mrf.mxu0
  %v3332 = vadd.f32 %v3298, %v3331
  %v3333 = vpop.f32.mrf.mxu0
  %v3334 = vadd.f32 %v3300, %v3333
  %3335 = vdwg.mxu0
  %3336 = vmatpush.bf16.msra.mxu0 %v2957
  %3337 = vmatpush.bf16.msra.mxu0 %v2954
  %3338 = vmatpush.bf16.msra.mxu0 %v2951
  %3339 = vmatpush.bf16.msra.mxu0 %v2948
  %3340 = vmatpush.bf16.msra.mxu0 %v2945
  %3341 = vmatpush.bf16.msra.mxu0 %v2942
  %3342 = vmatpush.bf16.msra.mxu0 %v2939
  %3343 = vmatpush.bf16.msra.mxu0 %v2936
  %3344 = vmatmul.bf16.gmra.mxu0 %v2398
  %v3345 = vpop.f32.mrf.mxu0
  %v3346 = vadd.f32 %v2570, %v3345
  %v3347 = vpop.f32.mrf.mxu0
  %v3348 = vadd.f32 %v2570, %v3347
  %3349 = vmatmul.bf16.gmra.mxu0 %v2403
  %v3350 = vpop.f32.mrf.mxu0
  %v3351 = vadd.f32 %v2570, %v3350
  %v3352 = vpop.f32.mrf.mxu0
  %v3353 = vadd.f32 %v2570, %v3352
  %3354 = vmatmul.bf16.gmra.mxu0 %v2408
  %v3355 = vpop.f32.mrf.mxu0
  %v3356 = vadd.f32 %v2570, %v3355
  %v3357 = vpop.f32.mrf.mxu0
  %v3358 = vadd.f32 %v2570, %v3357
  %3359 = vmatmul.bf16.gmra.mxu0 %v2413
  %v3360 = vpop.f32.mrf.mxu0
  %v3361 = vadd.f32 %v2570, %v3360
  %v3362 = vpop.f32.mrf.mxu0
  %v3363 = vadd.f32 %v2570, %v3362
  %3364 = vmatmul.bf16.gmra.mxu0 %v2418
  %v3365 = vpop.f32.mrf.mxu0
  %v3366 = vadd.f32 %v2570, %v3365
  %v3367 = vpop.f32.mrf.mxu0
  %v3368 = vadd.f32 %v2570, %v3367
  %3369 = vdwg.mxu0
  %3370 = vmatpush.bf16.msra.mxu0 %v2981
  %3371 = vmatpush.bf16.msra.mxu0 %v2978
  %3372 = vmatpush.bf16.msra.mxu0 %v2975
  %3373 = vmatpush.bf16.msra.mxu0 %v2972
  %3374 = vmatpush.bf16.msra.mxu0 %v2969
  %3375 = vmatpush.bf16.msra.mxu0 %v2966
  %3376 = vmatpush.bf16.msra.mxu0 %v2963
  %3377 = vmatpush.bf16.msra.mxu0 %v2960
  %3378 = vmatmul.bf16.gmra.mxu0 %v2399
  %v3379 = vpop.f32.mrf.mxu0
  %v3380 = vadd.f32 %v3346, %v3379
  %v3381 = vpop.f32.mrf.mxu0
  %v3382 = vadd.f32 %v3348, %v3381
  %3383 = vmatmul.bf16.gmra.mxu0 %v2404
  %v3384 = vpop.f32.mrf.mxu0
  %v3385 = vadd.f32 %v3351, %v3384
  %v3386 = vpop.f32.mrf.mxu0
  %v3387 = vadd.f32 %v3353, %v3386
  %3388 = vmatmul.bf16.gmra.mxu0 %v2409
  %v3389 = vpop.f32.mrf.mxu0
  %v3390 = vadd.f32 %v3356, %v3389
  %v3391 = vpop.f32.mrf.mxu0
  %v3392 = vadd.f32 %v3358, %v3391
  %3393 = vmatmul.bf16.gmra.mxu0 %v2414
  %v3394 = vpop.f32.mrf.mxu0
  %v3395 = vadd.f32 %v3361, %v3394
  %v3396 = vpop.f32.mrf.mxu0
  %v3397 = vadd.f32 %v3363, %v3396
  %3398 = vmatmul.bf16.gmra.mxu0 %v2419
  %v3399 = vpop.f32.mrf.mxu0
  %v3400 = vadd.f32 %v3366, %v3399
  %v3401 = vpop.f32.mrf.mxu0
  %v3402 = vadd.f32 %v3368, %v3401
  %3403 = vdwg.mxu0
  %3404 = vmatpush.bf16.msra.mxu0 %v3005
  %3405 = vmatpush.bf16.msra.mxu0 %v3002
  %3406 = vmatpush.bf16.msra.mxu0 %v2999
  %3407 = vmatpush.bf16.msra.mxu0 %v2996
  %3408 = vmatpush.bf16.msra.mxu0 %v2993
  %3409 = vmatpush.bf16.msra.mxu0 %v2990
  %3410 = vmatpush.bf16.msra.mxu0 %v2987
  %3411 = vmatpush.bf16.msra.mxu0 %v2984
  %3412 = vmatmul.bf16.gmra.mxu0 %v2400
  %v3413 = vpop.f32.mrf.mxu0
  %v3414 = vadd.f32 %v3380, %v3413
  %v3415 = vpop.f32.mrf.mxu0
  %v3416 = vadd.f32 %v3382, %v3415
  %3417 = vmatmul.bf16.gmra.mxu0 %v2405
  %v3418 = vpop.f32.mrf.mxu0
  %v3419 = vadd.f32 %v3385, %v3418
  %v3420 = vpop.f32.mrf.mxu0
  %v3421 = vadd.f32 %v3387, %v3420
  %3422 = vmatmul.bf16.gmra.mxu0 %v2410
  %v3423 = vpop.f32.mrf.mxu0
  %v3424 = vadd.f32 %v3390, %v3423
  %v3425 = vpop.f32.mrf.mxu0
  %v3426 = vadd.f32 %v3392, %v3425
  %3427 = vmatmul.bf16.gmra.mxu0 %v2415
  %v3428 = vpop.f32.mrf.mxu0
  %v3429 = vadd.f32 %v3395, %v3428
  %v3430 = vpop.f32.mrf.mxu0
  %v3431 = vadd.f32 %v3397, %v3430
  %3432 = vmatmul.bf16.gmra.mxu0 %v2420
  %v3433 = vpop.f32.mrf.mxu0
  %v3434 = vadd.f32 %v3400, %v3433
  %v3435 = vpop.f32.mrf.mxu0
  %v3436 = vadd.f32 %v3402, %v3435
  %3437 = vdwg.mxu0
  %3438 = vmatpush.bf16.msra.mxu0 %v3029
  %3439 = vmatpush.bf16.msra.mxu0 %v3026
  %3440 = vmatpush.bf16.msra.mxu0 %v3023
  %3441 = vmatpush.bf16.msra.mxu0 %v3020
  %3442 = vmatpush.bf16.msra.mxu0 %v3017
  %3443 = vmatpush.bf16.msra.mxu0 %v3014
  %3444 = vmatpush.bf16.msra.mxu0 %v3011
  %3445 = vmatpush.bf16.msra.mxu0 %v3008
  %3446 = vmatmul.bf16.gmra.mxu0 %v2401
  %v3447 = vpop.f32.mrf.mxu0
  %v3448 = vadd.f32 %v3414, %v3447
  %v3449 = vpop.f32.mrf.mxu0
  %v3450 = vadd.f32 %v3416, %v3449
  %3451 = vmatmul.bf16.gmra.mxu0 %v2406
  %v3452 = vpop.f32.mrf.mxu0
  %v3453 = vadd.f32 %v3419, %v3452
  %v3454 = vpop.f32.mrf.mxu0
  %v3455 = vadd.f32 %v3421, %v3454
  %3456 = vmatmul.bf16.gmra.mxu0 %v2411
  %v3457 = vpop.f32.mrf.mxu0
  %v3458 = vadd.f32 %v3424, %v3457
  %v3459 = vpop.f32.mrf.mxu0
  %v3460 = vadd.f32 %v3426, %v3459
  %3461 = vmatmul.bf16.gmra.mxu0 %v2416
  %v3462 = vpop.f32.mrf.mxu0
  %v3463 = vadd.f32 %v3429, %v3462
  %v3464 = vpop.f32.mrf.mxu0
  %v3465 = vadd.f32 %v3431, %v3464
  %3466 = vmatmul.bf16.gmra.mxu0 %v2421
  %v3467 = vpop.f32.mrf.mxu0
  %v3468 = vadd.f32 %v3434, %v3467
  %v3469 = vpop.f32.mrf.mxu0
  %v3470 = vadd.f32 %v3436, %v3469
  %3471 = vdwg.mxu0
  %3472 = vmatpush.bf16.msra.mxu0 0
  %3473 = vmatpush.bf16.msra.mxu0 0
  %3474 = vmatpush.bf16.msra.mxu0 0
  %3475 = vmatpush.bf16.msra.mxu0 0
  %3476 = vmatpush.bf16.msra.mxu0 %v3041
  %3477 = vmatpush.bf16.msra.mxu0 %v3038
  %3478 = vmatpush.bf16.msra.mxu0 %v3035
  %3479 = vmatpush.bf16.msra.mxu0 %v3032
  %3480 = vmatmul.bf16.gmra.mxu0 %v3152
  %v3481 = vpop.f32.mrf.mxu0
  %v3482 = vadd.f32 %v3448, %v3481
  %v3483 = vpop.f32.mrf.mxu0
  %v3484 = vadd.f32 %v3450, %v3483
  %3485 = vmatmul.bf16.gmra.mxu0 %v3155
  %v3486 = vpop.f32.mrf.mxu0
  %v3487 = vadd.f32 %v3453, %v3486
  %v3488 = vpop.f32.mrf.mxu0
  %v3489 = vadd.f32 %v3455, %v3488
  %3490 = vmatmul.bf16.gmra.mxu0 %v3158
  %v3491 = vpop.f32.mrf.mxu0
  %v3492 = vadd.f32 %v3458, %v3491
  %v3493 = vpop.f32.mrf.mxu0
  %v3494 = vadd.f32 %v3460, %v3493
  %3495 = vmatmul.bf16.gmra.mxu0 %v3161
  %v3496 = vpop.f32.mrf.mxu0
  %v3497 = vadd.f32 %v3463, %v3496
  %v3498 = vpop.f32.mrf.mxu0
  %v3499 = vadd.f32 %v3465, %v3498
  %3500 = vmatmul.bf16.gmra.mxu0 %v3164
  %v3501 = vpop.f32.mrf.mxu0
  %v3502 = vadd.f32 %v3468, %v3501
  %v3503 = vpop.f32.mrf.mxu0
  %v3504 = vadd.f32 %v3470, %v3503
  %3505 = vdwg.mxu0
  %3506 = vmatpush.bf16.msra.mxu0 %v2958
  %3507 = vmatpush.bf16.msra.mxu0 %v2955
  %3508 = vmatpush.bf16.msra.mxu0 %v2952
  %3509 = vmatpush.bf16.msra.mxu0 %v2949
  %3510 = vmatpush.bf16.msra.mxu0 %v2946
  %3511 = vmatpush.bf16.msra.mxu0 %v2943
  %3512 = vmatpush.bf16.msra.mxu0 %v2940
  %3513 = vmatpush.bf16.msra.mxu0 %v2937
  %3514 = vmatmul.bf16.gmra.mxu0 %v2398
  %v3515 = vpop.f32.mrf.mxu0
  %v3516 = vadd.f32 %v2571, %v3515
  %v3517 = vpop.f32.mrf.mxu0
  %v3518 = vadd.f32 %v2571, %v3517
  %3519 = vmatmul.bf16.gmra.mxu0 %v2403
  %v3520 = vpop.f32.mrf.mxu0
  %v3521 = vadd.f32 %v2571, %v3520
  %v3522 = vpop.f32.mrf.mxu0
  %v3523 = vadd.f32 %v2571, %v3522
  %3524 = vmatmul.bf16.gmra.mxu0 %v2408
  %v3525 = vpop.f32.mrf.mxu0
  %v3526 = vadd.f32 %v2571, %v3525
  %v3527 = vpop.f32.mrf.mxu0
  %v3528 = vadd.f32 %v2571, %v3527
  %3529 = vmatmul.bf16.gmra.mxu0 %v2413
  %v3530 = vpop.f32.mrf.mxu0
  %v3531 = vadd.f32 %v2571, %v3530
  %v3532 = vpop.f32.mrf.mxu0
  %v3533 = vadd.f32 %v2571, %v3532
  %3534 = vmatmul.bf16.gmra.mxu0 %v2418
  %v3535 = vpop.f32.mrf.mxu0
  %v3536 = vadd.f32 %v2571, %v3535
  %v3537 = vpop.f32.mrf.mxu0
  %v3538 = vadd.f32 %v2571, %v3537
  %3539 = vdwg.mxu0
  %3540 = vmatpush.bf16.msra.mxu0 %v2982
  %3541 = vmatpush.bf16.msra.mxu0 %v2979
  %3542 = vmatpush.bf16.msra.mxu0 %v2976
  %3543 = vmatpush.bf16.msra.mxu0 %v2973
  %3544 = vmatpush.bf16.msra.mxu0 %v2970
  %3545 = vmatpush.bf16.msra.mxu0 %v2967
  %3546 = vmatpush.bf16.msra.mxu0 %v2964
  %3547 = vmatpush.bf16.msra.mxu0 %v2961
  %3548 = vmatmul.bf16.gmra.mxu0 %v2399
  %v3549 = vpop.f32.mrf.mxu0
  %v3550 = vadd.f32 %v3516, %v3549
  %v3551 = vpop.f32.mrf.mxu0
  %v3552 = vadd.f32 %v3518, %v3551
  %3553 = vmatmul.bf16.gmra.mxu0 %v2404
  %v3554 = vpop.f32.mrf.mxu0
  %v3555 = vadd.f32 %v3521, %v3554
  %v3556 = vpop.f32.mrf.mxu0
  %v3557 = vadd.f32 %v3523, %v3556
  %3558 = vmatmul.bf16.gmra.mxu0 %v2409
  %v3559 = vpop.f32.mrf.mxu0
  %v3560 = vadd.f32 %v3526, %v3559
  %v3561 = vpop.f32.mrf.mxu0
  %v3562 = vadd.f32 %v3528, %v3561
  %3563 = vmatmul.bf16.gmra.mxu0 %v2414
  %v3564 = vpop.f32.mrf.mxu0
  %v3565 = vadd.f32 %v3531, %v3564
  %v3566 = vpop.f32.mrf.mxu0
  %v3567 = vadd.f32 %v3533, %v3566
  %3568 = vmatmul.bf16.gmra.mxu0 %v2419
  %v3569 = vpop.f32.mrf.mxu0
  %v3570 = vadd.f32 %v3536, %v3569
  %v3571 = vpop.f32.mrf.mxu0
  %v3572 = vadd.f32 %v3538, %v3571
  %3573 = vdwg.mxu0
  %3574 = vmatpush.bf16.msra.mxu0 %v3006
  %3575 = vmatpush.bf16.msra.mxu0 %v3003
  %3576 = vmatpush.bf16.msra.mxu0 %v3000
  %3577 = vmatpush.bf16.msra.mxu0 %v2997
  %3578 = vmatpush.bf16.msra.mxu0 %v2994
  %3579 = vmatpush.bf16.msra.mxu0 %v2991
  %3580 = vmatpush.bf16.msra.mxu0 %v2988
  %3581 = vmatpush.bf16.msra.mxu0 %v2985
  %3582 = vmatmul.bf16.gmra.mxu0 %v2400
  %v3583 = vpop.f32.mrf.mxu0
  %v3584 = vadd.f32 %v3550, %v3583
  %v3585 = vpop.f32.mrf.mxu0
  %v3586 = vadd.f32 %v3552, %v3585
  %3587 = vmatmul.bf16.gmra.mxu0 %v2405
  %v3588 = vpop.f32.mrf.mxu0
  %v3589 = vadd.f32 %v3555, %v3588
  %v3590 = vpop.f32.mrf.mxu0
  %v3591 = vadd.f32 %v3557, %v3590
  %3592 = vmatmul.bf16.gmra.mxu0 %v2410
  %v3593 = vpop.f32.mrf.mxu0
  %v3594 = vadd.f32 %v3560, %v3593
  %v3595 = vpop.f32.mrf.mxu0
  %v3596 = vadd.f32 %v3562, %v3595
  %3597 = vmatmul.bf16.gmra.mxu0 %v2415
  %v3598 = vpop.f32.mrf.mxu0
  %v3599 = vadd.f32 %v3565, %v3598
  %v3600 = vpop.f32.mrf.mxu0
  %v3601 = vadd.f32 %v3567, %v3600
  %3602 = vmatmul.bf16.gmra.mxu0 %v2420
  %v3603 = vpop.f32.mrf.mxu0
  %v3604 = vadd.f32 %v3570, %v3603
  %v3605 = vpop.f32.mrf.mxu0
  %v3606 = vadd.f32 %v3572, %v3605
  %3607 = vdwg.mxu0
  %3608 = vmatpush.bf16.msra.mxu0 %v3030
  %3609 = vmatpush.bf16.msra.mxu0 %v3027
  %3610 = vmatpush.bf16.msra.mxu0 %v3024
  %3611 = vmatpush.bf16.msra.mxu0 %v3021
  %3612 = vmatpush.bf16.msra.mxu0 %v3018
  %3613 = vmatpush.bf16.msra.mxu0 %v3015
  %3614 = vmatpush.bf16.msra.mxu0 %v3012
  %3615 = vmatpush.bf16.msra.mxu0 %v3009
  %3616 = vmatmul.bf16.gmra.mxu0 %v2401
  %v3617 = vpop.f32.mrf.mxu0
  %v3618 = vadd.f32 %v3584, %v3617
  %v3619 = vpop.f32.mrf.mxu0
  %v3620 = vadd.f32 %v3586, %v3619
  %3621 = vmatmul.bf16.gmra.mxu0 %v2406
  %v3622 = vpop.f32.mrf.mxu0
  %v3623 = vadd.f32 %v3589, %v3622
  %v3624 = vpop.f32.mrf.mxu0
  %v3625 = vadd.f32 %v3591, %v3624
  %3626 = vmatmul.bf16.gmra.mxu0 %v2411
  %v3627 = vpop.f32.mrf.mxu0
  %v3628 = vadd.f32 %v3594, %v3627
  %v3629 = vpop.f32.mrf.mxu0
  %v3630 = vadd.f32 %v3596, %v3629
  %3631 = vmatmul.bf16.gmra.mxu0 %v2416
  %v3632 = vpop.f32.mrf.mxu0
  %v3633 = vadd.f32 %v3599, %v3632
  %v3634 = vpop.f32.mrf.mxu0
  %v3635 = vadd.f32 %v3601, %v3634
  %3636 = vmatmul.bf16.gmra.mxu0 %v2421
  %v3637 = vpop.f32.mrf.mxu0
  %v3638 = vadd.f32 %v3604, %v3637
  %v3639 = vpop.f32.mrf.mxu0
  %v3640 = vadd.f32 %v3606, %v3639
  %3641 = vdwg.mxu0
  %3642 = vmatpush.bf16.msra.mxu0 0
  %3643 = vmatpush.bf16.msra.mxu0 0
  %3644 = vmatpush.bf16.msra.mxu0 0
  %3645 = vmatpush.bf16.msra.mxu0 0
  %3646 = vmatpush.bf16.msra.mxu0 %v3042
  %3647 = vmatpush.bf16.msra.mxu0 %v3039
  %3648 = vmatpush.bf16.msra.mxu0 %v3036
  %3649 = vmatpush.bf16.msra.mxu0 %v3033
  %3650 = vmatmul.bf16.gmra.mxu0 %v3152
  %v3651 = vpop.f32.mrf.mxu0
  %v3652 = vadd.f32 %v3618, %v3651
  %v3653 = vpop.f32.mrf.mxu0
  %v3654 = vadd.f32 %v3620, %v3653
  %3655 = vmatmul.bf16.gmra.mxu0 %v3155
  %v3656 = vpop.f32.mrf.mxu0
  %v3657 = vadd.f32 %v3623, %v3656
  %v3658 = vpop.f32.mrf.mxu0
  %v3659 = vadd.f32 %v3625, %v3658
  %3660 = vmatmul.bf16.gmra.mxu0 %v3158
  %v3661 = vpop.f32.mrf.mxu0
  %v3662 = vadd.f32 %v3628, %v3661
  %v3663 = vpop.f32.mrf.mxu0
  %v3664 = vadd.f32 %v3630, %v3663
  %3665 = vmatmul.bf16.gmra.mxu0 %v3161
  %v3666 = vpop.f32.mrf.mxu0
  %v3667 = vadd.f32 %v3633, %v3666
  %v3668 = vpop.f32.mrf.mxu0
  %v3669 = vadd.f32 %v3635, %v3668
  %3670 = vmatmul.bf16.gmra.mxu0 %v3164
  %v3671 = vpop.f32.mrf.mxu0
  %v3672 = vadd.f32 %v3638, %v3671
  %v3673 = vpop.f32.mrf.mxu0
  %v3674 = vadd.f32 %v3640, %v3673
  %3675 = vdwg.mxu0
  %v3676 = vxor.u32 %v3312, 2147483648
  %v3677 = vxor.u32 %v3482, 2147483648
  %v3678 = vxor.u32 %v3652, 2147483648
  %v3679 = vxor.u32 %v3314, 2147483648
  %v3680 = vxor.u32 %v3484, 2147483648
  %v3681 = vxor.u32 %v3654, 2147483648
  %v3682 = vxor.u32 %v3317, 2147483648
  %v3683 = vxor.u32 %v3487, 2147483648
  %v3684 = vxor.u32 %v3657, 2147483648
  %v3685 = vxor.u32 %v3319, 2147483648
  %v3686 = vxor.u32 %v3489, 2147483648
  %v3687 = vxor.u32 %v3659, 2147483648
  %v3688 = vxor.u32 %v3322, 2147483648
  %v3689 = vxor.u32 %v3492, 2147483648
  %v3690 = vxor.u32 %v3662, 2147483648
  %v3691 = vxor.u32 %v3324, 2147483648
  %v3692 = vxor.u32 %v3494, 2147483648
  %v3693 = vxor.u32 %v3664, 2147483648
  %v3694 = vxor.u32 %v3327, 2147483648
  %v3695 = vxor.u32 %v3497, 2147483648
  %v3696 = vxor.u32 %v3667, 2147483648
  %v3697 = vxor.u32 %v3329, 2147483648
  %v3698 = vxor.u32 %v3499, 2147483648
  %v3699 = vxor.u32 %v3669, 2147483648
  %v3700 = vxor.u32 %v3332, 2147483648
  %v3701 = vxor.u32 %v3502, 2147483648
  %v3702 = vxor.u32 %v3672, 2147483648
  %v3703 = vxor.u32 %v3334, 2147483648
  %v3704 = vxor.u32 %v3504, 2147483648
  %v3705 = vxor.u32 %v3674, 2147483648
  %v3706 = vmul.f32 %v3676, 1.442695
  %v3707 = vpow.pop %v3706
  %v3708 = vmul.f32 %v3677, 1.442695
  %v3709 = vpow.pop %v3708
  %v3710 = vmul.f32 %v3678, 1.442695
  %v3711 = vpow.pop %v3710
  %v3712 = vmul.f32 %v3679, 1.442695
  %v3713 = vpow.pop %v3712
  %v3714 = vmul.f32 %v3680, 1.442695
  %v3715 = vpow.pop %v3714
  %v3716 = vmul.f32 %v3681, 1.442695
  %v3717 = vpow.pop %v3716
  %v3718 = vmul.f32 %v3682, 1.442695
  %v3719 = vpow.pop %v3718
  %v3720 = vmul.f32 %v3683, 1.442695
  %v3721 = vpow.pop %v3720
  %v3722 = vmul.f32 %v3684, 1.442695
  %v3723 = vpow.pop %v3722
  %v3724 = vmul.f32 %v3685, 1.442695
  %v3725 = vpow.pop %v3724
  %v3726 = vmul.f32 %v3686, 1.442695
  %v3727 = vpow.pop %v3726
  %v3728 = vmul.f32 %v3687, 1.442695
  %v3729 = vpow.pop %v3728
  %v3730 = vmul.f32 %v3688, 1.442695
  %v3731 = vpow.pop %v3730
  %v3732 = vmul.f32 %v3689, 1.442695
  %v3733 = vpow.pop %v3732
  %v3734 = vmul.f32 %v3690, 1.442695
  %v3735 = vpow.pop %v3734
  %v3736 = vmul.f32 %v3691, 1.442695
  %v3737 = vpow.pop %v3736
  %v3738 = vmul.f32 %v3692, 1.442695
  %v3739 = vpow.pop %v3738
  %v3740 = vmul.f32 %v3693, 1.442695
  %v3741 = vpow.pop %v3740
  %v3742 = vmul.f32 %v3694, 1.442695
  %v3743 = vpow.pop %v3742
  %v3744 = vmul.f32 %v3695, 1.442695
  %v3745 = vpow.pop %v3744
  %v3746 = vmul.f32 %v3696, 1.442695
  %v3747 = vpow.pop %v3746
  %v3748 = vmul.f32 %v3697, 1.442695
  %v3749 = vpow.pop %v3748
  %v3750 = vmul.f32 %v3698, 1.442695
  %v3751 = vpow.pop %v3750
  %v3752 = vmul.f32 %v3699, 1.442695
  %v3753 = vpow.pop %v3752
  %v3754 = vmul.f32 %v3700, 1.442695
  %v3755 = vpow.pop %v3754
  %v3756 = vmul.f32 %v3701, 1.442695
  %v3757 = vpow.pop %v3756
  %v3758 = vmul.f32 %v3702, 1.442695
  %v3759 = vpow.pop %v3758
  %v3760 = vmul.f32 %v3703, 1.442695
  %v3761 = vpow.pop %v3760
  %v3762 = vmul.f32 %v3704, 1.442695
  %v3763 = vpow.pop %v3762
  %v3764 = vmul.f32 %v3705, 1.442695
  %v3765 = vpow.pop %v3764
  %v3766 = vadd.f32 %v3707, 1.0
  %v3767 = vadd.f32 %v3709, 1.0
  %v3768 = vadd.f32 %v3711, 1.0
  %v3769 = vadd.f32 %v3713, 1.0
  %v3770 = vadd.f32 %v3715, 1.0
  %v3771 = vadd.f32 %v3717, 1.0
  %v3772 = vadd.f32 %v3719, 1.0
  %v3773 = vadd.f32 %v3721, 1.0
  %v3774 = vadd.f32 %v3723, 1.0
  %v3775 = vadd.f32 %v3725, 1.0
  %v3776 = vadd.f32 %v3727, 1.0
  %v3777 = vadd.f32 %v3729, 1.0
  %v3778 = vadd.f32 %v3731, 1.0
  %v3779 = vadd.f32 %v3733, 1.0
  %v3780 = vadd.f32 %v3735, 1.0
  %v3781 = vadd.f32 %v3737, 1.0
  %v3782 = vadd.f32 %v3739, 1.0
  %v3783 = vadd.f32 %v3741, 1.0
  %v3784 = vadd.f32 %v3743, 1.0
  %v3785 = vadd.f32 %v3745, 1.0
  %v3786 = vadd.f32 %v3747, 1.0
  %v3787 = vadd.f32 %v3749, 1.0
  %v3788 = vadd.f32 %v3751, 1.0
  %v3789 = vadd.f32 %v3753, 1.0
  %v3790 = vadd.f32 %v3755, 1.0
  %v3791 = vadd.f32 %v3757, 1.0
  %v3792 = vadd.f32 %v3759, 1.0
  %v3793 = vadd.f32 %v3761, 1.0
  %v3794 = vadd.f32 %v3763, 1.0
  %v3795 = vadd.f32 %v3765, 1.0
  %v3796 = vrcp.pop %v3766
  %v3797 = vmul.f32 %v3766, %v3796
  %v3798 = vsub.f32 1.0, %v3797
  %v3799 = vmul.f32 %v3796, %v3798
  %v3800 = vadd.f32 %v3796, %v3799
  %vm3801 = vweird.f32 %v3766
  %vm3802 = vweird.f32 %v3796
  %vm3803 = vmor %vm3801, %vm3802
  %v3804 = vsel %vm3803, %v3796, %v3800
  %v3805 = vand.u32 2147483647, %v3766
  %vm3806 = vcmp.eq.f32.partialorder %v3805, 8.507059e+37
  %v3807 = vand.u32 %v3766, 2147483648
  %v3808 = vor.u32 1.1754944e-38, %v3807
  %v3809 = vsel %vm3806, %v3808, %v3804
  %v3810 = vmul.f32 1.0, %v3809
  %v3811 = vrcp.pop %v3767
  %v3812 = vmul.f32 %v3767, %v3811
  %v3813 = vsub.f32 1.0, %v3812
  %v3814 = vmul.f32 %v3811, %v3813
  %v3815 = vadd.f32 %v3811, %v3814
  %vm3816 = vweird.f32 %v3767
  %vm3817 = vweird.f32 %v3811
  %vm3818 = vmor %vm3816, %vm3817
  %v3819 = vsel %vm3818, %v3811, %v3815
  %v3820 = vand.u32 2147483647, %v3767
  %vm3821 = vcmp.eq.f32.partialorder %v3820, 8.507059e+37
  %v3822 = vand.u32 %v3767, 2147483648
  %v3823 = vor.u32 1.1754944e-38, %v3822
  %v3824 = vsel %vm3821, %v3823, %v3819
  %v3825 = vmul.f32 1.0, %v3824
  %v3826 = vrcp.pop %v3768
  %v3827 = vmul.f32 %v3768, %v3826
  %v3828 = vsub.f32 1.0, %v3827
  %v3829 = vmul.f32 %v3826, %v3828
  %v3830 = vadd.f32 %v3826, %v3829
  %vm3831 = vweird.f32 %v3768
  %vm3832 = vweird.f32 %v3826
  %vm3833 = vmor %vm3831, %vm3832
  %v3834 = vsel %vm3833, %v3826, %v3830
  %v3835 = vand.u32 2147483647, %v3768
  %vm3836 = vcmp.eq.f32.partialorder %v3835, 8.507059e+37
  %v3837 = vand.u32 %v3768, 2147483648
  %v3838 = vor.u32 1.1754944e-38, %v3837
  %v3839 = vsel %vm3836, %v3838, %v3834
  %v3840 = vmul.f32 1.0, %v3839
  %v3841 = vrcp.pop %v3769
  %v3842 = vmul.f32 %v3769, %v3841
  %v3843 = vsub.f32 1.0, %v3842
  %v3844 = vmul.f32 %v3841, %v3843
  %v3845 = vadd.f32 %v3841, %v3844
  %vm3846 = vweird.f32 %v3769
  %vm3847 = vweird.f32 %v3841
  %vm3848 = vmor %vm3846, %vm3847
  %v3849 = vsel %vm3848, %v3841, %v3845
  %v3850 = vand.u32 2147483647, %v3769
  %vm3851 = vcmp.eq.f32.partialorder %v3850, 8.507059e+37
  %v3852 = vand.u32 %v3769, 2147483648
  %v3853 = vor.u32 1.1754944e-38, %v3852
  %v3854 = vsel %vm3851, %v3853, %v3849
  %v3855 = vmul.f32 1.0, %v3854
  %v3856 = vrcp.pop %v3770
  %v3857 = vmul.f32 %v3770, %v3856
  %v3858 = vsub.f32 1.0, %v3857
  %v3859 = vmul.f32 %v3856, %v3858
  %v3860 = vadd.f32 %v3856, %v3859
  %vm3861 = vweird.f32 %v3770
  %vm3862 = vweird.f32 %v3856
  %vm3863 = vmor %vm3861, %vm3862
  %v3864 = vsel %vm3863, %v3856, %v3860
  %v3865 = vand.u32 2147483647, %v3770
  %vm3866 = vcmp.eq.f32.partialorder %v3865, 8.507059e+37
  %v3867 = vand.u32 %v3770, 2147483648
  %v3868 = vor.u32 1.1754944e-38, %v3867
  %v3869 = vsel %vm3866, %v3868, %v3864
  %v3870 = vmul.f32 1.0, %v3869
  %v3871 = vrcp.pop %v3771
  %v3872 = vmul.f32 %v3771, %v3871
  %v3873 = vsub.f32 1.0, %v3872
  %v3874 = vmul.f32 %v3871, %v3873
  %v3875 = vadd.f32 %v3871, %v3874
  %vm3876 = vweird.f32 %v3771
  %vm3877 = vweird.f32 %v3871
  %vm3878 = vmor %vm3876, %vm3877
  %v3879 = vsel %vm3878, %v3871, %v3875
  %v3880 = vand.u32 2147483647, %v3771
  %vm3881 = vcmp.eq.f32.partialorder %v3880, 8.507059e+37
  %v3882 = vand.u32 %v3771, 2147483648
  %v3883 = vor.u32 1.1754944e-38, %v3882
  %v3884 = vsel %vm3881, %v3883, %v3879
  %v3885 = vmul.f32 1.0, %v3884
  %v3886 = vrcp.pop %v3772
  %v3887 = vmul.f32 %v3772, %v3886
  %v3888 = vsub.f32 1.0, %v3887
  %v3889 = vmul.f32 %v3886, %v3888
  %v3890 = vadd.f32 %v3886, %v3889
  %vm3891 = vweird.f32 %v3772
  %vm3892 = vweird.f32 %v3886
  %vm3893 = vmor %vm3891, %vm3892
  %v3894 = vsel %vm3893, %v3886, %v3890
  %v3895 = vand.u32 2147483647, %v3772
  %vm3896 = vcmp.eq.f32.partialorder %v3895, 8.507059e+37
  %v3897 = vand.u32 %v3772, 2147483648
  %v3898 = vor.u32 1.1754944e-38, %v3897
  %v3899 = vsel %vm3896, %v3898, %v3894
  %v3900 = vmul.f32 1.0, %v3899
  %v3901 = vrcp.pop %v3773
  %v3902 = vmul.f32 %v3773, %v3901
  %v3903 = vsub.f32 1.0, %v3902
  %v3904 = vmul.f32 %v3901, %v3903
  %v3905 = vadd.f32 %v3901, %v3904
  %vm3906 = vweird.f32 %v3773
  %vm3907 = vweird.f32 %v3901
  %vm3908 = vmor %vm3906, %vm3907
  %v3909 = vsel %vm3908, %v3901, %v3905
  %v3910 = vand.u32 2147483647, %v3773
  %vm3911 = vcmp.eq.f32.partialorder %v3910, 8.507059e+37
  %v3912 = vand.u32 %v3773, 2147483648
  %v3913 = vor.u32 1.1754944e-38, %v3912
  %v3914 = vsel %vm3911, %v3913, %v3909
  %v3915 = vmul.f32 1.0, %v3914
  %v3916 = vrcp.pop %v3774
  %v3917 = vmul.f32 %v3774, %v3916
  %v3918 = vsub.f32 1.0, %v3917
  %v3919 = vmul.f32 %v3916, %v3918
  %v3920 = vadd.f32 %v3916, %v3919
  %vm3921 = vweird.f32 %v3774
  %vm3922 = vweird.f32 %v3916
  %vm3923 = vmor %vm3921, %vm3922
  %v3924 = vsel %vm3923, %v3916, %v3920
  %v3925 = vand.u32 2147483647, %v3774
  %vm3926 = vcmp.eq.f32.partialorder %v3925, 8.507059e+37
  %v3927 = vand.u32 %v3774, 2147483648
  %v3928 = vor.u32 1.1754944e-38, %v3927
  %v3929 = vsel %vm3926, %v3928, %v3924
  %v3930 = vmul.f32 1.0, %v3929
  %v3931 = vrcp.pop %v3775
  %v3932 = vmul.f32 %v3775, %v3931
  %v3933 = vsub.f32 1.0, %v3932
  %v3934 = vmul.f32 %v3931, %v3933
  %v3935 = vadd.f32 %v3931, %v3934
  %vm3936 = vweird.f32 %v3775
  %vm3937 = vweird.f32 %v3931
  %vm3938 = vmor %vm3936, %vm3937
  %v3939 = vsel %vm3938, %v3931, %v3935
  %v3940 = vand.u32 2147483647, %v3775
  %vm3941 = vcmp.eq.f32.partialorder %v3940, 8.507059e+37
  %v3942 = vand.u32 %v3775, 2147483648
  %v3943 = vor.u32 1.1754944e-38, %v3942
  %v3944 = vsel %vm3941, %v3943, %v3939
  %v3945 = vmul.f32 1.0, %v3944
  %v3946 = vrcp.pop %v3776
  %v3947 = vmul.f32 %v3776, %v3946
  %v3948 = vsub.f32 1.0, %v3947
  %v3949 = vmul.f32 %v3946, %v3948
  %v3950 = vadd.f32 %v3946, %v3949
  %vm3951 = vweird.f32 %v3776
  %vm3952 = vweird.f32 %v3946
  %vm3953 = vmor %vm3951, %vm3952
  %v3954 = vsel %vm3953, %v3946, %v3950
  %v3955 = vand.u32 2147483647, %v3776
  %vm3956 = vcmp.eq.f32.partialorder %v3955, 8.507059e+37
  %v3957 = vand.u32 %v3776, 2147483648
  %v3958 = vor.u32 1.1754944e-38, %v3957
  %v3959 = vsel %vm3956, %v3958, %v3954
  %v3960 = vmul.f32 1.0, %v3959
  %v3961 = vrcp.pop %v3777
  %v3962 = vmul.f32 %v3777, %v3961
  %v3963 = vsub.f32 1.0, %v3962
  %v3964 = vmul.f32 %v3961, %v3963
  %v3965 = vadd.f32 %v3961, %v3964
  %vm3966 = vweird.f32 %v3777
  %vm3967 = vweird.f32 %v3961
  %vm3968 = vmor %vm3966, %vm3967
  %v3969 = vsel %vm3968, %v3961, %v3965
  %v3970 = vand.u32 2147483647, %v3777
  %vm3971 = vcmp.eq.f32.partialorder %v3970, 8.507059e+37
  %v3972 = vand.u32 %v3777, 2147483648
  %v3973 = vor.u32 1.1754944e-38, %v3972
  %v3974 = vsel %vm3971, %v3973, %v3969
  %v3975 = vmul.f32 1.0, %v3974
  %v3976 = vrcp.pop %v3778
  %v3977 = vmul.f32 %v3778, %v3976
  %v3978 = vsub.f32 1.0, %v3977
  %v3979 = vmul.f32 %v3976, %v3978
  %v3980 = vadd.f32 %v3976, %v3979
  %vm3981 = vweird.f32 %v3778
  %vm3982 = vweird.f32 %v3976
  %vm3983 = vmor %vm3981, %vm3982
  %v3984 = vsel %vm3983, %v3976, %v3980
  %v3985 = vand.u32 2147483647, %v3778
  %vm3986 = vcmp.eq.f32.partialorder %v3985, 8.507059e+37
  %v3987 = vand.u32 %v3778, 2147483648
  %v3988 = vor.u32 1.1754944e-38, %v3987
  %v3989 = vsel %vm3986, %v3988, %v3984
  %v3990 = vmul.f32 1.0, %v3989
  %v3991 = vrcp.pop %v3779
  %v3992 = vmul.f32 %v3779, %v3991
  %v3993 = vsub.f32 1.0, %v3992
  %v3994 = vmul.f32 %v3991, %v3993
  %v3995 = vadd.f32 %v3991, %v3994
  %vm3996 = vweird.f32 %v3779
  %vm3997 = vweird.f32 %v3991
  %vm3998 = vmor %vm3996, %vm3997
  %v3999 = vsel %vm3998, %v3991, %v3995
  %v4000 = vand.u32 2147483647, %v3779
  %vm4001 = vcmp.eq.f32.partialorder %v4000, 8.507059e+37
  %v4002 = vand.u32 %v3779, 2147483648
  %v4003 = vor.u32 1.1754944e-38, %v4002
  %v4004 = vsel %vm4001, %v4003, %v3999
  %v4005 = vmul.f32 1.0, %v4004
  %v4006 = vrcp.pop %v3780
  %v4007 = vmul.f32 %v3780, %v4006
  %v4008 = vsub.f32 1.0, %v4007
  %v4009 = vmul.f32 %v4006, %v4008
  %v4010 = vadd.f32 %v4006, %v4009
  %vm4011 = vweird.f32 %v3780
  %vm4012 = vweird.f32 %v4006
  %vm4013 = vmor %vm4011, %vm4012
  %v4014 = vsel %vm4013, %v4006, %v4010
  %v4015 = vand.u32 2147483647, %v3780
  %vm4016 = vcmp.eq.f32.partialorder %v4015, 8.507059e+37
  %v4017 = vand.u32 %v3780, 2147483648
  %v4018 = vor.u32 1.1754944e-38, %v4017
  %v4019 = vsel %vm4016, %v4018, %v4014
  %v4020 = vmul.f32 1.0, %v4019
  %v4021 = vrcp.pop %v3781
  %v4022 = vmul.f32 %v3781, %v4021
  %v4023 = vsub.f32 1.0, %v4022
  %v4024 = vmul.f32 %v4021, %v4023
  %v4025 = vadd.f32 %v4021, %v4024
  %vm4026 = vweird.f32 %v3781
  %vm4027 = vweird.f32 %v4021
  %vm4028 = vmor %vm4026, %vm4027
  %v4029 = vsel %vm4028, %v4021, %v4025
  %v4030 = vand.u32 2147483647, %v3781
  %vm4031 = vcmp.eq.f32.partialorder %v4030, 8.507059e+37
  %v4032 = vand.u32 %v3781, 2147483648
  %v4033 = vor.u32 1.1754944e-38, %v4032
  %v4034 = vsel %vm4031, %v4033, %v4029
  %v4035 = vmul.f32 1.0, %v4034
  %v4036 = vrcp.pop %v3782
  %v4037 = vmul.f32 %v3782, %v4036
  %v4038 = vsub.f32 1.0, %v4037
  %v4039 = vmul.f32 %v4036, %v4038
  %v4040 = vadd.f32 %v4036, %v4039
  %vm4041 = vweird.f32 %v3782
  %vm4042 = vweird.f32 %v4036
  %vm4043 = vmor %vm4041, %vm4042
  %v4044 = vsel %vm4043, %v4036, %v4040
  %v4045 = vand.u32 2147483647, %v3782
  %vm4046 = vcmp.eq.f32.partialorder %v4045, 8.507059e+37
  %v4047 = vand.u32 %v3782, 2147483648
  %v4048 = vor.u32 1.1754944e-38, %v4047
  %v4049 = vsel %vm4046, %v4048, %v4044
  %v4050 = vmul.f32 1.0, %v4049
  %v4051 = vrcp.pop %v3783
  %v4052 = vmul.f32 %v3783, %v4051
  %v4053 = vsub.f32 1.0, %v4052
  %v4054 = vmul.f32 %v4051, %v4053
  %v4055 = vadd.f32 %v4051, %v4054
  %vm4056 = vweird.f32 %v3783
  %vm4057 = vweird.f32 %v4051
  %vm4058 = vmor %vm4056, %vm4057
  %v4059 = vsel %vm4058, %v4051, %v4055
  %v4060 = vand.u32 2147483647, %v3783
  %vm4061 = vcmp.eq.f32.partialorder %v4060, 8.507059e+37
  %v4062 = vand.u32 %v3783, 2147483648
  %v4063 = vor.u32 1.1754944e-38, %v4062
  %v4064 = vsel %vm4061, %v4063, %v4059
  %v4065 = vmul.f32 1.0, %v4064
  %v4066 = vrcp.pop %v3784
  %v4067 = vmul.f32 %v3784, %v4066
  %v4068 = vsub.f32 1.0, %v4067
  %v4069 = vmul.f32 %v4066, %v4068
  %v4070 = vadd.f32 %v4066, %v4069
  %vm4071 = vweird.f32 %v3784
  %vm4072 = vweird.f32 %v4066
  %vm4073 = vmor %vm4071, %vm4072
  %v4074 = vsel %vm4073, %v4066, %v4070
  %v4075 = vand.u32 2147483647, %v3784
  %vm4076 = vcmp.eq.f32.partialorder %v4075, 8.507059e+37
  %v4077 = vand.u32 %v3784, 2147483648
  %v4078 = vor.u32 1.1754944e-38, %v4077
  %v4079 = vsel %vm4076, %v4078, %v4074
  %v4080 = vmul.f32 1.0, %v4079
  %v4081 = vrcp.pop %v3785
  %v4082 = vmul.f32 %v3785, %v4081
  %v4083 = vsub.f32 1.0, %v4082
  %v4084 = vmul.f32 %v4081, %v4083
  %v4085 = vadd.f32 %v4081, %v4084
  %vm4086 = vweird.f32 %v3785
  %vm4087 = vweird.f32 %v4081
  %vm4088 = vmor %vm4086, %vm4087
  %v4089 = vsel %vm4088, %v4081, %v4085
  %v4090 = vand.u32 2147483647, %v3785
  %vm4091 = vcmp.eq.f32.partialorder %v4090, 8.507059e+37
  %v4092 = vand.u32 %v3785, 2147483648
  %v4093 = vor.u32 1.1754944e-38, %v4092
  %v4094 = vsel %vm4091, %v4093, %v4089
  %v4095 = vmul.f32 1.0, %v4094
  %v4096 = vrcp.pop %v3786
  %v4097 = vmul.f32 %v3786, %v4096
  %v4098 = vsub.f32 1.0, %v4097
  %v4099 = vmul.f32 %v4096, %v4098
  %v4100 = vadd.f32 %v4096, %v4099
  %vm4101 = vweird.f32 %v3786
  %vm4102 = vweird.f32 %v4096
  %vm4103 = vmor %vm4101, %vm4102
  %v4104 = vsel %vm4103, %v4096, %v4100
  %v4105 = vand.u32 2147483647, %v3786
  %vm4106 = vcmp.eq.f32.partialorder %v4105, 8.507059e+37
  %v4107 = vand.u32 %v3786, 2147483648
  %v4108 = vor.u32 1.1754944e-38, %v4107
  %v4109 = vsel %vm4106, %v4108, %v4104
  %v4110 = vmul.f32 1.0, %v4109
  %v4111 = vrcp.pop %v3787
  %v4112 = vmul.f32 %v3787, %v4111
  %v4113 = vsub.f32 1.0, %v4112
  %v4114 = vmul.f32 %v4111, %v4113
  %v4115 = vadd.f32 %v4111, %v4114
  %vm4116 = vweird.f32 %v3787
  %vm4117 = vweird.f32 %v4111
  %vm4118 = vmor %vm4116, %vm4117
  %v4119 = vsel %vm4118, %v4111, %v4115
  %v4120 = vand.u32 2147483647, %v3787
  %vm4121 = vcmp.eq.f32.partialorder %v4120, 8.507059e+37
  %v4122 = vand.u32 %v3787, 2147483648
  %v4123 = vor.u32 1.1754944e-38, %v4122
  %v4124 = vsel %vm4121, %v4123, %v4119
  %v4125 = vmul.f32 1.0, %v4124
  %v4126 = vrcp.pop %v3788
  %v4127 = vmul.f32 %v3788, %v4126
  %v4128 = vsub.f32 1.0, %v4127
  %v4129 = vmul.f32 %v4126, %v4128
  %v4130 = vadd.f32 %v4126, %v4129
  %vm4131 = vweird.f32 %v3788
  %vm4132 = vweird.f32 %v4126
  %vm4133 = vmor %vm4131, %vm4132
  %v4134 = vsel %vm4133, %v4126, %v4130
  %v4135 = vand.u32 2147483647, %v3788
  %vm4136 = vcmp.eq.f32.partialorder %v4135, 8.507059e+37
  %v4137 = vand.u32 %v3788, 2147483648
  %v4138 = vor.u32 1.1754944e-38, %v4137
  %v4139 = vsel %vm4136, %v4138, %v4134
  %v4140 = vmul.f32 1.0, %v4139
  %v4141 = vrcp.pop %v3789
  %v4142 = vmul.f32 %v3789, %v4141
  %v4143 = vsub.f32 1.0, %v4142
  %v4144 = vmul.f32 %v4141, %v4143
  %v4145 = vadd.f32 %v4141, %v4144
  %vm4146 = vweird.f32 %v3789
  %vm4147 = vweird.f32 %v4141
  %vm4148 = vmor %vm4146, %vm4147
  %v4149 = vsel %vm4148, %v4141, %v4145
  %v4150 = vand.u32 2147483647, %v3789
  %vm4151 = vcmp.eq.f32.partialorder %v4150, 8.507059e+37
  %v4152 = vand.u32 %v3789, 2147483648
  %v4153 = vor.u32 1.1754944e-38, %v4152
  %v4154 = vsel %vm4151, %v4153, %v4149
  %v4155 = vmul.f32 1.0, %v4154
  %v4156 = vrcp.pop %v3790
  %v4157 = vmul.f32 %v3790, %v4156
  %v4158 = vsub.f32 1.0, %v4157
  %v4159 = vmul.f32 %v4156, %v4158
  %v4160 = vadd.f32 %v4156, %v4159
  %vm4161 = vweird.f32 %v3790
  %vm4162 = vweird.f32 %v4156
  %vm4163 = vmor %vm4161, %vm4162
  %v4164 = vsel %vm4163, %v4156, %v4160
  %v4165 = vand.u32 2147483647, %v3790
  %vm4166 = vcmp.eq.f32.partialorder %v4165, 8.507059e+37
  %v4167 = vand.u32 %v3790, 2147483648
  %v4168 = vor.u32 1.1754944e-38, %v4167
  %v4169 = vsel %vm4166, %v4168, %v4164
  %v4170 = vmul.f32 1.0, %v4169
  %v4171 = vrcp.pop %v3791
  %v4172 = vmul.f32 %v3791, %v4171
  %v4173 = vsub.f32 1.0, %v4172
  %v4174 = vmul.f32 %v4171, %v4173
  %v4175 = vadd.f32 %v4171, %v4174
  %vm4176 = vweird.f32 %v3791
  %vm4177 = vweird.f32 %v4171
  %vm4178 = vmor %vm4176, %vm4177
  %v4179 = vsel %vm4178, %v4171, %v4175
  %v4180 = vand.u32 2147483647, %v3791
  %vm4181 = vcmp.eq.f32.partialorder %v4180, 8.507059e+37
  %v4182 = vand.u32 %v3791, 2147483648
  %v4183 = vor.u32 1.1754944e-38, %v4182
  %v4184 = vsel %vm4181, %v4183, %v4179
  %v4185 = vmul.f32 1.0, %v4184
  %v4186 = vrcp.pop %v3792
  %v4187 = vmul.f32 %v3792, %v4186
  %v4188 = vsub.f32 1.0, %v4187
  %v4189 = vmul.f32 %v4186, %v4188
  %v4190 = vadd.f32 %v4186, %v4189
  %vm4191 = vweird.f32 %v3792
  %vm4192 = vweird.f32 %v4186
  %vm4193 = vmor %vm4191, %vm4192
  %v4194 = vsel %vm4193, %v4186, %v4190
  %v4195 = vand.u32 2147483647, %v3792
  %vm4196 = vcmp.eq.f32.partialorder %v4195, 8.507059e+37
  %v4197 = vand.u32 %v3792, 2147483648
  %v4198 = vor.u32 1.1754944e-38, %v4197
  %v4199 = vsel %vm4196, %v4198, %v4194
  %v4200 = vmul.f32 1.0, %v4199
  %v4201 = vrcp.pop %v3793
  %v4202 = vmul.f32 %v3793, %v4201
  %v4203 = vsub.f32 1.0, %v4202
  %v4204 = vmul.f32 %v4201, %v4203
  %v4205 = vadd.f32 %v4201, %v4204
  %vm4206 = vweird.f32 %v3793
  %vm4207 = vweird.f32 %v4201
  %vm4208 = vmor %vm4206, %vm4207
  %v4209 = vsel %vm4208, %v4201, %v4205
  %v4210 = vand.u32 2147483647, %v3793
  %vm4211 = vcmp.eq.f32.partialorder %v4210, 8.507059e+37
  %v4212 = vand.u32 %v3793, 2147483648
  %v4213 = vor.u32 1.1754944e-38, %v4212
  %v4214 = vsel %vm4211, %v4213, %v4209
  %v4215 = vmul.f32 1.0, %v4214
  %v4216 = vrcp.pop %v3794
  %v4217 = vmul.f32 %v3794, %v4216
  %v4218 = vsub.f32 1.0, %v4217
  %v4219 = vmul.f32 %v4216, %v4218
  %v4220 = vadd.f32 %v4216, %v4219
  %vm4221 = vweird.f32 %v3794
  %vm4222 = vweird.f32 %v4216
  %vm4223 = vmor %vm4221, %vm4222
  %v4224 = vsel %vm4223, %v4216, %v4220
  %v4225 = vand.u32 2147483647, %v3794
  %vm4226 = vcmp.eq.f32.partialorder %v4225, 8.507059e+37
  %v4227 = vand.u32 %v3794, 2147483648
  %v4228 = vor.u32 1.1754944e-38, %v4227
  %v4229 = vsel %vm4226, %v4228, %v4224
  %v4230 = vmul.f32 1.0, %v4229
  %v4231 = vrcp.pop %v3795
  %v4232 = vmul.f32 %v3795, %v4231
  %v4233 = vsub.f32 1.0, %v4232
  %v4234 = vmul.f32 %v4231, %v4233
  %v4235 = vadd.f32 %v4231, %v4234
  %vm4236 = vweird.f32 %v3795
  %vm4237 = vweird.f32 %v4231
  %vm4238 = vmor %vm4236, %vm4237
  %v4239 = vsel %vm4238, %v4231, %v4235
  %v4240 = vand.u32 2147483647, %v3795
  %vm4241 = vcmp.eq.f32.partialorder %v4240, 8.507059e+37
  %v4242 = vand.u32 %v3795, 2147483648
  %v4243 = vor.u32 1.1754944e-38, %v4242
  %v4244 = vsel %vm4241, %v4243, %v4239
  %v4245 = vmul.f32 1.0, %v4244
  %v4246 = vmax.f32 %v3810, %v4035
  %v4247 = vmax.f32 %v3825, %v4050
  %v4248 = vmax.f32 %v3840, %v4065
  %v4249 = vmax.f32 %v3855, %v4080
  %v4250 = vmax.f32 %v3870, %v4095
  %v4251 = vmax.f32 %v3885, %v4110
  %v4252 = vmax.f32 %v3900, %v4125
  %v4253 = vmax.f32 %v3915, %v4140
  %v4254 = vmax.f32 %v3930, %v4155
  %v4255 = vmax.f32 %v3945, %v4170
  %v4256 = vmax.f32 %v3960, %v4185
  %v4257 = vmax.f32 %v3975, %v4200
  %v4258 = vmax.f32 %v3990, %v4215
  %v4259 = vmax.f32 %v4005, %v4230
  %v4260 = vmax.f32 %v4020, %v4245
  %4271 = vrot.lane.b32.xlu0 %v4247, 64
  %v4272 = vpop.permute.xlu0 %4271
  %4273 = vrot.lane.b32.xlu0 %v4248, 64
  %v4274 = vpop.permute.xlu0 %4273
  %4275 = vrot.lane.b32.xlu0 %v4250, 64
  %v4276 = vpop.permute.xlu0 %4275
  %4277 = vrot.lane.b32.xlu0 %v4251, 64
  %v4278 = vpop.permute.xlu0 %4277
  %4279 = vrot.lane.b32.xlu0 %v4253, 64
  %v4280 = vpop.permute.xlu0 %4279
  %4281 = vrot.lane.b32.xlu0 %v4254, 64
  %v4282 = vpop.permute.xlu0 %4281
  %4283 = vrot.lane.b32.xlu0 %v4256, 64
  %v4284 = vpop.permute.xlu0 %4283
  %4285 = vrot.lane.b32.xlu0 %v4257, 64
  %v4286 = vpop.permute.xlu0 %4285
  %4287 = vrot.lane.b32.xlu0 %v4259, 64
  %v4288 = vpop.permute.xlu0 %4287
  %4289 = vrot.lane.b32.xlu0 %v4260, 64
  %v4290 = vpop.permute.xlu0 %4289
  %v4291 = vsel %vm1986, %v4272, %v4274
  %v4292 = vsel %vm1986, %v4276, %v4278
  %v4293 = vsel %vm1986, %v4280, %v4282
  %v4294 = vsel %vm1986, %v4284, %v4286
  %v4295 = vsel %vm1986, %v4288, %v4290
  %v4306 = vmax.f32 %v4246, %v4291
  %v4307 = vmax.f32 %v4247, %v4274
  %v4308 = vmax.f32 %v4249, %v4292
  %v4309 = vmax.f32 %v4250, %v4278
  %v4310 = vmax.f32 %v4252, %v4293
  %v4311 = vmax.f32 %v4253, %v4282
  %v4312 = vmax.f32 %v4255, %v4294
  %v4313 = vmax.f32 %v4256, %v4286
  %v4314 = vmax.f32 %v4258, %v4295
  %v4315 = vmax.f32 %v4259, %v4290
  %4316 = vst [vmem:[#allocation3] sm:$0xff] %v4306
  %4317 = vst.msk [vmem:[#allocation3 + $0x8] sm:$0xff] %vm1986, %v4307
  %4320 = vrot.lane.b32.xlu0 %v4308, 64
  %v4321 = vpop.permute.xlu0 %4320
  %4322 = vrot.lane.b32.xlu0 %v4309, 64
  %v4323 = vpop.permute.xlu0 %4322
  %v4324 = vsel %vm1986, %v4321, %v4323
  %4327 = vst.msk [vmem:[#allocation3 + $0x8] sm:$0xff] %vm2252, %v4321
  %4328 = vst [vmem:[#allocation3 + $0x10] sm:$0xff] %v4324
  %4329 = vst [vmem:[#allocation3 + $0x18] sm:$0xff] %v4310
  %4330 = vst.msk [vmem:[#allocation3 + $0x20] sm:$0xff] %vm1986, %v4311
  %4333 = vrot.lane.b32.xlu0 %v4312, 64
  %v4334 = vpop.permute.xlu0 %4333
  %4335 = vrot.lane.b32.xlu0 %v4313, 64
  %v4336 = vpop.permute.xlu0 %4335
  %v4337 = vsel %vm1986, %v4334, %v4336
  %4340 = vst.msk [vmem:[#allocation3 + $0x20] sm:$0xff] %vm2252, %v4334
  %4341 = vst [vmem:[#allocation3 + $0x28] sm:$0xff] %v4337
  %4342 = vst [vmem:[#allocation3 + $0x30] sm:$0xff] %v4314
  %4343 = vst.msk [vmem:[#allocation3 + $0x38] sm:$0xff] %vm1986, %v4315
  %v4344 = vld [vmem:[#allocation3] sm:$0xff]
  %v4345 = vld [vmem:[#allocation3 + $0x8] sm:$0xff]
  %v4346 = vld [vmem:[#allocation3 + $0x10] sm:$0xff]
  %v4347 = vld [vmem:[#allocation3 + $0x18] sm:$0xff]
  %v4348 = vld [vmem:[#allocation3 + $0x20] sm:$0xff]
  %v4349 = vld [vmem:[#allocation3 + $0x28] sm:$0xff]
  %v4350 = vld [vmem:[#allocation3 + $0x30] sm:$0xff]
  %v4351 = vld [vmem:[#allocation3 + $0x38] sm:$0xff]
  %v4352 = vpack.c.bf16 %v4344, %v4344
  %v4353 = vpack.c.bf16 %v4345, %v4345
  %v4354 = vpack.c.bf16 %v4346, %v4346
  %v4355 = vpack.c.bf16 %v4347, %v4347
  %v4356 = vpack.c.bf16 %v4348, %v4348
  %v4357 = vpack.c.bf16 %v4349, %v4349
  %v4358 = vpack.c.bf16 %v4350, %v4350
  %v4359 = vpack.c.bf16 %v4351, %v4351
  %v4360 = vld [vmem:[%s5] sm:$0xf]
  %v4361 = vld [vmem:[%s5 + $0x4] sm:$0xf]
  %v4362 = vld [vmem:[%s5 + $0x8] sm:$0xf]
  %v4363 = vld [vmem:[%s5 + $0xc] sm:$0xf]
  %v4364 = vld [vmem:[%s5 + $0x10] sm:$0xf]
  %v4365 = vld [vmem:[%s5 + $0x14] sm:$0xf]
  %v4366 = vld [vmem:[%s5 + $0x18] sm:$0xf]
  %v4367 = vld [vmem:[%s5 + $0x1c] sm:$0xf]
  %v4368 = vld [vmem:[%s5 + $0x20] sm:$0xf]
  %v4369 = vld [vmem:[%s5 + $0x24] sm:$0xf]
  %v4370 = vld [vmem:[%s5 + $0x28] sm:$0xf]
  %v4371 = vld [vmem:[%s5 + $0x2c] sm:$0xf]
  %v4372 = vld [vmem:[%s5 + $0x30] sm:$0xf]
  %v4373 = vld [vmem:[%s5 + $0x34] sm:$0xf]
  %v4374 = vld [vmem:[%s5 + $0x38] sm:$0xf]
  %v4375 = vld [vmem:[%s5 + $0x3c] sm:$0xf]
  %v4376 = vld [vmem:[%s5 + $0x40] sm:$0xf]
  %v4377 = vld [vmem:[%s5 + $0x44] sm:$0xf]
  %v4378 = vld [vmem:[%s5 + $0x48] sm:$0xf]
  %v4379 = vld [vmem:[%s5 + $0x4c] sm:$0xf]
  %v4380 = vld [vmem:[%s5 + $0x50] sm:$0xf]
  %v4381 = vld [vmem:[%s5 + $0x54] sm:$0xf]
  %v4382 = vld [vmem:[%s5 + $0x58] sm:$0xf]
  %v4383 = vld [vmem:[%s5 + $0x5c] sm:$0xf]
  %v4384 = vld [vmem:[%s5 + $0x60] sm:$0xf]
  %v4385 = vld [vmem:[%s5 + $0x64] sm:$0xf]
  %v4386 = vld [vmem:[%s5 + $0x68] sm:$0xf]
  %v4387 = vld [vmem:[%s5 + $0x6c] sm:$0xf]
  %v4388 = vld [vmem:[%s5 + $0x70] sm:$0xf]
  %v4389 = vld [vmem:[%s5 + $0x74] sm:$0xf]
  %v4390 = vld [vmem:[%s5 + $0x78] sm:$0xf]
  %v4391 = vld [vmem:[%s5 + $0x7c] sm:$0xf]
  %v4392 = vld [vmem:[%s5 + $0x80] sm:$0xf]
  %v4393 = vld [vmem:[%s5 + $0x84] sm:$0xf]
  %v4394 = vld [vmem:[%s5 + $0x88] sm:$0xf]
  %v4395 = vld [vmem:[%s5 + $0x8c] sm:$0xf]
  %v4396 = vld [vmem:[%s5 + $0x90] sm:$0xf]
  %v4397 = vld [vmem:[%s5 + $0x94] sm:$0xf]
  %v4398 = vld [vmem:[%s5 + $0x98] sm:$0xf]
  %v4399 = vld [vmem:[%s5 + $0x9c] sm:$0xf]
  %v4400 = vld [vmem:[%s5 + $0xa0] sm:$0xf]
  %v4401 = vld [vmem:[%s5 + $0xa4] sm:$0xf]
  %v4402 = vld [vmem:[%s5 + $0xa8] sm:$0xf]
  %v4403 = vld [vmem:[%s5 + $0xac] sm:$0xf]
  %v4404 = vld [vmem:[%s5 + $0xb0] sm:$0xf]
  %v4405 = vld [vmem:[%s5 + $0xb4] sm:$0xf]
  %v4406 = vld [vmem:[%s5 + $0xb8] sm:$0xf]
  %v4407 = vld [vmem:[%s5 + $0xbc] sm:$0xf]
  %v4408 = vld [vmem:[%s5 + $0xc0] sm:$0xf]
  %v4409 = vld [vmem:[%s5 + $0xc4] sm:$0xf]
  %v4410 = vld [vmem:[%s5 + $0xc8] sm:$0xf]
  %v4411 = vld [vmem:[%s5 + $0xcc] sm:$0xf]
  %v4412 = vld [vmem:[%s5 + $0xd0] sm:$0xf]
  %v4413 = vld [vmem:[%s5 + $0xd4] sm:$0xf]
  %v4414 = vld [vmem:[%s5 + $0xd8] sm:$0xf]
  %v4415 = vld [vmem:[%s5 + $0xdc] sm:$0xf]
  %v4416 = vld [vmem:[%s5 + $0xe0] sm:$0xf]
  %v4417 = vld [vmem:[%s5 + $0xe4] sm:$0xf]
  %v4418 = vld [vmem:[%s5 + $0xe8] sm:$0xf]
  %v4419 = vld [vmem:[%s5 + $0xec] sm:$0xf]
  %v4420 = vld [vmem:[%s5 + $0xf0] sm:$0xf]
  %v4421 = vld [vmem:[%s5 + $0xf4] sm:$0xf]
  %v4422 = vld [vmem:[%s5 + $0xf8] sm:$0xf]
  %v4423 = vld [vmem:[%s5 + $0xfc] sm:$0xf]
  %v4424 = vld [vmem:[%s5 + $0x100] sm:$0xf]
  %v4425 = vld [vmem:[%s5 + $0x104] sm:$0xf]
  %v4426 = vld [vmem:[%s5 + $0x108] sm:$0xf]
  %v4427 = vld [vmem:[%s5 + $0x10c] sm:$0xf]
  %v4428 = vld [vmem:[%s5 + $0x110] sm:$0xf]
  %v4429 = vld [vmem:[%s5 + $0x114] sm:$0xf]
  %v4430 = vld [vmem:[%s5 + $0x118] sm:$0xf]
  %v4431 = vld [vmem:[%s5 + $0x11c] sm:$0xf]
  %v4432 = vld [vmem:[%s5 + $0x120] sm:$0xf]
  %v4433 = vld [vmem:[%s5 + $0x124] sm:$0xf]
  %v4434 = vld [vmem:[%s5 + $0x128] sm:$0xf]
  %v4435 = vld [vmem:[%s5 + $0x12c] sm:$0xf]
  %v4436 = vld [vmem:[%s5 + $0x130] sm:$0xf]
  %v4437 = vld [vmem:[%s5 + $0x134] sm:$0xf]
  %v4438 = vld [vmem:[%s5 + $0x138] sm:$0xf]
  %v4439 = vld [vmem:[%s5 + $0x13c] sm:$0xf]
  %v4440 = vld [vmem:[%s5 + $0x140] sm:$0xf]
  %v4441 = vld [vmem:[%s5 + $0x144] sm:$0xf]
  %v4442 = vld [vmem:[%s5 + $0x148] sm:$0xf]
  %v4443 = vld [vmem:[%s5 + $0x14c] sm:$0xf]
  %v4444 = vld [vmem:[%s5 + $0x150] sm:$0xf]
  %v4445 = vld [vmem:[%s5 + $0x154] sm:$0xf]
  %v4446 = vld [vmem:[%s5 + $0x158] sm:$0xf]
  %v4447 = vld [vmem:[%s5 + $0x15c] sm:$0xf]
  %v4448 = vld [vmem:[%s5 + $0x160] sm:$0xf]
  %v4449 = vld [vmem:[%s5 + $0x164] sm:$0xf]
  %v4450 = vld [vmem:[%s5 + $0x168] sm:$0xf]
  %v4451 = vld [vmem:[%s5 + $0x16c] sm:$0xf]
  %v4452 = vld [vmem:[%s5 + $0x170] sm:$0xf]
  %v4453 = vld [vmem:[%s5 + $0x174] sm:$0xf]
  %v4454 = vld [vmem:[%s5 + $0x178] sm:$0xf]
  %v4455 = vld [vmem:[%s5 + $0x17c] sm:$0xf]
  %v4456 = vld [vmem:[%s5 + $0x180] sm:$0xf]
  %v4457 = vld [vmem:[%s5 + $0x184] sm:$0xf]
  %v4458 = vld [vmem:[%s5 + $0x188] sm:$0xf]
  %v4459 = vld [vmem:[%s5 + $0x18c] sm:$0xf]
  %v4460 = vld [vmem:[%s5 + $0x190] sm:$0xf]
  %v4461 = vld [vmem:[%s5 + $0x194] sm:$0xf]
  %v4462 = vld [vmem:[%s5 + $0x198] sm:$0xf]
  %v4463 = vld [vmem:[%s5 + $0x19c] sm:$0xf]
  %v4464 = vld [vmem:[%s5 + $0x1a0] sm:$0xf]
  %v4465 = vld [vmem:[%s5 + $0x1a4] sm:$0xf]
  %v4466 = vld [vmem:[%s5 + $0x1a8] sm:$0xf]
  %v4467 = vld [vmem:[%s5 + $0x1ac] sm:$0xf]
  %v4468 = vld [vmem:[%s5 + $0x1b0] sm:$0xf]
  %v4469 = vld [vmem:[%s5 + $0x1b4] sm:$0xf]
  %v4470 = vld [vmem:[%s5 + $0x1b8] sm:$0xf]
  %v4471 = vld [vmem:[%s5 + $0x1bc] sm:$0xf]
  %v4472 = vld [vmem:[%s5 + $0x1c0] sm:$0xf]
  %v4473 = vld [vmem:[%s5 + $0x1c4] sm:$0xf]
  %v4474 = vld [vmem:[%s5 + $0x1c8] sm:$0xf]
  %v4475 = vld [vmem:[%s5 + $0x1cc] sm:$0xf]
  %v4476 = vld [vmem:[%s5 + $0x1d0] sm:$0xf]
  %v4477 = vld [vmem:[%s5 + $0x1d4] sm:$0xf]
  %v4478 = vld [vmem:[%s5 + $0x1d8] sm:$0xf]
  %v4479 = vld [vmem:[%s5 + $0x1dc] sm:$0xf]
  %v4480 = vld [vmem:[%s6] sm:$0x1]
  %v4482 = vperm.slane %v4480, 0
  %v4604 = vunpack.c.l.b16 %v4360
  %v4605 = vunpack.c.l.b16 %v4361
  %v4606 = vunpack.c.l.b16 %v4362
  %v4607 = vunpack.c.l.b16 %v4363
  %v4608 = vunpack.c.l.b16 %v4364
  %v4609 = vunpack.c.l.b16 %v4365
  %v4610 = vunpack.c.l.b16 %v4366
  %v4611 = vunpack.c.l.b16 %v4367
  %v4612 = vunpack.c.l.b16 %v4368
  %v4613 = vunpack.c.l.b16 %v4369
  %v4614 = vunpack.c.l.b16 %v4370
  %v4615 = vunpack.c.l.b16 %v4371
  %v4616 = vunpack.c.l.b16 %v4372
  %v4617 = vunpack.c.l.b16 %v4373
  %v4618 = vunpack.c.l.b16 %v4374
  %v4619 = vunpack.c.l.b16 %v4375
  %v4620 = vunpack.c.l.b16 %v4376
  %v4621 = vunpack.c.l.b16 %v4377
  %v4622 = vunpack.c.l.b16 %v4378
  %v4623 = vunpack.c.l.b16 %v4379
  %v4624 = vunpack.c.l.b16 %v4380
  %v4625 = vunpack.c.l.b16 %v4381
  %v4626 = vunpack.c.l.b16 %v4382
  %v4627 = vunpack.c.l.b16 %v4383
  %v4628 = vunpack.c.l.b16 %v4384
  %v4629 = vunpack.c.l.b16 %v4385
  %v4630 = vunpack.c.l.b16 %v4386
  %v4631 = vunpack.c.l.b16 %v4387
  %v4632 = vunpack.c.l.b16 %v4388
  %v4633 = vunpack.c.l.b16 %v4389
  %v4634 = vunpack.c.l.b16 %v4390
  %v4635 = vunpack.c.l.b16 %v4391
  %v4636 = vunpack.c.l.b16 %v4392
  %v4637 = vunpack.c.l.b16 %v4393
  %v4638 = vunpack.c.l.b16 %v4394
  %v4639 = vunpack.c.l.b16 %v4395
  %v4640 = vunpack.c.l.b16 %v4396
  %v4641 = vunpack.c.l.b16 %v4397
  %v4642 = vunpack.c.l.b16 %v4398
  %v4643 = vunpack.c.l.b16 %v4399
  %v4644 = vunpack.c.l.b16 %v4400
  %v4645 = vunpack.c.l.b16 %v4401
  %v4646 = vunpack.c.l.b16 %v4402
  %v4647 = vunpack.c.l.b16 %v4403
  %v4648 = vunpack.c.l.b16 %v4404
  %v4649 = vunpack.c.l.b16 %v4405
  %v4650 = vunpack.c.l.b16 %v4406
  %v4651 = vunpack.c.l.b16 %v4407
  %v4652 = vunpack.c.l.b16 %v4408
  %v4653 = vunpack.c.l.b16 %v4409
  %v4654 = vunpack.c.l.b16 %v4410
  %v4655 = vunpack.c.l.b16 %v4411
  %v4656 = vunpack.c.l.b16 %v4412
  %v4657 = vunpack.c.l.b16 %v4413
  %v4658 = vunpack.c.l.b16 %v4414
  %v4659 = vunpack.c.l.b16 %v4415
  %v4660 = vunpack.c.l.b16 %v4416
  %v4661 = vunpack.c.l.b16 %v4417
  %v4662 = vunpack.c.l.b16 %v4418
  %v4663 = vunpack.c.l.b16 %v4419
  %v4664 = vunpack.c.l.b16 %v4420
  %v4665 = vunpack.c.l.b16 %v4421
  %v4666 = vunpack.c.l.b16 %v4422
  %v4667 = vunpack.c.l.b16 %v4423
  %v4668 = vunpack.c.l.b16 %v4424
  %v4669 = vunpack.c.l.b16 %v4425
  %v4670 = vunpack.c.l.b16 %v4426
  %v4671 = vunpack.c.l.b16 %v4427
  %v4672 = vunpack.c.l.b16 %v4428
  %v4673 = vunpack.c.l.b16 %v4429
  %v4674 = vunpack.c.l.b16 %v4430
  %v4675 = vunpack.c.l.b16 %v4431
  %v4676 = vunpack.c.l.b16 %v4432
  %v4677 = vunpack.c.l.b16 %v4433
  %v4678 = vunpack.c.l.b16 %v4434
  %v4679 = vunpack.c.l.b16 %v4435
  %v4680 = vunpack.c.l.b16 %v4436
  %v4681 = vunpack.c.l.b16 %v4437
  %v4682 = vunpack.c.l.b16 %v4438
  %v4683 = vunpack.c.l.b16 %v4439
  %v4684 = vunpack.c.l.b16 %v4440
  %v4685 = vunpack.c.l.b16 %v4441
  %v4686 = vunpack.c.l.b16 %v4442
  %v4687 = vunpack.c.l.b16 %v4443
  %v4688 = vunpack.c.l.b16 %v4444
  %v4689 = vunpack.c.l.b16 %v4445
  %v4690 = vunpack.c.l.b16 %v4446
  %v4691 = vunpack.c.l.b16 %v4447
  %v4692 = vunpack.c.l.b16 %v4448
  %v4693 = vunpack.c.l.b16 %v4449
  %v4694 = vunpack.c.l.b16 %v4450
  %v4695 = vunpack.c.l.b16 %v4451
  %v4696 = vunpack.c.l.b16 %v4452
  %v4697 = vunpack.c.l.b16 %v4453
  %v4698 = vunpack.c.l.b16 %v4454
  %v4699 = vunpack.c.l.b16 %v4455
  %v4700 = vunpack.c.l.b16 %v4456
  %v4701 = vunpack.c.l.b16 %v4457
  %v4702 = vunpack.c.l.b16 %v4458
  %v4703 = vunpack.c.l.b16 %v4459
  %v4704 = vunpack.c.l.b16 %v4460
  %v4705 = vunpack.c.l.b16 %v4461
  %v4706 = vunpack.c.l.b16 %v4462
  %v4707 = vunpack.c.l.b16 %v4463
  %v4708 = vunpack.c.l.b16 %v4464
  %v4709 = vunpack.c.l.b16 %v4465
  %v4710 = vunpack.c.l.b16 %v4466
  %v4711 = vunpack.c.l.b16 %v4467
  %v4712 = vunpack.c.l.b16 %v4468
  %v4713 = vunpack.c.l.b16 %v4469
  %v4714 = vunpack.c.l.b16 %v4470
  %v4715 = vunpack.c.l.b16 %v4471
  %v4716 = vunpack.c.l.b16 %v4472
  %v4717 = vunpack.c.l.b16 %v4473
  %v4718 = vunpack.c.l.b16 %v4474
  %v4719 = vunpack.c.l.b16 %v4475
  %v4720 = vunpack.c.l.b16 %v4476
  %v4721 = vunpack.c.l.b16 %v4477
  %v4722 = vunpack.c.l.b16 %v4478
  %v4723 = vunpack.c.l.b16 %v4479
  %v4724 = vpack.c.b16 %v4605, %v4604
  %v4725 = vpack.c.b16 %v4607, %v4606
  %v4726 = vpack.c.b16 %v4609, %v4608
  %v4727 = vpack.c.b16 %v4611, %v4610
  %v4728 = vpack.c.b16 %v4613, %v4612
  %v4729 = vpack.c.b16 %v4615, %v4614
  %v4730 = vpack.c.b16 %v4617, %v4616
  %v4731 = vpack.c.b16 %v4619, %v4618
  %v4732 = vpack.c.b16 %v4621, %v4620
  %v4733 = vpack.c.b16 %v4623, %v4622
  %v4734 = vpack.c.b16 %v4625, %v4624
  %v4735 = vpack.c.b16 %v4627, %v4626
  %v4736 = vpack.c.b16 %v4629, %v4628
  %v4737 = vpack.c.b16 %v4631, %v4630
  %v4738 = vpack.c.b16 %v4633, %v4632
  %v4739 = vpack.c.b16 %v4635, %v4634
  %v4740 = vpack.c.b16 %v4637, %v4636
  %v4741 = vpack.c.b16 %v4639, %v4638
  %v4742 = vpack.c.b16 %v4641, %v4640
  %v4743 = vpack.c.b16 %v4643, %v4642
  %v4744 = vpack.c.b16 %v4645, %v4644
  %v4745 = vpack.c.b16 %v4647, %v4646
  %v4746 = vpack.c.b16 %v4649, %v4648
  %v4747 = vpack.c.b16 %v4651, %v4650
  %v4748 = vpack.c.b16 %v4653, %v4652
  %v4749 = vpack.c.b16 %v4655, %v4654
  %v4750 = vpack.c.b16 %v4657, %v4656
  %v4751 = vpack.c.b16 %v4659, %v4658
  %v4752 = vpack.c.b16 %v4661, %v4660
  %v4753 = vpack.c.b16 %v4663, %v4662
  %v4754 = vpack.c.b16 %v4665, %v4664
  %v4755 = vpack.c.b16 %v4667, %v4666
  %v4756 = vpack.c.b16 %v4669, %v4668
  %v4757 = vpack.c.b16 %v4671, %v4670
  %v4758 = vpack.c.b16 %v4673, %v4672
  %v4759 = vpack.c.b16 %v4675, %v4674
  %v4760 = vpack.c.b16 %v4677, %v4676
  %v4761 = vpack.c.b16 %v4679, %v4678
  %v4762 = vpack.c.b16 %v4681, %v4680
  %v4763 = vpack.c.b16 %v4683, %v4682
  %v4764 = vpack.c.b16 %v4685, %v4684
  %v4765 = vpack.c.b16 %v4687, %v4686
  %v4766 = vpack.c.b16 %v4689, %v4688
  %v4767 = vpack.c.b16 %v4691, %v4690
  %v4768 = vpack.c.b16 %v4693, %v4692
  %v4769 = vpack.c.b16 %v4695, %v4694
  %v4770 = vpack.c.b16 %v4697, %v4696
  %v4771 = vpack.c.b16 %v4699, %v4698
  %v4772 = vpack.c.b16 %v4701, %v4700
  %v4773 = vpack.c.b16 %v4703, %v4702
  %v4774 = vpack.c.b16 %v4705, %v4704
  %v4775 = vpack.c.b16 %v4707, %v4706
  %v4776 = vpack.c.b16 %v4709, %v4708
  %v4777 = vpack.c.b16 %v4711, %v4710
  %v4778 = vpack.c.b16 %v4713, %v4712
  %v4779 = vpack.c.b16 %v4715, %v4714
  %v4780 = vpack.c.b16 %v4717, %v4716
  %v4781 = vpack.c.b16 %v4719, %v4718
  %v4782 = vpack.c.b16 %v4721, %v4720
  %v4783 = vpack.c.b16 %v4723, %v4722
  %v4845 = vsel %vm1986, %v4359, 0
  %4847 = vmatpush.bf16.msra.mxu0 %v4731
  %4848 = vmatpush.bf16.msra.mxu0 %v4730
  %4849 = vmatpush.bf16.msra.mxu0 %v4729
  %4850 = vmatpush.bf16.msra.mxu0 %v4728
  %4851 = vmatpush.bf16.msra.mxu0 %v4727
  %4852 = vmatpush.bf16.msra.mxu0 %v4726
  %4853 = vmatpush.bf16.msra.mxu0 %v4725
  %4854 = vmatpush.bf16.msra.mxu0 %v4724
  %4855 = vmatmul.bf16.gmra.mxu0 %v4352
  %v4856 = vpop.f32.mrf.mxu0
  %v4857 = vadd.f32 %v4482, %v4856
  %v4858 = vpop.f32.mrf.mxu0
  %4859 = vdwg.mxu0
  %4860 = vmatpush.bf16.msra.mxu0 %v4739
  %4861 = vmatpush.bf16.msra.mxu0 %v4738
  %4862 = vmatpush.bf16.msra.mxu0 %v4737
  %4863 = vmatpush.bf16.msra.mxu0 %v4736
  %4864 = vmatpush.bf16.msra.mxu0 %v4735
  %4865 = vmatpush.bf16.msra.mxu0 %v4734
  %4866 = vmatpush.bf16.msra.mxu0 %v4733
  %4867 = vmatpush.bf16.msra.mxu0 %v4732
  %4868 = vmatmul.bf16.gmra.mxu0 %v4353
  %v4869 = vpop.f32.mrf.mxu0
  %v4870 = vadd.f32 %v4857, %v4869
  %v4871 = vpop.f32.mrf.mxu0
  %4872 = vdwg.mxu0
  %4873 = vmatpush.bf16.msra.mxu0 %v4747
  %4874 = vmatpush.bf16.msra.mxu0 %v4746
  %4875 = vmatpush.bf16.msra.mxu0 %v4745
  %4876 = vmatpush.bf16.msra.mxu0 %v4744
  %4877 = vmatpush.bf16.msra.mxu0 %v4743
  %4878 = vmatpush.bf16.msra.mxu0 %v4742
  %4879 = vmatpush.bf16.msra.mxu0 %v4741
  %4880 = vmatpush.bf16.msra.mxu0 %v4740
  %4881 = vmatmul.bf16.gmra.mxu0 %v4354
  %v4882 = vpop.f32.mrf.mxu0
  %v4883 = vadd.f32 %v4870, %v4882
  %v4884 = vpop.f32.mrf.mxu0
  %4885 = vdwg.mxu0
  %4886 = vmatpush.bf16.msra.mxu0 %v4755
  %4887 = vmatpush.bf16.msra.mxu0 %v4754
  %4888 = vmatpush.bf16.msra.mxu0 %v4753
  %4889 = vmatpush.bf16.msra.mxu0 %v4752
  %4890 = vmatpush.bf16.msra.mxu0 %v4751
  %4891 = vmatpush.bf16.msra.mxu0 %v4750
  %4892 = vmatpush.bf16.msra.mxu0 %v4749
  %4893 = vmatpush.bf16.msra.mxu0 %v4748
  %4894 = vmatmul.bf16.gmra.mxu0 %v4355
  %v4895 = vpop.f32.mrf.mxu0
  %v4896 = vadd.f32 %v4883, %v4895
  %v4897 = vpop.f32.mrf.mxu0
  %4898 = vdwg.mxu0
  %4899 = vmatpush.bf16.msra.mxu0 %v4763
  %4900 = vmatpush.bf16.msra.mxu0 %v4762
  %4901 = vmatpush.bf16.msra.mxu0 %v4761
  %4902 = vmatpush.bf16.msra.mxu0 %v4760
  %4903 = vmatpush.bf16.msra.mxu0 %v4759
  %4904 = vmatpush.bf16.msra.mxu0 %v4758
  %4905 = vmatpush.bf16.msra.mxu0 %v4757
  %4906 = vmatpush.bf16.msra.mxu0 %v4756
  %4907 = vmatmul.bf16.gmra.mxu0 %v4356
  %v4908 = vpop.f32.mrf.mxu0
  %v4909 = vadd.f32 %v4896, %v4908
  %v4910 = vpop.f32.mrf.mxu0
  %4911 = vdwg.mxu0
  %4912 = vmatpush.bf16.msra.mxu0 %v4771
  %4913 = vmatpush.bf16.msra.mxu0 %v4770
  %4914 = vmatpush.bf16.msra.mxu0 %v4769
  %4915 = vmatpush.bf16.msra.mxu0 %v4768
  %4916 = vmatpush.bf16.msra.mxu0 %v4767
  %4917 = vmatpush.bf16.msra.mxu0 %v4766
  %4918 = vmatpush.bf16.msra.mxu0 %v4765
  %4919 = vmatpush.bf16.msra.mxu0 %v4764
  %4920 = vmatmul.bf16.gmra.mxu0 %v4357
  %v4921 = vpop.f32.mrf.mxu0
  %v4922 = vadd.f32 %v4909, %v4921
  %v4923 = vpop.f32.mrf.mxu0
  %4924 = vdwg.mxu0
  %4925 = vmatpush.bf16.msra.mxu0 %v4779
  %4926 = vmatpush.bf16.msra.mxu0 %v4778
  %4927 = vmatpush.bf16.msra.mxu0 %v4777
  %4928 = vmatpush.bf16.msra.mxu0 %v4776
  %4929 = vmatpush.bf16.msra.mxu0 %v4775
  %4930 = vmatpush.bf16.msra.mxu0 %v4774
  %4931 = vmatpush.bf16.msra.mxu0 %v4773
  %4932 = vmatpush.bf16.msra.mxu0 %v4772
  %4933 = vmatmul.bf16.gmra.mxu0 %v4358
  %v4934 = vpop.f32.mrf.mxu0
  %v4935 = vadd.f32 %v4922, %v4934
  %v4936 = vpop.f32.mrf.mxu0
  %4937 = vdwg.mxu0
  %4938 = vmatpush.bf16.msra.mxu0 0
  %4939 = vmatpush.bf16.msra.mxu0 0
  %4940 = vmatpush.bf16.msra.mxu0 0
  %4941 = vmatpush.bf16.msra.mxu0 0
  %4942 = vmatpush.bf16.msra.mxu0 %v4783
  %4943 = vmatpush.bf16.msra.mxu0 %v4782
  %4944 = vmatpush.bf16.msra.mxu0 %v4781
  %4945 = vmatpush.bf16.msra.mxu0 %v4780
  %4946 = vmatmul.bf16.gmra.mxu0 %v4845
  %v4947 = vpop.f32.mrf.mxu0
  %v4948 = vadd.f32 %v4935, %v4947
  %v4949 = vpop.f32.mrf.mxu0
  %4950 = vdwg.mxu0
  %v4951 = vxor.u32 %v4948, 2147483648
  %v4952 = vmul.f32 %v4951, 1.442695
  %v4953 = vpow.pop %v4952
  %v4954 = vadd.f32 %v4953, 1.0
  %v4955 = vrcp.pop %v4954
  %v4956 = vmul.f32 %v4954, %v4955
  %v4957 = vsub.f32 1.0, %v4956
  %v4958 = vmul.f32 %v4955, %v4957
  %v4959 = vadd.f32 %v4955, %v4958
  %vm4960 = vweird.f32 %v4954
  %vm4961 = vweird.f32 %v4955
  %vm4962 = vmor %vm4960, %vm4961
  %v4963 = vsel %vm4962, %v4955, %v4959
  %v4964 = vand.u32 2147483647, %v4954
  %vm4965 = vcmp.eq.f32.partialorder %v4964, 8.507059e+37
  %v4966 = vand.u32 %v4954, 2147483648
  %v4967 = vor.u32 1.1754944e-38, %v4966
  %v4968 = vsel %vm4965, %v4967, %v4963
  %v4969 = vmul.f32 1.0, %v4968
  %v4970 = vld [vmem:[%s7] sm:$0xff]
  %v4971 = vld [vmem:[%s7 + $0x8] sm:$0xff]
  %v4972 = vld [vmem:[%s7 + $0x10] sm:$0xff]
  %v4973 = vld [vmem:[%s7 + $0x18] sm:$0xff]
  %v4974 = vld [vmem:[%s7 + $0x20] sm:$0xff]
  %v4975 = vld [vmem:[%s7 + $0x28] sm:$0xff]
  %v4976 = vld [vmem:[%s7 + $0x30] sm:$0xff]
  %v4977 = vld [vmem:[%s7 + $0x38] sm:$0xff]
  %v4978 = vld [vmem:[%s8] sm:$0x1]
  %v4980 = vperm.slane %v4978, 0
  %v4983 = vsel %vm1986, %v4969, 0
  %4985 = vmatpush.msra.mxu0 0.0
  %4986 = vmatpush.msra.mxu0 0.0
  %4987 = vmatpush.msra.mxu0 0.0
  %4988 = vmatpush.msra.mxu0 0.0
  %4989 = vmatpush.msra.mxu0 0.0
  %4990 = vmatpush.msra.mxu0 0.0
  %4991 = vmatpush.msra.mxu0 0.0
  %4992 = vmatpush.msra.mxu0 0.0
  %4993 = vmatpush.msra.mxu0 %v4977
  %4994 = vmatpush.msra.mxu0 %v4976
  %4995 = vmatpush.msra.mxu0 %v4975
  %4996 = vmatpush.msra.mxu0 %v4974
  %4997 = vmatpush.msra.mxu0 %v4973
  %4998 = vmatpush.msra.mxu0 %v4972
  %4999 = vmatpush.msra.mxu0 %v4971
  %5000 = vmatpush.msra.mxu0 %v4970
  %5001 = vmatmul.f32.gmra.mxu0 %v4983
  %v5002 = vpop.f32.mrf.mxu0
  %v5003 = vadd.f32 %v4980, %v5002
  %5004 = vdwg.mxu0
  %5005 = vst [vmem:[%s9] sm:$0xff] %v5003
  // Predicated region
  $region38: #{_forward_impl.1} parent=0 // pred_check
    _
  $region39: #{_forward_impl.1} parent=0 // pred_check_branch
    %5007 = sbr.rel (0) target = $region41
  $region40: #{_forward_impl.1} parent=0 // pred_region
    _
  $region41: #{_forward_impl.1} parent=0 // pred_fallthru
    _
  // Predicated region
  $region42: #{_forward_impl.1} parent=0 // pred_check
    _
  $region43: #{_forward_impl.1} parent=0 // pred_check_branch
    %5009 = sbr.rel (0) target = $region45
  $region44: #{_forward_impl.1} parent=0 // pred_region
    _
  $region45: #{_forward_impl.1} parent=0 // pred_fallthru
    _

</llo_original>
